<compile_context>
chip_gen: v7x
topology: tpu7x:2x2x1
jax: 0.10.0
libtpu: 0.0.40
codegen_flags: <defaults>
</compile_context>

<pallas_src>
import functools

import numpy as np

import jax
import jax.numpy as jnp
from jax.experimental import pallas as pl
from jax.experimental.pallas import tpu as pltpu


# ----------------------------- fused Pallas kernel -----------------------------
#
# Layouts (per batch tile of `bt` images, bt % 8 == 0):
#   x_ref  : (1, 8*bt, 512) bf16,  [u*bt + b, g*128 + w*3 + c] = x[b, c, 4u+g, w],
#            lanes 96..127 of each g-block are zero.
#   w1_ref : (640, 256) bf16, conv1 band, row kh*128 + (w*3+c),
#            col parity*128 + t*6 + co  (output col ow = 2t + parity).
#   conv1 output y1[r] (oh = 4s + r): (7*bt, 256), row s*bt+b.
#   p1     : (7*bt, 256) bf16 pooled activations, [s*bt+b, par*128 + t*6 + c]
#            = pool1[b, c, 2s+par, t]  (84 live lanes per half).
#   w2_ref : (640, 256) bf16, conv2 band, row kh*128 + (t*6+c),
#            col parity*128 + v*16 + co.
#   p2     : (5*bt, 128) pooled conv2 activations, [q*bt+b, v*16+co] (80 live lanes).
#   wf1    : (640, 128) bf16, row q*128 + v*16+co, col = fc1 output unit (120 live).
#   fc2/fc3: 128-lane padded; only cols 0..9 of the final output are real.

def _lenet5_fused_kernel(x_ref, w1_ref, w2_ref, wf1_ref, wf2_ref, wf3_ref,
                         bias_ref, out_ref, *, bt):
    f32 = jnp.float32
    bf16 = jnp.bfloat16

    # ---- conv1 (5x5, 3 -> 6): 2 deep-K matmuls per output-row residue r ----
    # For oh = 4s + r, tap kh reads input row 4s + r + kh.  Taps kh = 0..3-r live in
    # lane blocks g = r..3 of x rows 0:7bt; taps kh = 4-r..4 live in lane blocks
    # g = 0..r of x rows bt:8bt.  The kh bands are stacked along w1_ref rows, so each
    # group is exactly two 128-aligned slices.
    def conv1_group(r):
        ka = (4 - r) * 128
        acc = jnp.dot(x_ref[0, 0:7 * bt, r * 128:512], w1_ref[0:ka, :],
                      preferred_element_type=f32)
        acc = acc + jnp.dot(x_ref[0, bt:8 * bt, 0:(r + 1) * 128], w1_ref[ka:640, :],
                            preferred_element_type=f32)
        return acc                                   # (7*bt, 256)

    y1 = [conv1_group(r) for r in range(4)]

    # ---- fused 2x2 max-pool #1 + bias + ReLU (pure element-wise, f32) ----
    b1b = bias_ref[0:1, :]
    he = jnp.maximum(y1[0], y1[1])                   # pooled rows p = 2s
    ho = jnp.maximum(y1[2], y1[3])                   # pooled rows p = 2s + 1
    p1e = jnp.maximum(jnp.maximum(he[:, :128], he[:, 128:]) + b1b, 0.0)
    p1o = jnp.maximum(jnp.maximum(ho[:, :128], ho[:, 128:]) + b1b, 0.0)
    # even/odd pooled rows side by side in lanes -> conv2 LHS (128-aligned concat).
    p1 = jnp.concatenate([p1e, p1o], axis=1).astype(bf16)       # (7*bt, 256)

    # ---- conv2 (5x5, 6 -> 16): 3 deep-K matmuls per output-row parity ----
    # even rows oh = 2u   : taps read pooled rows 2u..2u+4
    y2e = (jnp.dot(p1[0:5 * bt, :],        w2_ref[0:256, :],   preferred_element_type=f32)
           + jnp.dot(p1[bt:6 * bt, :],     w2_ref[256:512, :], preferred_element_type=f32)
           + jnp.dot(p1[2 * bt:7 * bt, 0:128], w2_ref[512:640, :],
                     preferred_element_type=f32))
    # odd rows oh = 2u+1  : taps read pooled rows 2u+1..2u+5
    y2o = (jnp.dot(p1[0:5 * bt, 128:256],  w2_ref[0:128, :],   preferred_element_type=f32)
           + jnp.dot(p1[bt:6 * bt, :],     w2_ref[128:384, :], preferred_element_type=f32)
           + jnp.dot(p1[2 * bt:7 * bt, :], w2_ref[384:640, :],
                     preferred_element_type=f32))

    # ---- fused 2x2 max-pool #2 + bias + ReLU ----
    b2b = bias_ref[1:2, :]
    m2 = jnp.maximum(y2e, y2o)                                       # (5*bt, 256)
    p2 = jnp.maximum(jnp.maximum(m2[:, :128], m2[:, 128:]) + b2b, 0.0)
    p2 = p2.astype(bf16)                                             # (5*bt, 128)

    # ---- fc1 (400 -> 120): one K=640 matmul; flatten order folded into wf1 ----
    f1in = jnp.concatenate([p2[q * bt:(q + 1) * bt, :] for q in range(5)], axis=1)
    f1 = jnp.dot(f1in, wf1_ref[...], preferred_element_type=f32) + bias_ref[2:3, :]
    f1 = jnp.maximum(f1, 0.0).astype(bf16)                           # (bt, 128)

    # ---- fc2 (120 -> 84) + ReLU, fc3 (84 -> 10) ----
    f2 = jnp.dot(f1, wf2_ref[...], preferred_element_type=f32) + bias_ref[3:4, :]
    f2 = jnp.maximum(f2, 0.0).astype(bf16)
    f3 = jnp.dot(f2, wf3_ref[...], preferred_element_type=f32) + bias_ref[4:5, :]
    out_ref[...] = f3.astype(out_ref.dtype)                          # cols 10..127 = 0


# ----------------------------- parameters -----------------------------

def init_params(key):
    """PyTorch-layout parameters of MyLeNet5."""
    ks = jax.random.split(key, 10)
    s = 0.1
    return {
        "conv1_w": s * jax.random.normal(ks[0], (6, 3, 5, 5), jnp.float32),
        "conv1_b": s * jax.random.normal(ks[1], (6,), jnp.float32),
        "conv2_w": s * jax.random.normal(ks[2], (16, 6, 5, 5), jnp.float32),
        "conv2_b": s * jax.random.normal(ks[3], (16,), jnp.float32),
        "fc1_w": s * jax.random.normal(ks[4], (120, 400), jnp.float32),
        "fc1_b": s * jax.random.normal(ks[5], (120,), jnp.float32),
        "fc2_w": s * jax.random.normal(ks[6], (84, 120), jnp.float32),
        "fc2_b": s * jax.random.normal(ks[7], (84,), jnp.float32),
        "fc3_w": s * jax.random.normal(ks[8], (10, 84), jnp.float32),
        "fc3_b": s * jax.random.normal(ks[9], (10,), jnp.float32),
    }


def prepare_params(params):
    """Pack PyTorch-layout params into kh-stacked, lane-padded bf16 bands (done once)."""
    f32 = jnp.float32
    bf16 = jnp.bfloat16
    cw1 = params["conv1_w"].astype(f32)      # (co=6, ci=3, kh=5, kw=5)
    cw2 = params["conv2_w"].astype(f32)      # (co=16, c=6, kh=5, kw=5)

    # conv1 band: rows kh*128 + (w_in*3+ci), cols parity*128 + t*6 + co; kw = w_in - ow.
    w_in = np.arange(32)[:, None, None]
    par = np.arange(2)[None, :, None]
    t = np.arange(14)[None, None, :]
    kw = w_in - (2 * t + par)                                  # (32, 2, 14)
    valid = ((kw >= 0) & (kw <= 4)).astype(np.float32)
    kw_c = np.clip(kw, 0, 4)
    core = cw1[:, :, :, kw_c] * jnp.asarray(valid)[None, None, None]   # (6,3,5,32,2,14)
    core = jnp.transpose(core, (2, 3, 1, 4, 5, 0)).reshape(5, 96, 2, 84)
    b1 = jnp.zeros((5, 96, 2, 128), f32).at[..., :84].set(core).reshape(5, 96, 256)
    b1 = jnp.zeros((5, 128, 256), f32).at[:, :96, :].set(b1)   # pad contraction rows
    w1 = b1.reshape(640, 256).astype(bf16)

    # conv2 band: rows kh*128 + (t_in*6+c), cols parity*128 + v*16 + co; kw = t_in - ow.
    t_in = np.arange(14)[:, None, None]
    par = np.arange(2)[None, :, None]
    v = np.arange(5)[None, None, :]
    kw = t_in - (2 * v + par)                                  # (14, 2, 5)
    valid = ((kw >= 0) & (kw <= 4)).astype(np.float32)
    kw_c = np.clip(kw, 0, 4)
    core = cw2[:, :, :, kw_c] * jnp.asarray(valid)[None, None, None]   # (16,6,5,14,2,5)
    core = jnp.transpose(core, (2, 3, 1, 4, 5, 0)).reshape(5, 84, 2, 80)
    b2 = jnp.zeros((5, 128, 2, 128), f32).at[:, :84, :, :80].set(core).reshape(5, 128, 256)
    w2 = b2.reshape(640, 256).astype(bf16)

    # fc1 packed: rows q*128 + v*16 + co  <->  PyTorch flat index co*25 + q*5 + v.
    fc1 = params["fc1_w"].astype(f32).reshape(120, 16, 5, 5)         # (o, c, q, v)
    fc1 = jnp.transpose(fc1, (2, 3, 1, 0)).reshape(5, 80, 120)       # (q, v*16+co, o)
    wf1 = jnp.zeros((5, 128, 128), f32).at[:, :80, :120].set(fc1).reshape(640, 128)
    wf1 = wf1.astype(bf16)

    wf2 = jnp.zeros((128, 128), f32).at[:120, :84].set(
        params["fc2_w"].astype(f32).T).astype(bf16)
    wf3 = jnp.zeros((128, 128), f32).at[:84, :10].set(
        params["fc3_w"].astype(f32).T).astype(bf16)

    biases = jnp.zeros((8, 128), f32)
    biases = biases.at[0, :84].set(jnp.tile(params["conv1_b"].astype(f32), 14))
    biases = biases.at[1, :80].set(jnp.tile(params["conv2_b"].astype(f32), 5))
    biases = biases.at[2, :120].set(params["fc1_b"].astype(f32))
    biases = biases.at[3, :84].set(params["fc2_b"].astype(f32))
    biases = biases.at[4, :10].set(params["fc3_b"].astype(f32))

    return {"w1": w1, "w2": w2, "wf1": wf1, "wf2": wf2, "wf3": wf3, "biases": biases}


# ----------------------------- forward pass -----------------------------

def _round_up(v, m):
    return -(-v // m) * m


def lenet5_forward(x_nchw, packed, *, block_batch=128):
    """x_nchw: (N, 3, 32, 32) float32 -> logits (N, 10)."""
    assert block_batch % 8 == 0 and block_batch >= 8
    N = x_nchw.shape[0]
    # Batch-tile size: the primary tuning knob.  Multiple of 8 (sublane alignment),
    # shrunk for small batches, and sized so batches > 8 give >= 2 grid steps (v7x: two
    # TensorCores via the "parallel" grid axis).  bt=128 fills the 256-row MXU (7*bt).
    bt = min(block_batch, max(8, _round_up((N + 1) // 2, 8)))
    n_pad = (-N) % bt
    nt = (N + n_pad) // bt

    # Input repack (layout glue): NCHW -> (nt, 8*bt, 4*128) bf16 with
    #   X[i, u*bt + b, g*128 + w*3 + c] = x[i*bt+b, c, 4u+g, w]   (lanes 96..127 zero).
    # allow_input_fusion lets XLA fuse this into the pallas_call operand instead of
    # materializing a second HBM copy of the input.
    x = x_nchw.astype(jnp.bfloat16)
    if n_pad:
        x = jnp.pad(x, ((0, n_pad), (0, 0), (0, 0), (0, 0)))
    x = jnp.transpose(x, (0, 2, 3, 1))                    # (Np, 32, 32, 3) NHWC
    x = x.reshape(nt, bt, 8, 4, 96)                       # (i, b, u, g, w*3+c)
    x = jnp.pad(x, ((0, 0), (0, 0), (0, 0), (0, 0), (0, 32)))
    x = jnp.transpose(x, (0, 2, 1, 3, 4))                 # (i, u, b, g, 128)
    x = x.reshape(nt, 8 * bt, 512)

    out = pl.pallas_call(
        functools.partial(_lenet5_fused_kernel, bt=bt),
        out_shape=jax.ShapeDtypeStruct((nt * bt, 128), jnp.float32),
        grid=(nt,),
        in_specs=[
            pl.BlockSpec((1, 8 * bt, 512), lambda i: (i, 0, 0)),   # image tile
            pl.BlockSpec((640, 256), lambda i: (0, 0)),            # conv1 band
            pl.BlockSpec((640, 256), lambda i: (0, 0)),            # conv2 band
            pl.BlockSpec((640, 128), lambda i: (0, 0)),            # fc1 packed
            pl.BlockSpec((128, 128), lambda i: (0, 0)),            # fc2
            pl.BlockSpec((128, 128), lambda i: (0, 0)),            # fc3
            pl.BlockSpec((8, 128), lambda i: (0, 0)),              # biases (f32)
        ],
        out_specs=pl.BlockSpec((bt, 128), lambda i: (i, 0)),
        compiler_params=pltpu.CompilerParams(
            dimension_semantics=("parallel",),       # batch tiles across TCs (v7x)
            vmem_limit_bytes=32 * 1024 * 1024,       # ~10 MB used at bt=128
            allow_input_fusion=[True] + [False] * 6,  # fuse the input repack
        ),
    )(x, packed["w1"], packed["w2"], packed["wf1"], packed["wf2"],
      packed["wf3"], packed["biases"])

    return out[:N, :10]


# ----------------------------- pure-JAX reference (validation only) -----------------------------

def _ref_pool2x2(y):
    n, c, h, w = y.shape
    return y.reshape(n, c, h // 2, 2, w // 2, 2).max(axis=(3, 5))


def lenet5_reference(x_nchw, params):
    dn = ("NCHW", "OIHW", "NCHW")
    hi = jax.lax.Precision.HIGHEST
    y = jax.lax.conv_general_dilated(x_nchw, params["conv1_w"], (1, 1), "VALID",
                                     dimension_numbers=dn, precision=hi)
    y = jax.nn.relu(y + params["conv1_b"][None, :, None, None])
    y = _ref_pool2x2(y)
    y = jax.lax.conv_general_dilated(y, params["conv2_w"], (1, 1), "VALID",
                                     dimension_numbers=dn, precision=hi)
    y = jax.nn.relu(y + params["conv2_b"][None, :, None, None])
    y = _ref_pool2x2(y)
    y = y.reshape(y.shape[0], -1)
    y = jax.nn.relu(jnp.dot(y, params["fc1_w"].T, precision=hi) + params["fc1_b"])
    y = jax.nn.relu(jnp.dot(y, params["fc2_w"].T, precision=hi) + params["fc2_b"])
    return jnp.dot(y, params["fc3_w"].T, precision=hi) + params["fc3_b"]


# ----------------------------- demo -----------------------------

if __name__ == "__main__":
    key = jax.random.PRNGKey(0)
    k_x, k_p = jax.random.split(key)
    # LeNet-5 requires 3x32x32 input for the 16*5*5 flatten to hold.
    x = jax.random.normal(k_x, (2, 3, 32, 32), jnp.float32)
    params = init_params(k_p)
    packed = prepare_params(params)          # one-time weight packing

    fwd = jax.jit(lenet5_forward)
    out = jax.block_until_ready(fwd(x, packed))
    assert out.shape == (2, 10) and out.dtype == jnp.float32

    ref = jax.block_until_ready(lenet5_reference(x, params))
    err = float(jnp.max(jnp.abs(out - ref)))
    scale = max(1.0, float(jnp.max(jnp.abs(ref))))
    # bf16 MXU operands: validate with a relative tolerance (structural bugs would be O(1)).
    assert err <= 3e-2 * scale, f"mismatch vs reference: max abs err = {err}, scale = {scale}"

    print("KERNEL_OK")
</pallas_src>

<mosaic_0001>
module attributes {stable_mosaic.version = 11 : i64} {
  func.func @_lenet5_fused_kernel(%arg0: i32, %arg1: memref<1x64x512xbf16, #tpu.memory_space<vmem>>, %arg2: memref<640x256xbf16, #tpu.memory_space<vmem>>, %arg3: memref<640x256xbf16, #tpu.memory_space<vmem>>, %arg4: memref<640x128xbf16, #tpu.memory_space<vmem>>, %arg5: memref<128x128xbf16, #tpu.memory_space<vmem>>, %arg6: memref<128x128xbf16, #tpu.memory_space<vmem>>, %arg7: memref<8x128xf32, #tpu.memory_space<vmem>>, %arg8: memref<8x128xf32, #tpu.memory_space<vmem>>) attributes {dimension_semantics = [#tpu.dimension_semantics<parallel>], iteration_bounds = array<i64: 1>, scalar_prefetch = 0 : i64, scratch_operands = 0 : i64, tpu.core_type = #tpu.core_type<tc>, window_params = [{transform_indices = @transform_0, window_bounds = array<i64: 1, 64, 512>}, {pipeline_mode = #tpu.pipeline_mode<synchronous>, transform_indices = @transform_1, window_bounds = array<i64: 640, 256>}, {pipeline_mode = #tpu.pipeline_mode<synchronous>, transform_indices = @transform_2, window_bounds = array<i64: 640, 256>}, {pipeline_mode = #tpu.pipeline_mode<synchronous>, transform_indices = @transform_3, window_bounds = array<i64: 640, 128>}, {pipeline_mode = #tpu.pipeline_mode<synchronous>, transform_indices = @transform_4, window_bounds = array<i64: 128, 128>}, {pipeline_mode = #tpu.pipeline_mode<synchronous>, transform_indices = @transform_5, window_bounds = array<i64: 128, 128>}, {pipeline_mode = #tpu.pipeline_mode<synchronous>, transform_indices = @transform_6, window_bounds = array<i64: 8, 128>}, {transform_indices = @transform_7, window_bounds = array<i64: 8, 128>}]} {
    %c0 = arith.constant 0 : index
    %c0_0 = arith.constant 0 : index
    %c0_1 = arith.constant 0 : index
    %0 = vector.load %arg1[%c0, %c0_0, %c0_1] : memref<1x64x512xbf16, #tpu.memory_space<vmem>>, vector<1x56x512xbf16>
    %1 = vector.shape_cast %0 : vector<1x56x512xbf16> to vector<56x512xbf16>
    %c0_2 = arith.constant 0 : index
    %c0_3 = arith.constant 0 : index
    %2 = vector.load %arg2[%c0_2, %c0_3] : memref<640x256xbf16, #tpu.memory_space<vmem>>, vector<512x256xbf16>
    %cst = arith.constant dense<0.000000e+00> : vector<56x256xf32>
    %3 = tpu.matmul %1, %2, %cst {dimension_numbers = #tpu.dot_dimension_numbers<[1], [0], [0], [1], [0, 0, 1, 1], [], []>} : vector<56x512xbf16>, vector<512x256xbf16>, vector<56x256xf32> -> vector<56x256xf32>
    %c0_4 = arith.constant 0 : index
    %c8 = arith.constant 8 : index
    %c0_5 = arith.constant 0 : index
    %4 = vector.load %arg1[%c0_4, %c8, %c0_5] : memref<1x64x512xbf16, #tpu.memory_space<vmem>>, vector<1x56x128xbf16>
    %5 = vector.shape_cast %4 : vector<1x56x128xbf16> to vector<56x128xbf16>
    %c512 = arith.constant 512 : index
    %c0_6 = arith.constant 0 : index
    %6 = vector.load %arg2[%c512, %c0_6] : memref<640x256xbf16, #tpu.memory_space<vmem>>, vector<128x256xbf16>
    %cst_7 = arith.constant dense<0.000000e+00> : vector<56x256xf32>
    %7 = tpu.matmul %5, %6, %cst_7 {dimension_numbers = #tpu.dot_dimension_numbers<[1], [0], [0], [1], [0, 0, 1, 1], [], []>} : vector<56x128xbf16>, vector<128x256xbf16>, vector<56x256xf32> -> vector<56x256xf32>
    %8 = arith.addf %3, %7 : vector<56x256xf32>
    %c0_8 = arith.constant 0 : index
    %c0_9 = arith.constant 0 : index
    %c128 = arith.constant 128 : index
    %9 = vector.load %arg1[%c0_8, %c0_9, %c128] : memref<1x64x512xbf16, #tpu.memory_space<vmem>>, vector<1x56x384xbf16>
    %10 = vector.shape_cast %9 : vector<1x56x384xbf16> to vector<56x384xbf16>
    %c0_10 = arith.constant 0 : index
    %c0_11 = arith.constant 0 : index
    %11 = vector.load %arg2[%c0_10, %c0_11] : memref<640x256xbf16, #tpu.memory_space<vmem>>, vector<384x256xbf16>
    %cst_12 = arith.constant dense<0.000000e+00> : vector<56x256xf32>
    %12 = tpu.matmul %10, %11, %cst_12 {dimension_numbers = #tpu.dot_dimension_numbers<[1], [0], [0], [1], [0, 0, 1, 1], [], []>} : vector<56x384xbf16>, vector<384x256xbf16>, vector<56x256xf32> -> vector<56x256xf32>
    %c0_13 = arith.constant 0 : index
    %c8_14 = arith.constant 8 : index
    %c0_15 = arith.constant 0 : index
    %13 = vector.load %arg1[%c0_13, %c8_14, %c0_15] : memref<1x64x512xbf16, #tpu.memory_space<vmem>>, vector<1x56x256xbf16>
    %14 = vector.shape_cast %13 : vector<1x56x256xbf16> to vector<56x256xbf16>
    %c384 = arith.constant 384 : index
    %c0_16 = arith.constant 0 : index
    %15 = vector.load %arg2[%c384, %c0_16] : memref<640x256xbf16, #tpu.memory_space<vmem>>, vector<256x256xbf16>
    %cst_17 = arith.constant dense<0.000000e+00> : vector<56x256xf32>
    %16 = tpu.matmul %14, %15, %cst_17 {dimension_numbers = #tpu.dot_dimension_numbers<[1], [0], [0], [1], [0, 0, 1, 1], [], []>} : vector<56x256xbf16>, vector<256x256xbf16>, vector<56x256xf32> -> vector<56x256xf32>
    %17 = arith.addf %12, %16 : vector<56x256xf32>
    %c0_18 = arith.constant 0 : index
    %c0_19 = arith.constant 0 : index
    %c256 = arith.constant 256 : index
    %18 = vector.load %arg1[%c0_18, %c0_19, %c256] : memref<1x64x512xbf16, #tpu.memory_space<vmem>>, vector<1x56x256xbf16>
    %19 = vector.shape_cast %18 : vector<1x56x256xbf16> to vector<56x256xbf16>
    %c0_20 = arith.constant 0 : index
    %c0_21 = arith.constant 0 : index
    %20 = vector.load %arg2[%c0_20, %c0_21] : memref<640x256xbf16, #tpu.memory_space<vmem>>, vector<256x256xbf16>
    %cst_22 = arith.constant dense<0.000000e+00> : vector<56x256xf32>
    %21 = tpu.matmul %19, %20, %cst_22 {dimension_numbers = #tpu.dot_dimension_numbers<[1], [0], [0], [1], [0, 0, 1, 1], [], []>} : vector<56x256xbf16>, vector<256x256xbf16>, vector<56x256xf32> -> vector<56x256xf32>
    %c0_23 = arith.constant 0 : index
    %c8_24 = arith.constant 8 : index
    %c0_25 = arith.constant 0 : index
    %22 = vector.load %arg1[%c0_23, %c8_24, %c0_25] : memref<1x64x512xbf16, #tpu.memory_space<vmem>>, vector<1x56x384xbf16>
    %23 = vector.shape_cast %22 : vector<1x56x384xbf16> to vector<56x384xbf16>
    %c256_26 = arith.constant 256 : index
    %c0_27 = arith.constant 0 : index
    %24 = vector.load %arg2[%c256_26, %c0_27] : memref<640x256xbf16, #tpu.memory_space<vmem>>, vector<384x256xbf16>
    %cst_28 = arith.constant dense<0.000000e+00> : vector<56x256xf32>
    %25 = tpu.matmul %23, %24, %cst_28 {dimension_numbers = #tpu.dot_dimension_numbers<[1], [0], [0], [1], [0, 0, 1, 1], [], []>} : vector<56x384xbf16>, vector<384x256xbf16>, vector<56x256xf32> -> vector<56x256xf32>
    %26 = arith.addf %21, %25 : vector<56x256xf32>
    %c0_29 = arith.constant 0 : index
    %c0_30 = arith.constant 0 : index
    %c384_31 = arith.constant 384 : index
    %27 = vector.load %arg1[%c0_29, %c0_30, %c384_31] : memref<1x64x512xbf16, #tpu.memory_space<vmem>>, vector<1x56x128xbf16>
    %28 = vector.shape_cast %27 : vector<1x56x128xbf16> to vector<56x128xbf16>
    %c0_32 = arith.constant 0 : index
    %c0_33 = arith.constant 0 : index
    %29 = vector.load %arg2[%c0_32, %c0_33] : memref<640x256xbf16, #tpu.memory_space<vmem>>, vector<128x256xbf16>
    %cst_34 = arith.constant dense<0.000000e+00> : vector<56x256xf32>
    %30 = tpu.matmul %28, %29, %cst_34 {dimension_numbers = #tpu.dot_dimension_numbers<[1], [0], [0], [1], [0, 0, 1, 1], [], []>} : vector<56x128xbf16>, vector<128x256xbf16>, vector<56x256xf32> -> vector<56x256xf32>
    %c0_35 = arith.constant 0 : index
    %c8_36 = arith.constant 8 : index
    %c0_37 = arith.constant 0 : index
    %31 = vector.load %arg1[%c0_35, %c8_36, %c0_37] : memref<1x64x512xbf16, #tpu.memory_space<vmem>>, vector<1x56x512xbf16>
    %32 = vector.shape_cast %31 : vector<1x56x512xbf16> to vector<56x512xbf16>
    %c128_38 = arith.constant 128 : index
    %c0_39 = arith.constant 0 : index
    %33 = vector.load %arg2[%c128_38, %c0_39] : memref<640x256xbf16, #tpu.memory_space<vmem>>, vector<512x256xbf16>
    %cst_40 = arith.constant dense<0.000000e+00> : vector<56x256xf32>
    %34 = tpu.matmul %32, %33, %cst_40 {dimension_numbers = #tpu.dot_dimension_numbers<[1], [0], [0], [1], [0, 0, 1, 1], [], []>} : vector<56x512xbf16>, vector<512x256xbf16>, vector<56x256xf32> -> vector<56x256xf32>
    %35 = arith.addf %30, %34 : vector<56x256xf32>
    %c0_41 = arith.constant 0 : index
    %c0_42 = arith.constant 0 : index
    %36 = vector.load %arg7[%c0_41, %c0_42] : memref<8x128xf32, #tpu.memory_space<vmem>>, vector<1x128xf32>
    %37 = arith.maximumf %8, %17 : vector<56x256xf32>
    %38 = arith.maximumf %26, %35 : vector<56x256xf32>
    %39 = vector.extract_strided_slice %37 {offsets = [0, 0], sizes = [56, 128], strides = [1, 1]} : vector<56x256xf32> to vector<56x128xf32>
    %40 = vector.extract_strided_slice %37 {offsets = [0, 128], sizes = [56, 128], strides = [1, 1]} : vector<56x256xf32> to vector<56x128xf32>
    %41 = arith.maximumf %39, %40 : vector<56x128xf32>
    %42 = vector.broadcast %36 : vector<1x128xf32> to vector<56x128xf32>
    %43 = arith.addf %41, %42 : vector<56x128xf32>
    %cst_43 = arith.constant 0.000000e+00 : f32
    %44 = vector.broadcast %cst_43 : f32 to vector<56x128xf32>
    %45 = arith.maximumf %43, %44 : vector<56x128xf32>
    %46 = vector.extract_strided_slice %38 {offsets = [0, 0], sizes = [56, 128], strides = [1, 1]} : vector<56x256xf32> to vector<56x128xf32>
    %47 = vector.extract_strided_slice %38 {offsets = [0, 128], sizes = [56, 128], strides = [1, 1]} : vector<56x256xf32> to vector<56x128xf32>
    %48 = arith.maximumf %46, %47 : vector<56x128xf32>
    %49 = vector.broadcast %36 : vector<1x128xf32> to vector<56x128xf32>
    %50 = arith.addf %48, %49 : vector<56x128xf32>
    %cst_44 = arith.constant 0.000000e+00 : f32
    %51 = vector.broadcast %cst_44 : f32 to vector<56x128xf32>
    %52 = arith.maximumf %50, %51 : vector<56x128xf32>
    %53 = tpu.concatenate %45, %52 in 1 : vector<56x128xf32>, vector<56x128xf32> -> vector<56x256xf32>
    %54 = arith.truncf %53 : vector<56x256xf32> to vector<56x256xbf16>
    %55 = vector.extract_strided_slice %54 {offsets = [0, 0], sizes = [40, 256], strides = [1, 1]} : vector<56x256xbf16> to vector<40x256xbf16>
    %c0_45 = arith.constant 0 : index
    %c0_46 = arith.constant 0 : index
    %56 = vector.load %arg3[%c0_45, %c0_46] : memref<640x256xbf16, #tpu.memory_space<vmem>>, vector<256x256xbf16>
    %cst_47 = arith.constant dense<0.000000e+00> : vector<40x256xf32>
    %57 = tpu.matmul %55, %56, %cst_47 {dimension_numbers = #tpu.dot_dimension_numbers<[1], [0], [0], [1], [0, 0, 1, 1], [], []>} : vector<40x256xbf16>, vector<256x256xbf16>, vector<40x256xf32> -> vector<40x256xf32>
    %58 = vector.extract_strided_slice %54 {offsets = [8, 0], sizes = [40, 256], strides = [1, 1]} : vector<56x256xbf16> to vector<40x256xbf16>
    %c256_48 = arith.constant 256 : index
    %c0_49 = arith.constant 0 : index
    %59 = vector.load %arg3[%c256_48, %c0_49] : memref<640x256xbf16, #tpu.memory_space<vmem>>, vector<256x256xbf16>
    %cst_50 = arith.constant dense<0.000000e+00> : vector<40x256xf32>
    %60 = tpu.matmul %58, %59, %cst_50 {dimension_numbers = #tpu.dot_dimension_numbers<[1], [0], [0], [1], [0, 0, 1, 1], [], []>} : vector<40x256xbf16>, vector<256x256xbf16>, vector<40x256xf32> -> vector<40x256xf32>
    %61 = arith.addf %57, %60 : vector<40x256xf32>
    %62 = vector.extract_strided_slice %54 {offsets = [16, 0], sizes = [40, 128], strides = [1, 1]} : vector<56x256xbf16> to vector<40x128xbf16>
    %c512_51 = arith.constant 512 : index
    %c0_52 = arith.constant 0 : index
    %63 = vector.load %arg3[%c512_51, %c0_52] : memref<640x256xbf16, #tpu.memory_space<vmem>>, vector<128x256xbf16>
    %cst_53 = arith.constant dense<0.000000e+00> : vector<40x256xf32>
    %64 = tpu.matmul %62, %63, %cst_53 {dimension_numbers = #tpu.dot_dimension_numbers<[1], [0], [0], [1], [0, 0, 1, 1], [], []>} : vector<40x128xbf16>, vector<128x256xbf16>, vector<40x256xf32> -> vector<40x256xf32>
    %65 = arith.addf %61, %64 : vector<40x256xf32>
    %66 = vector.extract_strided_slice %54 {offsets = [0, 128], sizes = [40, 128], strides = [1, 1]} : vector<56x256xbf16> to vector<40x128xbf16>
    %c0_54 = arith.constant 0 : index
    %c0_55 = arith.constant 0 : index
    %67 = vector.load %arg3[%c0_54, %c0_55] : memref<640x256xbf16, #tpu.memory_space<vmem>>, vector<128x256xbf16>
    %cst_56 = arith.constant dense<0.000000e+00> : vector<40x256xf32>
    %68 = tpu.matmul %66, %67, %cst_56 {dimension_numbers = #tpu.dot_dimension_numbers<[1], [0], [0], [1], [0, 0, 1, 1], [], []>} : vector<40x128xbf16>, vector<128x256xbf16>, vector<40x256xf32> -> vector<40x256xf32>
    %69 = vector.extract_strided_slice %54 {offsets = [8, 0], sizes = [40, 256], strides = [1, 1]} : vector<56x256xbf16> to vector<40x256xbf16>
    %c128_57 = arith.constant 128 : index
    %c0_58 = arith.constant 0 : index
    %70 = vector.load %arg3[%c128_57, %c0_58] : memref<640x256xbf16, #tpu.memory_space<vmem>>, vector<256x256xbf16>
    %cst_59 = arith.constant dense<0.000000e+00> : vector<40x256xf32>
    %71 = tpu.matmul %69, %70, %cst_59 {dimension_numbers = #tpu.dot_dimension_numbers<[1], [0], [0], [1], [0, 0, 1, 1], [], []>} : vector<40x256xbf16>, vector<256x256xbf16>, vector<40x256xf32> -> vector<40x256xf32>
    %72 = arith.addf %68, %71 : vector<40x256xf32>
    %73 = vector.extract_strided_slice %54 {offsets = [16, 0], sizes = [40, 256], strides = [1, 1]} : vector<56x256xbf16> to vector<40x256xbf16>
    %c384_60 = arith.constant 384 : index
    %c0_61 = arith.constant 0 : index
    %74 = vector.load %arg3[%c384_60, %c0_61] : memref<640x256xbf16, #tpu.memory_space<vmem>>, vector<256x256xbf16>
    %cst_62 = arith.constant dense<0.000000e+00> : vector<40x256xf32>
    %75 = tpu.matmul %73, %74, %cst_62 {dimension_numbers = #tpu.dot_dimension_numbers<[1], [0], [0], [1], [0, 0, 1, 1], [], []>} : vector<40x256xbf16>, vector<256x256xbf16>, vector<40x256xf32> -> vector<40x256xf32>
    %76 = arith.addf %72, %75 : vector<40x256xf32>
    %c1 = arith.constant 1 : index
    %c0_63 = arith.constant 0 : index
    %77 = vector.load %arg7[%c1, %c0_63] : memref<8x128xf32, #tpu.memory_space<vmem>>, vector<1x128xf32>
    %78 = arith.maximumf %65, %76 : vector<40x256xf32>
    %79 = vector.extract_strided_slice %78 {offsets = [0, 0], sizes = [40, 128], strides = [1, 1]} : vector<40x256xf32> to vector<40x128xf32>
    %80 = vector.extract_strided_slice %78 {offsets = [0, 128], sizes = [40, 128], strides = [1, 1]} : vector<40x256xf32> to vector<40x128xf32>
    %81 = arith.maximumf %79, %80 : vector<40x128xf32>
    %82 = vector.broadcast %77 : vector<1x128xf32> to vector<40x128xf32>
    %83 = arith.addf %81, %82 : vector<40x128xf32>
    %cst_64 = arith.constant 0.000000e+00 : f32
    %84 = vector.broadcast %cst_64 : f32 to vector<40x128xf32>
    %85 = arith.maximumf %83, %84 : vector<40x128xf32>
    %86 = arith.truncf %85 : vector<40x128xf32> to vector<40x128xbf16>
    %87 = vector.extract_strided_slice %86 {offsets = [0, 0], sizes = [8, 128], strides = [1, 1]} : vector<40x128xbf16> to vector<8x128xbf16>
    %88 = vector.extract_strided_slice %86 {offsets = [8, 0], sizes = [8, 128], strides = [1, 1]} : vector<40x128xbf16> to vector<8x128xbf16>
    %89 = vector.extract_strided_slice %86 {offsets = [16, 0], sizes = [8, 128], strides = [1, 1]} : vector<40x128xbf16> to vector<8x128xbf16>
    %90 = vector.extract_strided_slice %86 {offsets = [24, 0], sizes = [8, 128], strides = [1, 1]} : vector<40x128xbf16> to vector<8x128xbf16>
    %91 = vector.extract_strided_slice %86 {offsets = [32, 0], sizes = [8, 128], strides = [1, 1]} : vector<40x128xbf16> to vector<8x128xbf16>
    %92 = tpu.concatenate %87, %88, %89, %90, %91 in 1 : vector<8x128xbf16>, vector<8x128xbf16>, vector<8x128xbf16>, vector<8x128xbf16>, vector<8x128xbf16> -> vector<8x640xbf16>
    %c0_65 = arith.constant 0 : index
    %c0_66 = arith.constant 0 : index
    %93 = vector.load %arg4[%c0_65, %c0_66] : memref<640x128xbf16, #tpu.memory_space<vmem>>, vector<640x128xbf16>
    %cst_67 = arith.constant dense<0.000000e+00> : vector<8x128xf32>
    %94 = tpu.matmul %92, %93, %cst_67 {dimension_numbers = #tpu.dot_dimension_numbers<[1], [0], [0], [1], [0, 0, 1, 1], [], []>} : vector<8x640xbf16>, vector<640x128xbf16>, vector<8x128xf32> -> vector<8x128xf32>
    %c2 = arith.constant 2 : index
    %c0_68 = arith.constant 0 : index
    %95 = vector.load %arg7[%c2, %c0_68] : memref<8x128xf32, #tpu.memory_space<vmem>>, vector<1x128xf32>
    %96 = vector.broadcast %95 : vector<1x128xf32> to vector<8x128xf32>
    %97 = arith.addf %94, %96 : vector<8x128xf32>
    %cst_69 = arith.constant 0.000000e+00 : f32
    %98 = vector.broadcast %cst_69 : f32 to vector<8x128xf32>
    %99 = arith.maximumf %97, %98 : vector<8x128xf32>
    %100 = arith.truncf %99 : vector<8x128xf32> to vector<8x128xbf16>
    %c0_70 = arith.constant 0 : index
    %c0_71 = arith.constant 0 : index
    %101 = vector.load %arg5[%c0_70, %c0_71] : memref<128x128xbf16, #tpu.memory_space<vmem>>, vector<128x128xbf16>
    %cst_72 = arith.constant dense<0.000000e+00> : vector<8x128xf32>
    %102 = tpu.matmul %100, %101, %cst_72 {dimension_numbers = #tpu.dot_dimension_numbers<[1], [0], [0], [1], [0, 0, 1, 1], [], []>} : vector<8x128xbf16>, vector<128x128xbf16>, vector<8x128xf32> -> vector<8x128xf32>
    %c3 = arith.constant 3 : index
    %c0_73 = arith.constant 0 : index
    %103 = vector.load %arg7[%c3, %c0_73] : memref<8x128xf32, #tpu.memory_space<vmem>>, vector<1x128xf32>
    %104 = vector.broadcast %103 : vector<1x128xf32> to vector<8x128xf32>
    %105 = arith.addf %102, %104 : vector<8x128xf32>
    %cst_74 = arith.constant 0.000000e+00 : f32
    %106 = vector.broadcast %cst_74 : f32 to vector<8x128xf32>
    %107 = arith.maximumf %105, %106 : vector<8x128xf32>
    %108 = arith.truncf %107 : vector<8x128xf32> to vector<8x128xbf16>
    %c0_75 = arith.constant 0 : index
    %c0_76 = arith.constant 0 : index
    %109 = vector.load %arg6[%c0_75, %c0_76] : memref<128x128xbf16, #tpu.memory_space<vmem>>, vector<128x128xbf16>
    %cst_77 = arith.constant dense<0.000000e+00> : vector<8x128xf32>
    %110 = tpu.matmul %108, %109, %cst_77 {dimension_numbers = #tpu.dot_dimension_numbers<[1], [0], [0], [1], [0, 0, 1, 1], [], []>} : vector<8x128xbf16>, vector<128x128xbf16>, vector<8x128xf32> -> vector<8x128xf32>
    %c4 = arith.constant 4 : index
    %c0_78 = arith.constant 0 : index
    %111 = vector.load %arg7[%c4, %c0_78] : memref<8x128xf32, #tpu.memory_space<vmem>>, vector<1x128xf32>
    %112 = vector.broadcast %111 : vector<1x128xf32> to vector<8x128xf32>
    %113 = arith.addf %110, %112 : vector<8x128xf32>
    %c0_79 = arith.constant 0 : index
    %c0_80 = arith.constant 0 : index
    %114 = vector.load %arg8[%c0_79, %c0_80] : memref<8x128xf32, #tpu.memory_space<vmem>>, vector<8x128xf32>
    tpu.vector_store %arg8[%c0_79, %c0_80], %113 {strides = array<i32>} : memref<8x128xf32, #tpu.memory_space<vmem>>, vector<8x128xf32>,
    return
  }
  func.func @transform_0(%arg0: i32) -> (i32, i32, i32) {
    %c0_i32 = arith.constant 0 : i32
    %c0_i32_0 = arith.constant 0 : i32
    %c0_i32_1 = arith.constant 0 : i32
    return %arg0, %c0_i32, %c0_i32_0 : i32, i32, i32
  }
  func.func @transform_1(%arg0: i32) -> (i32, i32) {
    %c0_i32 = arith.constant 0 : i32
    %c0_i32_0 = arith.constant 0 : i32
    %c0_i32_1 = arith.constant 0 : i32
    return %c0_i32, %c0_i32_0 : i32, i32
  }
  func.func @transform_2(%arg0: i32) -> (i32, i32) {
    %c0_i32 = arith.constant 0 : i32
    %c0_i32_0 = arith.constant 0 : i32
    %c0_i32_1 = arith.constant 0 : i32
    return %c0_i32, %c0_i32_0 : i32, i32
  }
  func.func @transform_3(%arg0: i32) -> (i32, i32) {
    %c0_i32 = arith.constant 0 : i32
    %c0_i32_0 = arith.constant 0 : i32
    %c0_i32_1 = arith.constant 0 : i32
    return %c0_i32, %c0_i32_0 : i32, i32
  }
  func.func @transform_4(%arg0: i32) -> (i32, i32) {
    %c0_i32 = arith.constant 0 : i32
    %c0_i32_0 = arith.constant 0 : i32
    %c0_i32_1 = arith.constant 0 : i32
    return %c0_i32, %c0_i32_0 : i32, i32
  }
  func.func @transform_5(%arg0: i32) -> (i32, i32) {
    %c0_i32 = arith.constant 0 : i32
    %c0_i32_0 = arith.constant 0 : i32
    %c0_i32_1 = arith.constant 0 : i32
    return %c0_i32, %c0_i32_0 : i32, i32
  }
  func.func @transform_6(%arg0: i32) -> (i32, i32) {
    %c0_i32 = arith.constant 0 : i32
    %c0_i32_0 = arith.constant 0 : i32
    %c0_i32_1 = arith.constant 0 : i32
    return %c0_i32, %c0_i32_0 : i32, i32
  }
  func.func @transform_7(%arg0: i32) -> (i32, i32) {
    %c0_i32 = arith.constant 0 : i32
    %c0_i32_0 = arith.constant 0 : i32
    return %arg0, %c0_i32 : i32, i32
  }
}

</mosaic_0001>

<llo_original>
// kernel: lenet5_forward.2
$region0: #{lenet5_forward.2}
  #allocation0 [shape = 'u32[]', space=smem, size = 0x4, offset = 0x4, fixed_abs, tag = 'smem constant byte address 0x4 - core index']
  #allocation1 [shape = 'u32[144,128]{1,0:T(1,128)}', space=vmem, size = 0x12000, scoped, tag = 'internal scratch']
  %s0 = inlined_call_operand.vmem [shape: bf16[640,256], index: 0, kind: input, shape index: {}]
  %s1 = inlined_call_operand.vmem [shape: bf16[640,256], index: 1, kind: input, shape index: {}]
  %s2 = inlined_call_operand.vmem [shape: bf16[640,128], index: 2, kind: input, shape index: {}]
  %s3 = inlined_call_operand.vmem [shape: bf16[128,128], index: 3, kind: input, shape index: {}]
  %s4 = inlined_call_operand.vmem [shape: bf16[128,128], index: 4, kind: input, shape index: {}]
  %s5 = inlined_call_operand.vmem [shape: f32[8,128], index: 5, kind: input, shape index: {}]
  %s6 = inlined_call_operand.vmem [shape: bf16[1,8,8,4,128], index: 6, kind: input, shape index: {}]
  %s7 = inlined_call_operand.vmem [shape: f32[8,128], index: 7, kind: output, shape index: {}]
  %s8 = sld [smem:[#allocation0]]
  $region38: #{lenet5_forward.2} parent=0
    _
  %s10 = ssub.s32 1, %s8
  %s11 = scalar_select 0, %s10, %s8
  $region1: #{lenet5_forward.2} parent=0
    #allocation2 [shape = 'u8[65536]{0}', space=vmem, size = 0x10000, dematerialized = true, scoped, tag = 'FusionAdapter Buffer %fusion.1 = bf16[1,64,512]{2,1,0:T(8,128)(2,1)} fusion(%param_6.1), kind=kLoop, calls=%fused_computation.3.clone, metadata={op_name="jit(lenet5_forward)/reshape" stack_frame_id=13}']
    // Predicated region
    $region2: #{lenet5_forward.2} parent=1 // pred_check
      _
    $region3: #{lenet5_forward.2} parent=1 // pred_check_branch
      %13 = sbr.rel (0) target = $region5
    $region4: #{lenet5_forward.2} parent=1 // pred_region
      _
    $region5: #{lenet5_forward.2} parent=1 // pred_fallthru
      _
    // Predicated region
    $region6: #{lenet5_forward.2} parent=1 // pred_check
      _
    $region7: #{lenet5_forward.2} parent=1 // pred_check_branch
      %15 = sbr.rel (0) target = $region9
    $region8: #{lenet5_forward.2} parent=1 // pred_region
      _
    $region9: #{lenet5_forward.2} parent=1 // pred_fallthru
      _
    // Predicated region
    $region10: #{lenet5_forward.2} parent=1 // pred_check
      _
    $region11: #{lenet5_forward.2} parent=1 // pred_check_branch
      %17 = sbr.rel (0) target = $region13
    $region12: #{lenet5_forward.2} parent=1 // pred_region
      _
    $region13: #{lenet5_forward.2} parent=1 // pred_fallthru
      _
    // Predicated region
    $region14: #{lenet5_forward.2} parent=1 // pred_check
      _
    $region15: #{lenet5_forward.2} parent=1 // pred_check_branch
      %19 = sbr.rel (0) target = $region17
    $region16: #{lenet5_forward.2} parent=1 // pred_region
      _
    $region17: #{lenet5_forward.2} parent=1 // pred_fallthru
      _
    // Predicated region
    $region18: #{lenet5_forward.2} parent=1 // pred_check
      _
    $region19: #{lenet5_forward.2} parent=1 // pred_check_branch
      %21 = sbr.rel (0) target = $region21
    $region20: #{lenet5_forward.2} parent=1 // pred_region
      _
    $region21: #{lenet5_forward.2} parent=1 // pred_fallthru
      _
    // Predicated region
    $region22: #{lenet5_forward.2} parent=1 // pred_check
      _
    $region23: #{lenet5_forward.2} parent=1 // pred_check_branch
      %23 = sbr.rel (0) target = $region25
    $region24: #{lenet5_forward.2} parent=1 // pred_region
      _
    $region25: #{lenet5_forward.2} parent=1 // pred_fallthru
      _
    // Predicated region
    $region26: #{lenet5_forward.2} parent=1 // pred_check
      _
    $region27: #{lenet5_forward.2} parent=1 // pred_check_branch
      %25 = sbr.rel (0) target = $region29
    $region28: #{lenet5_forward.2} parent=1 // pred_region
      _
    $region29: #{lenet5_forward.2} parent=1 // pred_fallthru
      _
    %v26 = vld [vmem:[%s6] sm:$0xf]
    %v27 = vunpack.c.l.bf16 %v26
    %v28 = vunpack.c.h.bf16 %v26
    %v29 = vpack.c.bf16 0.0, %v27
    %31 = vst [vmem:[#allocation2] sm:$0xf] %v29
    %s32 = scalar_lea.vmem %s6, 4
    %v33 = vld [vmem:[%s32] sm:$0xf]
    %v34 = vunpack.c.l.bf16 %v33
    %v35 = vunpack.c.h.bf16 %v33
    %s36 = scalar_lea.vmem [#allocation2], 4
    %v37 = vpack.c.bf16 0.0, %v34
    %39 = vst [vmem:[%s36] sm:$0xf] %v37
    %s40 = scalar_lea.vmem %s6, 8
    %v41 = vld [vmem:[%s40] sm:$0xf]
    %v42 = vunpack.c.l.bf16 %v41
    %v43 = vunpack.c.h.bf16 %v41
    %s44 = scalar_lea.vmem [#allocation2], 8
    %v45 = vpack.c.bf16 0.0, %v42
    %47 = vst [vmem:[%s44] sm:$0xf] %v45
    %s48 = scalar_lea.vmem %s6, 12
    %v49 = vld [vmem:[%s48] sm:$0xf]
    %v50 = vunpack.c.l.bf16 %v49
    %v51 = vunpack.c.h.bf16 %v49
    %s52 = scalar_lea.vmem [#allocation2], 12
    %v53 = vpack.c.bf16 0.0, %v50
    %55 = vst [vmem:[%s52] sm:$0xf] %v53
    %s56 = scalar_lea.vmem %s6, 16
    %v57 = vld [vmem:[%s56] sm:$0xf]
    %v58 = vunpack.c.l.bf16 %v57
    %v59 = vunpack.c.h.bf16 %v57
    %s60 = scalar_lea.vmem [#allocation2], 16
    %v61 = vpack.c.bf16 0.0, %v58
    %63 = vst [vmem:[%s60] sm:$0xf] %v61
    %s64 = scalar_lea.vmem %s6, 20
    %v65 = vld [vmem:[%s64] sm:$0xf]
    %v66 = vunpack.c.l.bf16 %v65
    %v67 = vunpack.c.h.bf16 %v65
    %s68 = scalar_lea.vmem [#allocation2], 20
    %v69 = vpack.c.bf16 0.0, %v66
    %71 = vst [vmem:[%s68] sm:$0xf] %v69
    %s72 = scalar_lea.vmem %s6, 24
    %v73 = vld [vmem:[%s72] sm:$0xf]
    %v74 = vunpack.c.l.bf16 %v73
    %v75 = vunpack.c.h.bf16 %v73
    %s76 = scalar_lea.vmem [#allocation2], 24
    %v77 = vpack.c.bf16 0.0, %v74
    %79 = vst [vmem:[%s76] sm:$0xf] %v77
    %s80 = scalar_lea.vmem %s6, 28
    %v81 = vld [vmem:[%s80] sm:$0xf]
    %v82 = vunpack.c.l.bf16 %v81
    %v83 = vunpack.c.h.bf16 %v81
    %s84 = scalar_lea.vmem [#allocation2], 28
    %v85 = vpack.c.bf16 0.0, %v82
    %87 = vst [vmem:[%s84] sm:$0xf] %v85
    %s88 = scalar_lea.vmem %s6, 32
    %v89 = vld [vmem:[%s88] sm:$0xf]
    %v90 = vunpack.c.l.bf16 %v89
    %v91 = vunpack.c.h.bf16 %v89
    %s92 = scalar_lea.vmem [#allocation2], 32
    %v93 = vpack.c.bf16 0.0, %v90
    %95 = vst [vmem:[%s92] sm:$0xf] %v93
    %s96 = scalar_lea.vmem %s6, 36
    %v97 = vld [vmem:[%s96] sm:$0xf]
    %v98 = vunpack.c.l.bf16 %v97
    %v99 = vunpack.c.h.bf16 %v97
    %s100 = scalar_lea.vmem [#allocation2], 36
    %v101 = vpack.c.bf16 0.0, %v98
    %103 = vst [vmem:[%s100] sm:$0xf] %v101
    %s104 = scalar_lea.vmem %s6, 40
    %v105 = vld [vmem:[%s104] sm:$0xf]
    %v106 = vunpack.c.l.bf16 %v105
    %v107 = vunpack.c.h.bf16 %v105
    %s108 = scalar_lea.vmem [#allocation2], 40
    %v109 = vpack.c.bf16 0.0, %v106
    %111 = vst [vmem:[%s108] sm:$0xf] %v109
    %s112 = scalar_lea.vmem %s6, 44
    %v113 = vld [vmem:[%s112] sm:$0xf]
    %v114 = vunpack.c.l.bf16 %v113
    %v115 = vunpack.c.h.bf16 %v113
    %s116 = scalar_lea.vmem [#allocation2], 44
    %v117 = vpack.c.bf16 0.0, %v114
    %119 = vst [vmem:[%s116] sm:$0xf] %v117
    %s120 = scalar_lea.vmem %s6, 48
    %v121 = vld [vmem:[%s120] sm:$0xf]
    %v122 = vunpack.c.l.bf16 %v121
    %v123 = vunpack.c.h.bf16 %v121
    %s124 = scalar_lea.vmem [#allocation2], 48
    %v125 = vpack.c.bf16 0.0, %v122
    %127 = vst [vmem:[%s124] sm:$0xf] %v125
    %s128 = scalar_lea.vmem %s6, 52
    %v129 = vld [vmem:[%s128] sm:$0xf]
    %v130 = vunpack.c.l.bf16 %v129
    %v131 = vunpack.c.h.bf16 %v129
    %s132 = scalar_lea.vmem [#allocation2], 52
    %v133 = vpack.c.bf16 0.0, %v130
    %135 = vst [vmem:[%s132] sm:$0xf] %v133
    %s136 = scalar_lea.vmem %s6, 56
    %v137 = vld [vmem:[%s136] sm:$0xf]
    %v138 = vunpack.c.l.bf16 %v137
    %v139 = vunpack.c.h.bf16 %v137
    %s140 = scalar_lea.vmem [#allocation2], 56
    %v141 = vpack.c.bf16 0.0, %v138
    %143 = vst [vmem:[%s140] sm:$0xf] %v141
    %s144 = scalar_lea.vmem %s6, 60
    %v145 = vld [vmem:[%s144] sm:$0xf]
    %v146 = vunpack.c.l.bf16 %v145
    %v147 = vunpack.c.h.bf16 %v145
    %s148 = scalar_lea.vmem [#allocation2], 60
    %v149 = vpack.c.bf16 0.0, %v146
    %151 = vst [vmem:[%s148] sm:$0xf] %v149
    %s152 = scalar_lea.vmem %s6, 64
    %v153 = vld [vmem:[%s152] sm:$0xf]
    %v154 = vunpack.c.l.bf16 %v153
    %v155 = vunpack.c.h.bf16 %v153
    %s156 = scalar_lea.vmem [#allocation2], 64
    %v157 = vpack.c.bf16 0.0, %v154
    %159 = vst [vmem:[%s156] sm:$0xf] %v157
    %s160 = scalar_lea.vmem %s6, 68
    %v161 = vld [vmem:[%s160] sm:$0xf]
    %v162 = vunpack.c.l.bf16 %v161
    %v163 = vunpack.c.h.bf16 %v161
    %s164 = scalar_lea.vmem [#allocation2], 68
    %v165 = vpack.c.bf16 0.0, %v162
    %167 = vst [vmem:[%s164] sm:$0xf] %v165
    %s168 = scalar_lea.vmem %s6, 72
    %v169 = vld [vmem:[%s168] sm:$0xf]
    %v170 = vunpack.c.l.bf16 %v169
    %v171 = vunpack.c.h.bf16 %v169
    %s172 = scalar_lea.vmem [#allocation2], 72
    %v173 = vpack.c.bf16 0.0, %v170
    %175 = vst [vmem:[%s172] sm:$0xf] %v173
    %s176 = scalar_lea.vmem %s6, 76
    %v177 = vld [vmem:[%s176] sm:$0xf]
    %v178 = vunpack.c.l.bf16 %v177
    %v179 = vunpack.c.h.bf16 %v177
    %s180 = scalar_lea.vmem [#allocation2], 76
    %v181 = vpack.c.bf16 0.0, %v178
    %183 = vst [vmem:[%s180] sm:$0xf] %v181
    %s184 = scalar_lea.vmem %s6, 80
    %v185 = vld [vmem:[%s184] sm:$0xf]
    %v186 = vunpack.c.l.bf16 %v185
    %v187 = vunpack.c.h.bf16 %v185
    %s188 = scalar_lea.vmem [#allocation2], 80
    %v189 = vpack.c.bf16 0.0, %v186
    %191 = vst [vmem:[%s188] sm:$0xf] %v189
    %s192 = scalar_lea.vmem %s6, 84
    %v193 = vld [vmem:[%s192] sm:$0xf]
    %v194 = vunpack.c.l.bf16 %v193
    %v195 = vunpack.c.h.bf16 %v193
    %s196 = scalar_lea.vmem [#allocation2], 84
    %v197 = vpack.c.bf16 0.0, %v194
    %199 = vst [vmem:[%s196] sm:$0xf] %v197
    %s200 = scalar_lea.vmem %s6, 88
    %v201 = vld [vmem:[%s200] sm:$0xf]
    %v202 = vunpack.c.l.bf16 %v201
    %v203 = vunpack.c.h.bf16 %v201
    %s204 = scalar_lea.vmem [#allocation2], 88
    %v205 = vpack.c.bf16 0.0, %v202
    %207 = vst [vmem:[%s204] sm:$0xf] %v205
    %s208 = scalar_lea.vmem %s6, 92
    %v209 = vld [vmem:[%s208] sm:$0xf]
    %v210 = vunpack.c.l.bf16 %v209
    %v211 = vunpack.c.h.bf16 %v209
    %s212 = scalar_lea.vmem [#allocation2], 92
    %v213 = vpack.c.bf16 0.0, %v210
    %215 = vst [vmem:[%s212] sm:$0xf] %v213
    %s216 = scalar_lea.vmem %s6, 96
    %v217 = vld [vmem:[%s216] sm:$0xf]
    %v218 = vunpack.c.l.bf16 %v217
    %v219 = vunpack.c.h.bf16 %v217
    %s220 = scalar_lea.vmem [#allocation2], 96
    %v221 = vpack.c.bf16 0.0, %v218
    %223 = vst [vmem:[%s220] sm:$0xf] %v221
    %s224 = scalar_lea.vmem %s6, 100
    %v225 = vld [vmem:[%s224] sm:$0xf]
    %v226 = vunpack.c.l.bf16 %v225
    %v227 = vunpack.c.h.bf16 %v225
    %s228 = scalar_lea.vmem [#allocation2], 100
    %v229 = vpack.c.bf16 0.0, %v226
    %231 = vst [vmem:[%s228] sm:$0xf] %v229
    %s232 = scalar_lea.vmem %s6, 104
    %v233 = vld [vmem:[%s232] sm:$0xf]
    %v234 = vunpack.c.l.bf16 %v233
    %v235 = vunpack.c.h.bf16 %v233
    %s236 = scalar_lea.vmem [#allocation2], 104
    %v237 = vpack.c.bf16 0.0, %v234
    %239 = vst [vmem:[%s236] sm:$0xf] %v237
    %s240 = scalar_lea.vmem %s6, 108
    %v241 = vld [vmem:[%s240] sm:$0xf]
    %v242 = vunpack.c.l.bf16 %v241
    %v243 = vunpack.c.h.bf16 %v241
    %s244 = scalar_lea.vmem [#allocation2], 108
    %v245 = vpack.c.bf16 0.0, %v242
    %247 = vst [vmem:[%s244] sm:$0xf] %v245
    %s248 = scalar_lea.vmem %s6, 112
    %v249 = vld [vmem:[%s248] sm:$0xf]
    %v250 = vunpack.c.l.bf16 %v249
    %v251 = vunpack.c.h.bf16 %v249
    %s252 = scalar_lea.vmem [#allocation2], 112
    %v253 = vpack.c.bf16 0.0, %v250
    %255 = vst [vmem:[%s252] sm:$0xf] %v253
    %s256 = scalar_lea.vmem %s6, 116
    %v257 = vld [vmem:[%s256] sm:$0xf]
    %v258 = vunpack.c.l.bf16 %v257
    %v259 = vunpack.c.h.bf16 %v257
    %s260 = scalar_lea.vmem [#allocation2], 116
    %v261 = vpack.c.bf16 0.0, %v258
    %263 = vst [vmem:[%s260] sm:$0xf] %v261
    %s264 = scalar_lea.vmem %s6, 120
    %v265 = vld [vmem:[%s264] sm:$0xf]
    %v266 = vunpack.c.l.bf16 %v265
    %v267 = vunpack.c.h.bf16 %v265
    %s268 = scalar_lea.vmem [#allocation2], 120
    %v269 = vpack.c.bf16 0.0, %v266
    %271 = vst [vmem:[%s268] sm:$0xf] %v269
    %s272 = scalar_lea.vmem %s6, 124
    %v273 = vld [vmem:[%s272] sm:$0xf]
    %v274 = vunpack.c.l.bf16 %v273
    %v275 = vunpack.c.h.bf16 %v273
    %s276 = scalar_lea.vmem [#allocation2], 124
    %v277 = vpack.c.bf16 0.0, %v274
    %279 = vst [vmem:[%s276] sm:$0xf] %v277
    %v281 = vld [vmem:[#allocation2] sm:$0xff]
    %v282 = vld [vmem:[#allocation2 + $0x8] sm:$0xff]
    %v283 = vld [vmem:[#allocation2 + $0x10] sm:$0xff]
    %v284 = vld [vmem:[#allocation2 + $0x18] sm:$0xff]
    %v285 = vld [vmem:[#allocation2 + $0x20] sm:$0xff]
    %v286 = vld [vmem:[#allocation2 + $0x28] sm:$0xff]
    %v287 = vld [vmem:[#allocation2 + $0x30] sm:$0xff]
    %v288 = vld [vmem:[#allocation2 + $0x38] sm:$0xff]
    %v289 = vld [vmem:[#allocation2 + $0x40] sm:$0xff]
    %v290 = vld [vmem:[#allocation2 + $0x48] sm:$0xff]
    %v291 = vld [vmem:[#allocation2 + $0x50] sm:$0xff]
    %v292 = vld [vmem:[#allocation2 + $0x58] sm:$0xff]
    %v293 = vld [vmem:[#allocation2 + $0x60] sm:$0xff]
    %v294 = vld [vmem:[#allocation2 + $0x68] sm:$0xff]
    %v295 = vld [vmem:[%s0] sm:$0xff]
    %v296 = vld [vmem:[%s0 + $0x8] sm:$0xff]
    %v297 = vld [vmem:[%s0 + $0x10] sm:$0xff]
    %v298 = vld [vmem:[%s0 + $0x18] sm:$0xff]
    %v299 = vld [vmem:[%s0 + $0x20] sm:$0xff]
    %v300 = vld [vmem:[%s0 + $0x28] sm:$0xff]
    %v301 = vld [vmem:[%s0 + $0x30] sm:$0xff]
    %v302 = vld [vmem:[%s0 + $0x38] sm:$0xff]
    %v303 = vld [vmem:[%s0 + $0x40] sm:$0xff]
    %v304 = vld [vmem:[%s0 + $0x48] sm:$0xff]
    %v305 = vld [vmem:[%s0 + $0x50] sm:$0xff]
    %v306 = vld [vmem:[%s0 + $0x58] sm:$0xff]
    %v307 = vld [vmem:[%s0 + $0x60] sm:$0xff]
    %v308 = vld [vmem:[%s0 + $0x68] sm:$0xff]
    %v309 = vld [vmem:[%s0 + $0x70] sm:$0xff]
    %v310 = vld [vmem:[%s0 + $0x78] sm:$0xff]
    %v311 = vld [vmem:[%s0 + $0x80] sm:$0xff]
    %v312 = vld [vmem:[%s0 + $0x88] sm:$0xff]
    %v313 = vld [vmem:[%s0 + $0x90] sm:$0xff]
    %v314 = vld [vmem:[%s0 + $0x98] sm:$0xff]
    %v315 = vld [vmem:[%s0 + $0xa0] sm:$0xff]
    %v316 = vld [vmem:[%s0 + $0xa8] sm:$0xff]
    %v317 = vld [vmem:[%s0 + $0xb0] sm:$0xff]
    %v318 = vld [vmem:[%s0 + $0xb8] sm:$0xff]
    %v319 = vld [vmem:[%s0 + $0xc0] sm:$0xff]
    %v320 = vld [vmem:[%s0 + $0xc8] sm:$0xff]
    %v321 = vld [vmem:[%s0 + $0xd0] sm:$0xff]
    %v322 = vld [vmem:[%s0 + $0xd8] sm:$0xff]
    %v323 = vld [vmem:[%s0 + $0xe0] sm:$0xff]
    %v324 = vld [vmem:[%s0 + $0xe8] sm:$0xff]
    %v325 = vld [vmem:[%s0 + $0xf0] sm:$0xff]
    %v326 = vld [vmem:[%s0 + $0xf8] sm:$0xff]
    %v327 = vld [vmem:[%s0 + $0x100] sm:$0xff]
    %v328 = vld [vmem:[%s0 + $0x108] sm:$0xff]
    %v329 = vld [vmem:[%s0 + $0x110] sm:$0xff]
    %v330 = vld [vmem:[%s0 + $0x118] sm:$0xff]
    %v331 = vld [vmem:[%s0 + $0x120] sm:$0xff]
    %v332 = vld [vmem:[%s0 + $0x128] sm:$0xff]
    %v333 = vld [vmem:[%s0 + $0x130] sm:$0xff]
    %v334 = vld [vmem:[%s0 + $0x138] sm:$0xff]
    %v335 = vld [vmem:[%s0 + $0x140] sm:$0xff]
    %v336 = vld [vmem:[%s0 + $0x148] sm:$0xff]
    %v337 = vld [vmem:[%s0 + $0x150] sm:$0xff]
    %v338 = vld [vmem:[%s0 + $0x158] sm:$0xff]
    %v339 = vld [vmem:[%s0 + $0x160] sm:$0xff]
    %v340 = vld [vmem:[%s0 + $0x168] sm:$0xff]
    %v341 = vld [vmem:[%s0 + $0x170] sm:$0xff]
    %v342 = vld [vmem:[%s0 + $0x178] sm:$0xff]
    %v343 = vld [vmem:[%s0 + $0x180] sm:$0xff]
    %v344 = vld [vmem:[%s0 + $0x188] sm:$0xff]
    %v345 = vld [vmem:[%s0 + $0x190] sm:$0xff]
    %v346 = vld [vmem:[%s0 + $0x198] sm:$0xff]
    %v347 = vld [vmem:[%s0 + $0x1a0] sm:$0xff]
    %v348 = vld [vmem:[%s0 + $0x1a8] sm:$0xff]
    %v349 = vld [vmem:[%s0 + $0x1b0] sm:$0xff]
    %v350 = vld [vmem:[%s0 + $0x1b8] sm:$0xff]
    %v351 = vld [vmem:[%s0 + $0x1c0] sm:$0xff]
    %v352 = vld [vmem:[%s0 + $0x1c8] sm:$0xff]
    %v353 = vld [vmem:[%s0 + $0x1d0] sm:$0xff]
    %v354 = vld [vmem:[%s0 + $0x1d8] sm:$0xff]
    %v355 = vld [vmem:[%s0 + $0x1e0] sm:$0xff]
    %v356 = vld [vmem:[%s0 + $0x1e8] sm:$0xff]
    %v357 = vld [vmem:[%s0 + $0x1f0] sm:$0xff]
    %v358 = vld [vmem:[%s0 + $0x1f8] sm:$0xff]
    %v359 = vld [vmem:[#allocation2 + $0x10] sm:$0xf]
    %v360 = vld [vmem:[#allocation2 + $0x20] sm:$0xf]
    %v361 = vld [vmem:[#allocation2 + $0x30] sm:$0xf]
    %v362 = vld [vmem:[#allocation2 + $0x40] sm:$0xf]
    %v363 = vld [vmem:[#allocation2 + $0x50] sm:$0xf]
    %v364 = vld [vmem:[#allocation2 + $0x60] sm:$0xf]
    %v365 = vld [vmem:[#allocation2 + $0x70] sm:$0xf]
    %v366 = vld [vmem:[%s0 + $0x200] sm:$0xff]
    %v367 = vld [vmem:[%s0 + $0x208] sm:$0xff]
    %v368 = vld [vmem:[%s0 + $0x210] sm:$0xff]
    %v369 = vld [vmem:[%s0 + $0x218] sm:$0xff]
    %v370 = vld [vmem:[%s0 + $0x220] sm:$0xff]
    %v371 = vld [vmem:[%s0 + $0x228] sm:$0xff]
    %v372 = vld [vmem:[%s0 + $0x230] sm:$0xff]
    %v373 = vld [vmem:[%s0 + $0x238] sm:$0xff]
    %v374 = vld [vmem:[%s0 + $0x240] sm:$0xff]
    %v375 = vld [vmem:[%s0 + $0x248] sm:$0xff]
    %v376 = vld [vmem:[%s0 + $0x250] sm:$0xff]
    %v377 = vld [vmem:[%s0 + $0x258] sm:$0xff]
    %v378 = vld [vmem:[%s0 + $0x260] sm:$0xff]
    %v379 = vld [vmem:[%s0 + $0x268] sm:$0xff]
    %v380 = vld [vmem:[%s0 + $0x270] sm:$0xff]
    %v381 = vld [vmem:[%s0 + $0x278] sm:$0xff]
    %v389 = vunpack.c.l.b16 %v359
    %v390 = vunpack.c.l.b16 %v360
    %v391 = vunpack.c.l.b16 %v361
    %v392 = vunpack.c.l.b16 %v362
    %v393 = vunpack.c.l.b16 %v363
    %v394 = vunpack.c.l.b16 %v364
    %v395 = vunpack.c.l.b16 %v365
    %v396 = vpack.c.b16 %v390, %v389
    %v397 = vpack.c.b16 %v392, %v391
    %v398 = vpack.c.b16 %v394, %v393
    %v399 = vpack.c.b16 %v395, %v395
    %v420 = vunpack.c.l.b16 %v366
    %v421 = vunpack.c.h.b16 %v366
    %v422 = vunpack.c.l.b16 %v367
    %v423 = vunpack.c.h.b16 %v367
    %v424 = vunpack.c.l.b16 %v368
    %v425 = vunpack.c.h.b16 %v368
    %v426 = vunpack.c.l.b16 %v369
    %v427 = vunpack.c.h.b16 %v369
    %v428 = vunpack.c.l.b16 %v370
    %v429 = vunpack.c.h.b16 %v370
    %v430 = vunpack.c.l.b16 %v371
    %v431 = vunpack.c.h.b16 %v371
    %v432 = vunpack.c.l.b16 %v372
    %v433 = vunpack.c.h.b16 %v372
    %v434 = vunpack.c.l.b16 %v373
    %v435 = vunpack.c.h.b16 %v373
    %v436 = vunpack.c.l.b16 %v374
    %v437 = vunpack.c.h.b16 %v374
    %v438 = vunpack.c.l.b16 %v375
    %v439 = vunpack.c.h.b16 %v375
    %v440 = vunpack.c.l.b16 %v376
    %v441 = vunpack.c.h.b16 %v376
    %v442 = vunpack.c.l.b16 %v377
    %v443 = vunpack.c.h.b16 %v377
    %v444 = vunpack.c.l.b16 %v378
    %v445 = vunpack.c.h.b16 %v378
    %v446 = vunpack.c.l.b16 %v379
    %v447 = vunpack.c.h.b16 %v379
    %v448 = vunpack.c.l.b16 %v380
    %v449 = vunpack.c.h.b16 %v380
    %v450 = vunpack.c.l.b16 %v381
    %v451 = vunpack.c.h.b16 %v381
    %v452 = vpack.c.b16 %v422, %v420
    %v453 = vpack.c.b16 %v423, %v421
    %v454 = vpack.c.b16 %v426, %v424
    %v455 = vpack.c.b16 %v427, %v425
    %v456 = vpack.c.b16 %v430, %v428
    %v457 = vpack.c.b16 %v431, %v429
    %v458 = vpack.c.b16 %v434, %v432
    %v459 = vpack.c.b16 %v435, %v433
    %v460 = vpack.c.b16 %v438, %v436
    %v461 = vpack.c.b16 %v439, %v437
    %v462 = vpack.c.b16 %v442, %v440
    %v463 = vpack.c.b16 %v443, %v441
    %v464 = vpack.c.b16 %v446, %v444
    %v465 = vpack.c.b16 %v447, %v445
    %v466 = vpack.c.b16 %v450, %v448
    %v467 = vpack.c.b16 %v451, %v449
    %484 = vmatprep.subr.bf16.mxu0 %v453
    %485 = vmatpush1.bf16.msra.mxu0 %v452
    %486 = vmatprep.subr.bf16.mxu0 %v455
    %487 = vmatpush1.bf16.msra.mxu0 %v454
    %488 = vmatprep.subr.bf16.mxu0 %v457
    %489 = vmatpush1.bf16.msra.mxu0 %v456
    %490 = vmatprep.subr.bf16.mxu0 %v459
    %491 = vmatpush1.bf16.msra.mxu0 %v458
    %492 = vmatprep.subr.bf16.mxu0 %v461
    %493 = vmatpush1.bf16.msra.mxu0 %v460
    %494 = vmatprep.subr.bf16.mxu0 %v463
    %495 = vmatpush1.bf16.msra.mxu0 %v462
    %496 = vmatprep.subr.bf16.mxu0 %v465
    %497 = vmatpush1.bf16.msra.mxu0 %v464
    %498 = vmatprep.subr.bf16.mxu0 %v467
    %499 = vmatpush1.bf16.msra.mxu0 %v466
    %500 = vmatprep.subr.bf16.mxu0 0
    %501 = vmatpush1.bf16.msra.mxu0 0
    %502 = vmatprep.subr.bf16.mxu0 0
    %503 = vmatpush1.bf16.msra.mxu0 0
    %504 = vmatprep.subr.bf16.mxu0 0
    %505 = vmatpush1.bf16.msra.mxu0 0
    %506 = vmatprep.subr.bf16.mxu0 0
    %507 = vmatpush1.bf16.msra.mxu0 0
    %508 = vmatprep.subr.bf16.mxu0 0
    %509 = vmatpush1.bf16.msra.mxu0 0
    %510 = vmatprep.subr.bf16.mxu0 0
    %511 = vmatpush1.bf16.msra.mxu0 0
    %512 = vmatprep.subr.bf16.mxu0 0
    %513 = vmatpush1.bf16.msra.mxu0 0
    %514 = vmatprep.subr.bf16.mxu0 0
    %515 = vmatpush1.bf16.msra.mxu0 0
    %516 = vmatprep.mubr.bf16.mxu0 0
    %517 = vmatmul.mubr.bf16.gmra.mrb[0].mxu0 %v396
    %v518 = vpop.f32.mrb[0].mxu0
    %v519 = vadd.f32 0.0, %v518
    %v520 = vpop.f32.mrb[0].mxu0
    %v521 = vadd.f32 0.0, %v520
    %v522 = vpop.f32.mrb[0].mxu0
    %v523 = vadd.f32 0.0, %v522
    %v524 = vpop.f32.mrb[0].mxu0
    %v525 = vadd.f32 0.0, %v524
    %526 = vmatprep.mubr.bf16.mxu0 0
    %527 = vmatmul.mubr.bf16.gmra.mrb[0].mxu0 %v397
    %v528 = vpop.f32.mrb[0].mxu0
    %v529 = vadd.f32 0.0, %v528
    %v530 = vpop.f32.mrb[0].mxu0
    %v531 = vadd.f32 0.0, %v530
    %v532 = vpop.f32.mrb[0].mxu0
    %v533 = vadd.f32 0.0, %v532
    %v534 = vpop.f32.mrb[0].mxu0
    %v535 = vadd.f32 0.0, %v534
    %536 = vmatprep.mubr.bf16.mxu0 0
    %537 = vmatmul.mubr.bf16.gmra.mrb[0].mxu0 %v398
    %v538 = vpop.f32.mrb[0].mxu0
    %v539 = vadd.f32 0.0, %v538
    %v540 = vpop.f32.mrb[0].mxu0
    %v541 = vadd.f32 0.0, %v540
    %v542 = vpop.f32.mrb[0].mxu0
    %v543 = vadd.f32 0.0, %v542
    %v544 = vpop.f32.mrb[0].mxu0
    %v545 = vadd.f32 0.0, %v544
    %546 = vmatprep.mubr.bf16.mxu0 0
    %547 = vmatmul.mubr.bf16.gmra.mrb[0].mxu0 %v399
    %v548 = vpop.f32.mrb[0].mxu0
    %v549 = vadd.f32 0.0, %v548
    %v550 = vpop.f32.mrb[0].mxu0
    %v551 = vadd.f32 0.0, %v550
    %v552 = vpop.f32.mrb[0].mxu0
    %v553 = vpop.f32.mrb[0].mxu0
    %554 = vdwg.mxu0
    %v569 = vunpack.c.l.b16 %v281
    %v570 = vunpack.c.h.b16 %v281
    %v571 = vunpack.c.l.b16 %v282
    %v572 = vunpack.c.h.b16 %v282
    %v573 = vunpack.c.l.b16 %v283
    %v574 = vunpack.c.h.b16 %v283
    %v575 = vunpack.c.l.b16 %v284
    %v576 = vunpack.c.h.b16 %v284
    %v577 = vunpack.c.l.b16 %v285
    %v578 = vunpack.c.h.b16 %v285
    %v579 = vunpack.c.l.b16 %v286
    %v580 = vunpack.c.h.b16 %v286
    %v581 = vunpack.c.l.b16 %v287
    %v582 = vunpack.c.h.b16 %v287
    %v583 = vunpack.c.l.b16 %v288
    %v584 = vunpack.c.h.b16 %v288
    %v585 = vunpack.c.l.b16 %v289
    %v586 = vunpack.c.h.b16 %v289
    %v587 = vunpack.c.l.b16 %v290
    %v588 = vunpack.c.h.b16 %v290
    %v589 = vunpack.c.l.b16 %v291
    %v590 = vunpack.c.h.b16 %v291
    %v591 = vunpack.c.l.b16 %v292
    %v592 = vunpack.c.h.b16 %v292
    %v593 = vunpack.c.l.b16 %v293
    %v594 = vunpack.c.h.b16 %v293
    %v595 = vunpack.c.l.b16 %v294
    %v596 = vunpack.c.h.b16 %v294
    %v597 = vpack.c.b16 %v573, %v569
    %v598 = vpack.c.b16 %v574, %v570
    %v599 = vpack.c.b16 %v575, %v571
    %v600 = vpack.c.b16 %v576, %v572
    %v601 = vpack.c.b16 %v581, %v577
    %v602 = vpack.c.b16 %v582, %v578
    %v603 = vpack.c.b16 %v583, %v579
    %v604 = vpack.c.b16 %v584, %v580
    %v605 = vpack.c.b16 %v589, %v585
    %v606 = vpack.c.b16 %v590, %v586
    %v607 = vpack.c.b16 %v591, %v587
    %v608 = vpack.c.b16 %v592, %v588
    %v609 = vpack.c.b16 %v593, %v593
    %v610 = vpack.c.b16 %v594, %v594
    %v611 = vpack.c.b16 %v595, %v595
    %v612 = vpack.c.b16 %v596, %v596
    %v693 = vunpack.c.l.b16 %v295
    %v694 = vunpack.c.h.b16 %v295
    %v695 = vunpack.c.l.b16 %v296
    %v696 = vunpack.c.h.b16 %v296
    %v697 = vunpack.c.l.b16 %v297
    %v698 = vunpack.c.h.b16 %v297
    %v699 = vunpack.c.l.b16 %v298
    %v700 = vunpack.c.h.b16 %v298
    %v701 = vunpack.c.l.b16 %v299
    %v702 = vunpack.c.h.b16 %v299
    %v703 = vunpack.c.l.b16 %v300
    %v704 = vunpack.c.h.b16 %v300
    %v705 = vunpack.c.l.b16 %v301
    %v706 = vunpack.c.h.b16 %v301
    %v707 = vunpack.c.l.b16 %v302
    %v708 = vunpack.c.h.b16 %v302
    %v709 = vunpack.c.l.b16 %v303
    %v710 = vunpack.c.h.b16 %v303
    %v711 = vunpack.c.l.b16 %v304
    %v712 = vunpack.c.h.b16 %v304
    %v713 = vunpack.c.l.b16 %v305
    %v714 = vunpack.c.h.b16 %v305
    %v715 = vunpack.c.l.b16 %v306
    %v716 = vunpack.c.h.b16 %v306
    %v717 = vunpack.c.l.b16 %v307
    %v718 = vunpack.c.h.b16 %v307
    %v719 = vunpack.c.l.b16 %v308
    %v720 = vunpack.c.h.b16 %v308
    %v721 = vunpack.c.l.b16 %v309
    %v722 = vunpack.c.h.b16 %v309
    %v723 = vunpack.c.l.b16 %v310
    %v724 = vunpack.c.h.b16 %v310
    %v725 = vunpack.c.l.b16 %v311
    %v726 = vunpack.c.h.b16 %v311
    %v727 = vunpack.c.l.b16 %v312
    %v728 = vunpack.c.h.b16 %v312
    %v729 = vunpack.c.l.b16 %v313
    %v730 = vunpack.c.h.b16 %v313
    %v731 = vunpack.c.l.b16 %v314
    %v732 = vunpack.c.h.b16 %v314
    %v733 = vunpack.c.l.b16 %v315
    %v734 = vunpack.c.h.b16 %v315
    %v735 = vunpack.c.l.b16 %v316
    %v736 = vunpack.c.h.b16 %v316
    %v737 = vunpack.c.l.b16 %v317
    %v738 = vunpack.c.h.b16 %v317
    %v739 = vunpack.c.l.b16 %v318
    %v740 = vunpack.c.h.b16 %v318
    %v741 = vunpack.c.l.b16 %v319
    %v742 = vunpack.c.h.b16 %v319
    %v743 = vunpack.c.l.b16 %v320
    %v744 = vunpack.c.h.b16 %v320
    %v745 = vunpack.c.l.b16 %v321
    %v746 = vunpack.c.h.b16 %v321
    %v747 = vunpack.c.l.b16 %v322
    %v748 = vunpack.c.h.b16 %v322
    %v749 = vunpack.c.l.b16 %v323
    %v750 = vunpack.c.h.b16 %v323
    %v751 = vunpack.c.l.b16 %v324
    %v752 = vunpack.c.h.b16 %v324
    %v753 = vunpack.c.l.b16 %v325
    %v754 = vunpack.c.h.b16 %v325
    %v755 = vunpack.c.l.b16 %v326
    %v756 = vunpack.c.h.b16 %v326
    %v757 = vunpack.c.l.b16 %v327
    %v758 = vunpack.c.h.b16 %v327
    %v759 = vunpack.c.l.b16 %v328
    %v760 = vunpack.c.h.b16 %v328
    %v761 = vunpack.c.l.b16 %v329
    %v762 = vunpack.c.h.b16 %v329
    %v763 = vunpack.c.l.b16 %v330
    %v764 = vunpack.c.h.b16 %v330
    %v765 = vunpack.c.l.b16 %v331
    %v766 = vunpack.c.h.b16 %v331
    %v767 = vunpack.c.l.b16 %v332
    %v768 = vunpack.c.h.b16 %v332
    %v769 = vunpack.c.l.b16 %v333
    %v770 = vunpack.c.h.b16 %v333
    %v771 = vunpack.c.l.b16 %v334
    %v772 = vunpack.c.h.b16 %v334
    %v773 = vunpack.c.l.b16 %v335
    %v774 = vunpack.c.h.b16 %v335
    %v775 = vunpack.c.l.b16 %v336
    %v776 = vunpack.c.h.b16 %v336
    %v777 = vunpack.c.l.b16 %v337
    %v778 = vunpack.c.h.b16 %v337
    %v779 = vunpack.c.l.b16 %v338
    %v780 = vunpack.c.h.b16 %v338
    %v781 = vunpack.c.l.b16 %v339
    %v782 = vunpack.c.h.b16 %v339
    %v783 = vunpack.c.l.b16 %v340
    %v784 = vunpack.c.h.b16 %v340
    %v785 = vunpack.c.l.b16 %v341
    %v786 = vunpack.c.h.b16 %v341
    %v787 = vunpack.c.l.b16 %v342
    %v788 = vunpack.c.h.b16 %v342
    %v789 = vunpack.c.l.b16 %v343
    %v790 = vunpack.c.h.b16 %v343
    %v791 = vunpack.c.l.b16 %v344
    %v792 = vunpack.c.h.b16 %v344
    %v793 = vunpack.c.l.b16 %v345
    %v794 = vunpack.c.h.b16 %v345
    %v795 = vunpack.c.l.b16 %v346
    %v796 = vunpack.c.h.b16 %v346
    %v797 = vunpack.c.l.b16 %v347
    %v798 = vunpack.c.h.b16 %v347
    %v799 = vunpack.c.l.b16 %v348
    %v800 = vunpack.c.h.b16 %v348
    %v801 = vunpack.c.l.b16 %v349
    %v802 = vunpack.c.h.b16 %v349
    %v803 = vunpack.c.l.b16 %v350
    %v804 = vunpack.c.h.b16 %v350
    %v805 = vunpack.c.l.b16 %v351
    %v806 = vunpack.c.h.b16 %v351
    %v807 = vunpack.c.l.b16 %v352
    %v808 = vunpack.c.h.b16 %v352
    %v809 = vunpack.c.l.b16 %v353
    %v810 = vunpack.c.h.b16 %v353
    %v811 = vunpack.c.l.b16 %v354
    %v812 = vunpack.c.h.b16 %v354
    %v813 = vunpack.c.l.b16 %v355
    %v814 = vunpack.c.h.b16 %v355
    %v815 = vunpack.c.l.b16 %v356
    %v816 = vunpack.c.h.b16 %v356
    %v817 = vunpack.c.l.b16 %v357
    %v818 = vunpack.c.h.b16 %v357
    %v819 = vunpack.c.l.b16 %v358
    %v820 = vunpack.c.h.b16 %v358
    %v821 = vpack.c.b16 %v695, %v693
    %v822 = vpack.c.b16 %v696, %v694
    %v823 = vpack.c.b16 %v699, %v697
    %v824 = vpack.c.b16 %v700, %v698
    %v825 = vpack.c.b16 %v703, %v701
    %v826 = vpack.c.b16 %v704, %v702
    %v827 = vpack.c.b16 %v707, %v705
    %v828 = vpack.c.b16 %v708, %v706
    %v829 = vpack.c.b16 %v711, %v709
    %v830 = vpack.c.b16 %v712, %v710
    %v831 = vpack.c.b16 %v715, %v713
    %v832 = vpack.c.b16 %v716, %v714
    %v833 = vpack.c.b16 %v719, %v717
    %v834 = vpack.c.b16 %v720, %v718
    %v835 = vpack.c.b16 %v723, %v721
    %v836 = vpack.c.b16 %v724, %v722
    %v837 = vpack.c.b16 %v727, %v725
    %v838 = vpack.c.b16 %v728, %v726
    %v839 = vpack.c.b16 %v731, %v729
    %v840 = vpack.c.b16 %v732, %v730
    %v841 = vpack.c.b16 %v735, %v733
    %v842 = vpack.c.b16 %v736, %v734
    %v843 = vpack.c.b16 %v739, %v737
    %v844 = vpack.c.b16 %v740, %v738
    %v845 = vpack.c.b16 %v743, %v741
    %v846 = vpack.c.b16 %v744, %v742
    %v847 = vpack.c.b16 %v747, %v745
    %v848 = vpack.c.b16 %v748, %v746
    %v849 = vpack.c.b16 %v751, %v749
    %v850 = vpack.c.b16 %v752, %v750
    %v851 = vpack.c.b16 %v755, %v753
    %v852 = vpack.c.b16 %v756, %v754
    %v853 = vpack.c.b16 %v759, %v757
    %v854 = vpack.c.b16 %v760, %v758
    %v855 = vpack.c.b16 %v763, %v761
    %v856 = vpack.c.b16 %v764, %v762
    %v857 = vpack.c.b16 %v767, %v765
    %v858 = vpack.c.b16 %v768, %v766
    %v859 = vpack.c.b16 %v771, %v769
    %v860 = vpack.c.b16 %v772, %v770
    %v861 = vpack.c.b16 %v775, %v773
    %v862 = vpack.c.b16 %v776, %v774
    %v863 = vpack.c.b16 %v779, %v777
    %v864 = vpack.c.b16 %v780, %v778
    %v865 = vpack.c.b16 %v783, %v781
    %v866 = vpack.c.b16 %v784, %v782
    %v867 = vpack.c.b16 %v787, %v785
    %v868 = vpack.c.b16 %v788, %v786
    %v869 = vpack.c.b16 %v791, %v789
    %v870 = vpack.c.b16 %v792, %v790
    %v871 = vpack.c.b16 %v795, %v793
    %v872 = vpack.c.b16 %v796, %v794
    %v873 = vpack.c.b16 %v799, %v797
    %v874 = vpack.c.b16 %v800, %v798
    %v875 = vpack.c.b16 %v803, %v801
    %v876 = vpack.c.b16 %v804, %v802
    %v877 = vpack.c.b16 %v807, %v805
    %v878 = vpack.c.b16 %v808, %v806
    %v879 = vpack.c.b16 %v811, %v809
    %v880 = vpack.c.b16 %v812, %v810
    %v881 = vpack.c.b16 %v815, %v813
    %v882 = vpack.c.b16 %v816, %v814
    %v883 = vpack.c.b16 %v819, %v817
    %v884 = vpack.c.b16 %v820, %v818
    %949 = vmatprep.subr.bf16.mxu0 %v822
    %950 = vmatpush1.bf16.msra.mxu0 %v821
    %951 = vmatprep.subr.bf16.mxu0 %v824
    %952 = vmatpush1.bf16.msra.mxu0 %v823
    %953 = vmatprep.subr.bf16.mxu0 %v826
    %954 = vmatpush1.bf16.msra.mxu0 %v825
    %955 = vmatprep.subr.bf16.mxu0 %v828
    %956 = vmatpush1.bf16.msra.mxu0 %v827
    %957 = vmatprep.subr.bf16.mxu0 %v830
    %958 = vmatpush1.bf16.msra.mxu0 %v829
    %959 = vmatprep.subr.bf16.mxu0 %v832
    %960 = vmatpush1.bf16.msra.mxu0 %v831
    %961 = vmatprep.subr.bf16.mxu0 %v834
    %962 = vmatpush1.bf16.msra.mxu0 %v833
    %963 = vmatprep.subr.bf16.mxu0 %v836
    %964 = vmatpush1.bf16.msra.mxu0 %v835
    %965 = vmatprep.subr.bf16.mxu0 %v838
    %966 = vmatpush1.bf16.msra.mxu0 %v837
    %967 = vmatprep.subr.bf16.mxu0 %v840
    %968 = vmatpush1.bf16.msra.mxu0 %v839
    %969 = vmatprep.subr.bf16.mxu0 %v842
    %970 = vmatpush1.bf16.msra.mxu0 %v841
    %971 = vmatprep.subr.bf16.mxu0 %v844
    %972 = vmatpush1.bf16.msra.mxu0 %v843
    %973 = vmatprep.subr.bf16.mxu0 %v846
    %974 = vmatpush1.bf16.msra.mxu0 %v845
    %975 = vmatprep.subr.bf16.mxu0 %v848
    %976 = vmatpush1.bf16.msra.mxu0 %v847
    %977 = vmatprep.subr.bf16.mxu0 %v850
    %978 = vmatpush1.bf16.msra.mxu0 %v849
    %979 = vmatprep.subr.bf16.mxu0 %v852
    %980 = vmatpush1.bf16.msra.mxu0 %v851
    %981 = vmatprep.mubr.bf16.mxu0 %v598
    %982 = vmatmul.mubr.bf16.gmra.mrb[0].mxu0 %v597
    %v983 = vpop.f32.mrb[0].mxu0
    %v984 = vadd.f32 %v519, %v983
    %v985 = vpop.f32.mrb[0].mxu0
    %v986 = vadd.f32 %v521, %v985
    %v987 = vpop.f32.mrb[0].mxu0
    %v988 = vadd.f32 %v523, %v987
    %v989 = vpop.f32.mrb[0].mxu0
    %v990 = vadd.f32 %v525, %v989
    %991 = vmatprep.mubr.bf16.mxu0 %v602
    %992 = vmatmul.mubr.bf16.gmra.mrb[0].mxu0 %v601
    %v993 = vpop.f32.mrb[0].mxu0
    %v994 = vadd.f32 %v529, %v993
    %v995 = vpop.f32.mrb[0].mxu0
    %v996 = vadd.f32 %v531, %v995
    %v997 = vpop.f32.mrb[0].mxu0
    %v998 = vadd.f32 %v533, %v997
    %v999 = vpop.f32.mrb[0].mxu0
    %v1000 = vadd.f32 %v535, %v999
    %1001 = vmatprep.mubr.bf16.mxu0 %v606
    %1002 = vmatmul.mubr.bf16.gmra.mrb[0].mxu0 %v605
    %v1003 = vpop.f32.mrb[0].mxu0
    %v1004 = vadd.f32 %v539, %v1003
    %v1005 = vpop.f32.mrb[0].mxu0
    %v1006 = vadd.f32 %v541, %v1005
    %v1007 = vpop.f32.mrb[0].mxu0
    %v1008 = vadd.f32 %v543, %v1007
    %v1009 = vpop.f32.mrb[0].mxu0
    %v1010 = vadd.f32 %v545, %v1009
    %1011 = vmatprep.mubr.bf16.mxu0 %v610
    %1012 = vmatmul.mubr.bf16.gmra.mrb[0].mxu0 %v609
    %v1013 = vpop.f32.mrb[0].mxu0
    %v1014 = vadd.f32 %v549, %v1013
    %v1015 = vpop.f32.mrb[0].mxu0
    %v1016 = vadd.f32 %v551, %v1015
    %v1017 = vpop.f32.mrb[0].mxu0
    %v1018 = vpop.f32.mrb[0].mxu0
    %1019 = vdwg.mxu0
    %1020 = vmatprep.subr.bf16.mxu0 %v854
    %1021 = vmatpush1.bf16.msra.mxu0 %v853
    %1022 = vmatprep.subr.bf16.mxu0 %v856
    %1023 = vmatpush1.bf16.msra.mxu0 %v855
    %1024 = vmatprep.subr.bf16.mxu0 %v858
    %1025 = vmatpush1.bf16.msra.mxu0 %v857
    %1026 = vmatprep.subr.bf16.mxu0 %v860
    %1027 = vmatpush1.bf16.msra.mxu0 %v859
    %1028 = vmatprep.subr.bf16.mxu0 %v862
    %1029 = vmatpush1.bf16.msra.mxu0 %v861
    %1030 = vmatprep.subr.bf16.mxu0 %v864
    %1031 = vmatpush1.bf16.msra.mxu0 %v863
    %1032 = vmatprep.subr.bf16.mxu0 %v866
    %1033 = vmatpush1.bf16.msra.mxu0 %v865
    %1034 = vmatprep.subr.bf16.mxu0 %v868
    %1035 = vmatpush1.bf16.msra.mxu0 %v867
    %1036 = vmatprep.subr.bf16.mxu0 %v870
    %1037 = vmatpush1.bf16.msra.mxu0 %v869
    %1038 = vmatprep.subr.bf16.mxu0 %v872
    %1039 = vmatpush1.bf16.msra.mxu0 %v871
    %1040 = vmatprep.subr.bf16.mxu0 %v874
    %1041 = vmatpush1.bf16.msra.mxu0 %v873
    %1042 = vmatprep.subr.bf16.mxu0 %v876
    %1043 = vmatpush1.bf16.msra.mxu0 %v875
    %1044 = vmatprep.subr.bf16.mxu0 %v878
    %1045 = vmatpush1.bf16.msra.mxu0 %v877
    %1046 = vmatprep.subr.bf16.mxu0 %v880
    %1047 = vmatpush1.bf16.msra.mxu0 %v879
    %1048 = vmatprep.subr.bf16.mxu0 %v882
    %1049 = vmatpush1.bf16.msra.mxu0 %v881
    %1050 = vmatprep.subr.bf16.mxu0 %v884
    %1051 = vmatpush1.bf16.msra.mxu0 %v883
    %1052 = vmatprep.mubr.bf16.mxu0 %v600
    %1053 = vmatmul.mubr.bf16.gmra.mrb[0].mxu0 %v599
    %v1054 = vpop.f32.mrb[0].mxu0
    %v1055 = vadd.f32 %v984, %v1054
    %v1056 = vpop.f32.mrb[0].mxu0
    %v1057 = vadd.f32 %v986, %v1056
    %v1058 = vpop.f32.mrb[0].mxu0
    %v1059 = vadd.f32 %v988, %v1058
    %v1060 = vpop.f32.mrb[0].mxu0
    %v1061 = vadd.f32 %v990, %v1060
    %1062 = vmatprep.mubr.bf16.mxu0 %v604
    %1063 = vmatmul.mubr.bf16.gmra.mrb[0].mxu0 %v603
    %v1064 = vpop.f32.mrb[0].mxu0
    %v1065 = vadd.f32 %v994, %v1064
    %v1066 = vpop.f32.mrb[0].mxu0
    %v1067 = vadd.f32 %v996, %v1066
    %v1068 = vpop.f32.mrb[0].mxu0
    %v1069 = vadd.f32 %v998, %v1068
    %v1070 = vpop.f32.mrb[0].mxu0
    %v1071 = vadd.f32 %v1000, %v1070
    %1072 = vmatprep.mubr.bf16.mxu0 %v608
    %1073 = vmatmul.mubr.bf16.gmra.mrb[0].mxu0 %v607
    %v1074 = vpop.f32.mrb[0].mxu0
    %v1075 = vadd.f32 %v1004, %v1074
    %v1076 = vpop.f32.mrb[0].mxu0
    %v1077 = vadd.f32 %v1006, %v1076
    %v1078 = vpop.f32.mrb[0].mxu0
    %v1079 = vadd.f32 %v1008, %v1078
    %v1080 = vpop.f32.mrb[0].mxu0
    %v1081 = vadd.f32 %v1010, %v1080
    %1082 = vmatprep.mubr.bf16.mxu0 %v612
    %1083 = vmatmul.mubr.bf16.gmra.mrb[0].mxu0 %v611
    %v1084 = vpop.f32.mrb[0].mxu0
    %v1085 = vadd.f32 %v1014, %v1084
    %v1086 = vpop.f32.mrb[0].mxu0
    %v1087 = vadd.f32 %v1016, %v1086
    %v1088 = vpop.f32.mrb[0].mxu0
    %v1089 = vpop.f32.mrb[0].mxu0
    %1090 = vdwg.mxu0
    %v1091 = vld [vmem:[#allocation2 + $0x4] sm:$0xff]
    %v1092 = vld [vmem:[#allocation2 + $0xc] sm:$0xf]
    %v1093 = vld [vmem:[#allocation2 + $0x14] sm:$0xff]
    %v1094 = vld [vmem:[#allocation2 + $0x1c] sm:$0xf]
    %v1095 = vld [vmem:[#allocation2 + $0x24] sm:$0xff]
    %v1096 = vld [vmem:[#allocation2 + $0x2c] sm:$0xf]
    %v1097 = vld [vmem:[#allocation2 + $0x34] sm:$0xff]
    %v1098 = vld [vmem:[#allocation2 + $0x3c] sm:$0xf]
    %v1099 = vld [vmem:[#allocation2 + $0x44] sm:$0xff]
    %v1100 = vld [vmem:[#allocation2 + $0x4c] sm:$0xf]
    %v1101 = vld [vmem:[#allocation2 + $0x54] sm:$0xff]
    %v1102 = vld [vmem:[#allocation2 + $0x5c] sm:$0xf]
    %v1103 = vld [vmem:[#allocation2 + $0x64] sm:$0xff]
    %v1104 = vld [vmem:[#allocation2 + $0x6c] sm:$0xf]
    %v1105 = vld [vmem:[%s0] sm:$0xff]
    %v1106 = vld [vmem:[%s0 + $0x8] sm:$0xff]
    %v1107 = vld [vmem:[%s0 + $0x10] sm:$0xff]
    %v1108 = vld [vmem:[%s0 + $0x18] sm:$0xff]
    %v1109 = vld [vmem:[%s0 + $0x20] sm:$0xff]
    %v1110 = vld [vmem:[%s0 + $0x28] sm:$0xff]
    %v1111 = vld [vmem:[%s0 + $0x30] sm:$0xff]
    %v1112 = vld [vmem:[%s0 + $0x38] sm:$0xff]
    %v1113 = vld [vmem:[%s0 + $0x40] sm:$0xff]
    %v1114 = vld [vmem:[%s0 + $0x48] sm:$0xff]
    %v1115 = vld [vmem:[%s0 + $0x50] sm:$0xff]
    %v1116 = vld [vmem:[%s0 + $0x58] sm:$0xff]
    %v1117 = vld [vmem:[%s0 + $0x60] sm:$0xff]
    %v1118 = vld [vmem:[%s0 + $0x68] sm:$0xff]
    %v1119 = vld [vmem:[%s0 + $0x70] sm:$0xff]
    %v1120 = vld [vmem:[%s0 + $0x78] sm:$0xff]
    %v1121 = vld [vmem:[%s0 + $0x80] sm:$0xff]
    %v1122 = vld [vmem:[%s0 + $0x88] sm:$0xff]
    %v1123 = vld [vmem:[%s0 + $0x90] sm:$0xff]
    %v1124 = vld [vmem:[%s0 + $0x98] sm:$0xff]
    %v1125 = vld [vmem:[%s0 + $0xa0] sm:$0xff]
    %v1126 = vld [vmem:[%s0 + $0xa8] sm:$0xff]
    %v1127 = vld [vmem:[%s0 + $0xb0] sm:$0xff]
    %v1128 = vld [vmem:[%s0 + $0xb8] sm:$0xff]
    %v1129 = vld [vmem:[%s0 + $0xc0] sm:$0xff]
    %v1130 = vld [vmem:[%s0 + $0xc8] sm:$0xff]
    %v1131 = vld [vmem:[%s0 + $0xd0] sm:$0xff]
    %v1132 = vld [vmem:[%s0 + $0xd8] sm:$0xff]
    %v1133 = vld [vmem:[%s0 + $0xe0] sm:$0xff]
    %v1134 = vld [vmem:[%s0 + $0xe8] sm:$0xff]
    %v1135 = vld [vmem:[%s0 + $0xf0] sm:$0xff]
    %v1136 = vld [vmem:[%s0 + $0xf8] sm:$0xff]
    %v1137 = vld [vmem:[%s0 + $0x100] sm:$0xff]
    %v1138 = vld [vmem:[%s0 + $0x108] sm:$0xff]
    %v1139 = vld [vmem:[%s0 + $0x110] sm:$0xff]
    %v1140 = vld [vmem:[%s0 + $0x118] sm:$0xff]
    %v1141 = vld [vmem:[%s0 + $0x120] sm:$0xff]
    %v1142 = vld [vmem:[%s0 + $0x128] sm:$0xff]
    %v1143 = vld [vmem:[%s0 + $0x130] sm:$0xff]
    %v1144 = vld [vmem:[%s0 + $0x138] sm:$0xff]
    %v1145 = vld [vmem:[%s0 + $0x140] sm:$0xff]
    %v1146 = vld [vmem:[%s0 + $0x148] sm:$0xff]
    %v1147 = vld [vmem:[%s0 + $0x150] sm:$0xff]
    %v1148 = vld [vmem:[%s0 + $0x158] sm:$0xff]
    %v1149 = vld [vmem:[%s0 + $0x160] sm:$0xff]
    %v1150 = vld [vmem:[%s0 + $0x168] sm:$0xff]
    %v1151 = vld [vmem:[%s0 + $0x170] sm:$0xff]
    %v1152 = vld [vmem:[%s0 + $0x178] sm:$0xff]
    %v1153 = vld [vmem:[#allocation2 + $0x10] sm:$0xff]
    %v1154 = vld [vmem:[#allocation2 + $0x20] sm:$0xff]
    %v1155 = vld [vmem:[#allocation2 + $0x30] sm:$0xff]
    %v1156 = vld [vmem:[#allocation2 + $0x40] sm:$0xff]
    %v1157 = vld [vmem:[#allocation2 + $0x50] sm:$0xff]
    %v1158 = vld [vmem:[#allocation2 + $0x60] sm:$0xff]
    %v1159 = vld [vmem:[#allocation2 + $0x70] sm:$0xff]
    %v1160 = vld [vmem:[%s0 + $0x180] sm:$0xff]
    %v1161 = vld [vmem:[%s0 + $0x188] sm:$0xff]
    %v1162 = vld [vmem:[%s0 + $0x190] sm:$0xff]
    %v1163 = vld [vmem:[%s0 + $0x198] sm:$0xff]
    %v1164 = vld [vmem:[%s0 + $0x1a0] sm:$0xff]
    %v1165 = vld [vmem:[%s0 + $0x1a8] sm:$0xff]
    %v1166 = vld [vmem:[%s0 + $0x1b0] sm:$0xff]
    %v1167 = vld [vmem:[%s0 + $0x1b8] sm:$0xff]
    %v1168 = vld [vmem:[%s0 + $0x1c0] sm:$0xff]
    %v1169 = vld [vmem:[%s0 + $0x1c8] sm:$0xff]
    %v1170 = vld [vmem:[%s0 + $0x1d0] sm:$0xff]
    %v1171 = vld [vmem:[%s0 + $0x1d8] sm:$0xff]
    %v1172 = vld [vmem:[%s0 + $0x1e0] sm:$0xff]
    %v1173 = vld [vmem:[%s0 + $0x1e8] sm:$0xff]
    %v1174 = vld [vmem:[%s0 + $0x1f0] sm:$0xff]
    %v1175 = vld [vmem:[%s0 + $0x1f8] sm:$0xff]
    %v1183 = vunpack.c.l.b16 %v1153
    %v1184 = vunpack.c.h.b16 %v1153
    %v1185 = vunpack.c.l.b16 %v1154
    %v1186 = vunpack.c.h.b16 %v1154
    %v1187 = vunpack.c.l.b16 %v1155
    %v1188 = vunpack.c.h.b16 %v1155
    %v1189 = vunpack.c.l.b16 %v1156
    %v1190 = vunpack.c.h.b16 %v1156
    %v1191 = vunpack.c.l.b16 %v1157
    %v1192 = vunpack.c.h.b16 %v1157
    %v1193 = vunpack.c.l.b16 %v1158
    %v1194 = vunpack.c.h.b16 %v1158
    %v1195 = vunpack.c.l.b16 %v1159
    %v1196 = vunpack.c.h.b16 %v1159
    %v1197 = vpack.c.b16 %v1185, %v1183
    %v1198 = vpack.c.b16 %v1186, %v1184
    %v1199 = vpack.c.b16 %v1189, %v1187
    %v1200 = vpack.c.b16 %v1190, %v1188
    %v1201 = vpack.c.b16 %v1193, %v1191
    %v1202 = vpack.c.b16 %v1194, %v1192
    %v1203 = vpack.c.b16 %v1195, %v1195
    %v1204 = vpack.c.b16 %v1196, %v1196
    %v1229 = vunpack.c.l.b16 %v1160
    %v1230 = vunpack.c.h.b16 %v1160
    %v1231 = vunpack.c.l.b16 %v1161
    %v1232 = vunpack.c.h.b16 %v1161
    %v1233 = vunpack.c.l.b16 %v1162
    %v1234 = vunpack.c.h.b16 %v1162
    %v1235 = vunpack.c.l.b16 %v1163
    %v1236 = vunpack.c.h.b16 %v1163
    %v1237 = vunpack.c.l.b16 %v1164
    %v1238 = vunpack.c.h.b16 %v1164
    %v1239 = vunpack.c.l.b16 %v1165
    %v1240 = vunpack.c.h.b16 %v1165
    %v1241 = vunpack.c.l.b16 %v1166
    %v1242 = vunpack.c.h.b16 %v1166
    %v1243 = vunpack.c.l.b16 %v1167
    %v1244 = vunpack.c.h.b16 %v1167
    %v1245 = vunpack.c.l.b16 %v1168
    %v1246 = vunpack.c.h.b16 %v1168
    %v1247 = vunpack.c.l.b16 %v1169
    %v1248 = vunpack.c.h.b16 %v1169
    %v1249 = vunpack.c.l.b16 %v1170
    %v1250 = vunpack.c.h.b16 %v1170
    %v1251 = vunpack.c.l.b16 %v1171
    %v1252 = vunpack.c.h.b16 %v1171
    %v1253 = vunpack.c.l.b16 %v1172
    %v1254 = vunpack.c.h.b16 %v1172
    %v1255 = vunpack.c.l.b16 %v1173
    %v1256 = vunpack.c.h.b16 %v1173
    %v1257 = vunpack.c.l.b16 %v1174
    %v1258 = vunpack.c.h.b16 %v1174
    %v1259 = vunpack.c.l.b16 %v1175
    %v1260 = vunpack.c.h.b16 %v1175
    %v1261 = vpack.c.b16 %v1231, %v1229
    %v1262 = vpack.c.b16 %v1232, %v1230
    %v1263 = vpack.c.b16 %v1235, %v1233
    %v1264 = vpack.c.b16 %v1236, %v1234
    %v1265 = vpack.c.b16 %v1239, %v1237
    %v1266 = vpack.c.b16 %v1240, %v1238
    %v1267 = vpack.c.b16 %v1243, %v1241
    %v1268 = vpack.c.b16 %v1244, %v1242
    %v1269 = vpack.c.b16 %v1247, %v1245
    %v1270 = vpack.c.b16 %v1248, %v1246
    %v1271 = vpack.c.b16 %v1251, %v1249
    %v1272 = vpack.c.b16 %v1252, %v1250
    %v1273 = vpack.c.b16 %v1255, %v1253
    %v1274 = vpack.c.b16 %v1256, %v1254
    %v1275 = vpack.c.b16 %v1259, %v1257
    %v1276 = vpack.c.b16 %v1260, %v1258
    %1293 = vmatprep.subr.bf16.mxu0 %v1262
    %1294 = vmatpush1.bf16.msra.mxu0 %v1261
    %1295 = vmatprep.subr.bf16.mxu0 %v1264
    %1296 = vmatpush1.bf16.msra.mxu0 %v1263
    %1297 = vmatprep.subr.bf16.mxu0 %v1266
    %1298 = vmatpush1.bf16.msra.mxu0 %v1265
    %1299 = vmatprep.subr.bf16.mxu0 %v1268
    %1300 = vmatpush1.bf16.msra.mxu0 %v1267
    %1301 = vmatprep.subr.bf16.mxu0 %v1270
    %1302 = vmatpush1.bf16.msra.mxu0 %v1269
    %1303 = vmatprep.subr.bf16.mxu0 %v1272
    %1304 = vmatpush1.bf16.msra.mxu0 %v1271
    %1305 = vmatprep.subr.bf16.mxu0 %v1274
    %1306 = vmatpush1.bf16.msra.mxu0 %v1273
    %1307 = vmatprep.subr.bf16.mxu0 %v1276
    %1308 = vmatpush1.bf16.msra.mxu0 %v1275
    %1309 = vmatprep.subr.bf16.mxu0 %v453
    %1310 = vmatpush1.bf16.msra.mxu0 %v452
    %1311 = vmatprep.subr.bf16.mxu0 %v455
    %1312 = vmatpush1.bf16.msra.mxu0 %v454
    %1313 = vmatprep.subr.bf16.mxu0 %v457
    %1314 = vmatpush1.bf16.msra.mxu0 %v456
    %1315 = vmatprep.subr.bf16.mxu0 %v459
    %1316 = vmatpush1.bf16.msra.mxu0 %v458
    %1317 = vmatprep.subr.bf16.mxu0 %v461
    %1318 = vmatpush1.bf16.msra.mxu0 %v460
    %1319 = vmatprep.subr.bf16.mxu0 %v463
    %1320 = vmatpush1.bf16.msra.mxu0 %v462
    %1321 = vmatprep.subr.bf16.mxu0 %v465
    %1322 = vmatpush1.bf16.msra.mxu0 %v464
    %1323 = vmatprep.subr.bf16.mxu0 %v467
    %1324 = vmatpush1.bf16.msra.mxu0 %v466
    %1325 = vmatprep.mubr.bf16.mxu0 %v1198
    %1326 = vmatmul.mubr.bf16.gmra.mrb[0].mxu0 %v1197
    %v1327 = vpop.f32.mrb[0].mxu0
    %v1328 = vadd.f32 0.0, %v1327
    %v1329 = vpop.f32.mrb[0].mxu0
    %v1330 = vadd.f32 0.0, %v1329
    %v1331 = vpop.f32.mrb[0].mxu0
    %v1332 = vadd.f32 0.0, %v1331
    %v1333 = vpop.f32.mrb[0].mxu0
    %v1334 = vadd.f32 0.0, %v1333
    %1335 = vmatprep.mubr.bf16.mxu0 %v1200
    %1336 = vmatmul.mubr.bf16.gmra.mrb[0].mxu0 %v1199
    %v1337 = vpop.f32.mrb[0].mxu0
    %v1338 = vadd.f32 0.0, %v1337
    %v1339 = vpop.f32.mrb[0].mxu0
    %v1340 = vadd.f32 0.0, %v1339
    %v1341 = vpop.f32.mrb[0].mxu0
    %v1342 = vadd.f32 0.0, %v1341
    %v1343 = vpop.f32.mrb[0].mxu0
    %v1344 = vadd.f32 0.0, %v1343
    %1345 = vmatprep.mubr.bf16.mxu0 %v1202
    %1346 = vmatmul.mubr.bf16.gmra.mrb[0].mxu0 %v1201
    %v1347 = vpop.f32.mrb[0].mxu0
    %v1348 = vadd.f32 0.0, %v1347
    %v1349 = vpop.f32.mrb[0].mxu0
    %v1350 = vadd.f32 0.0, %v1349
    %v1351 = vpop.f32.mrb[0].mxu0
    %v1352 = vadd.f32 0.0, %v1351
    %v1353 = vpop.f32.mrb[0].mxu0
    %v1354 = vadd.f32 0.0, %v1353
    %1355 = vmatprep.mubr.bf16.mxu0 %v1204
    %1356 = vmatmul.mubr.bf16.gmra.mrb[0].mxu0 %v1203
    %v1357 = vpop.f32.mrb[0].mxu0
    %v1358 = vadd.f32 0.0, %v1357
    %v1359 = vpop.f32.mrb[0].mxu0
    %v1360 = vadd.f32 0.0, %v1359
    %v1361 = vpop.f32.mrb[0].mxu0
    %v1362 = vpop.f32.mrb[0].mxu0
    %1363 = vdwg.mxu0
    %v1378 = vunpack.c.l.b16 %v1091
    %v1379 = vunpack.c.h.b16 %v1091
    %v1380 = vunpack.c.l.b16 %v1092
    %v1381 = vunpack.c.l.b16 %v1093
    %v1382 = vunpack.c.h.b16 %v1093
    %v1383 = vunpack.c.l.b16 %v1094
    %v1384 = vunpack.c.l.b16 %v1095
    %v1385 = vunpack.c.h.b16 %v1095
    %v1386 = vunpack.c.l.b16 %v1096
    %v1387 = vunpack.c.l.b16 %v1097
    %v1388 = vunpack.c.h.b16 %v1097
    %v1389 = vunpack.c.l.b16 %v1098
    %v1390 = vunpack.c.l.b16 %v1099
    %v1391 = vunpack.c.h.b16 %v1099
    %v1392 = vunpack.c.l.b16 %v1100
    %v1393 = vunpack.c.l.b16 %v1101
    %v1394 = vunpack.c.h.b16 %v1101
    %v1395 = vunpack.c.l.b16 %v1102
    %v1396 = vunpack.c.l.b16 %v1103
    %v1397 = vunpack.c.h.b16 %v1103
    %v1398 = vunpack.c.l.b16 %v1104
    %v1399 = vpack.c.b16 %v1381, %v1378
    %v1400 = vpack.c.b16 %v1382, %v1379
    %v1401 = vpack.c.b16 %v1383, %v1380
    %v1402 = vpack.c.b16 %v1387, %v1384
    %v1403 = vpack.c.b16 %v1388, %v1385
    %v1404 = vpack.c.b16 %v1389, %v1386
    %v1405 = vpack.c.b16 %v1393, %v1390
    %v1406 = vpack.c.b16 %v1394, %v1391
    %v1407 = vpack.c.b16 %v1395, %v1392
    %v1408 = vpack.c.b16 %v1396, %v1396
    %v1409 = vpack.c.b16 %v1397, %v1397
    %v1410 = vpack.c.b16 %v1398, %v1398
    %v1471 = vunpack.c.l.b16 %v1105
    %v1472 = vunpack.c.h.b16 %v1105
    %v1473 = vunpack.c.l.b16 %v1106
    %v1474 = vunpack.c.h.b16 %v1106
    %v1475 = vunpack.c.l.b16 %v1107
    %v1476 = vunpack.c.h.b16 %v1107
    %v1477 = vunpack.c.l.b16 %v1108
    %v1478 = vunpack.c.h.b16 %v1108
    %v1479 = vunpack.c.l.b16 %v1109
    %v1480 = vunpack.c.h.b16 %v1109
    %v1481 = vunpack.c.l.b16 %v1110
    %v1482 = vunpack.c.h.b16 %v1110
    %v1483 = vunpack.c.l.b16 %v1111
    %v1484 = vunpack.c.h.b16 %v1111
    %v1485 = vunpack.c.l.b16 %v1112
    %v1486 = vunpack.c.h.b16 %v1112
    %v1487 = vunpack.c.l.b16 %v1113
    %v1488 = vunpack.c.h.b16 %v1113
    %v1489 = vunpack.c.l.b16 %v1114
    %v1490 = vunpack.c.h.b16 %v1114
    %v1491 = vunpack.c.l.b16 %v1115
    %v1492 = vunpack.c.h.b16 %v1115
    %v1493 = vunpack.c.l.b16 %v1116
    %v1494 = vunpack.c.h.b16 %v1116
    %v1495 = vunpack.c.l.b16 %v1117
    %v1496 = vunpack.c.h.b16 %v1117
    %v1497 = vunpack.c.l.b16 %v1118
    %v1498 = vunpack.c.h.b16 %v1118
    %v1499 = vunpack.c.l.b16 %v1119
    %v1500 = vunpack.c.h.b16 %v1119
    %v1501 = vunpack.c.l.b16 %v1120
    %v1502 = vunpack.c.h.b16 %v1120
    %v1503 = vunpack.c.l.b16 %v1121
    %v1504 = vunpack.c.h.b16 %v1121
    %v1505 = vunpack.c.l.b16 %v1122
    %v1506 = vunpack.c.h.b16 %v1122
    %v1507 = vunpack.c.l.b16 %v1123
    %v1508 = vunpack.c.h.b16 %v1123
    %v1509 = vunpack.c.l.b16 %v1124
    %v1510 = vunpack.c.h.b16 %v1124
    %v1511 = vunpack.c.l.b16 %v1125
    %v1512 = vunpack.c.h.b16 %v1125
    %v1513 = vunpack.c.l.b16 %v1126
    %v1514 = vunpack.c.h.b16 %v1126
    %v1515 = vunpack.c.l.b16 %v1127
    %v1516 = vunpack.c.h.b16 %v1127
    %v1517 = vunpack.c.l.b16 %v1128
    %v1518 = vunpack.c.h.b16 %v1128
    %v1519 = vunpack.c.l.b16 %v1129
    %v1520 = vunpack.c.h.b16 %v1129
    %v1521 = vunpack.c.l.b16 %v1130
    %v1522 = vunpack.c.h.b16 %v1130
    %v1523 = vunpack.c.l.b16 %v1131
    %v1524 = vunpack.c.h.b16 %v1131
    %v1525 = vunpack.c.l.b16 %v1132
    %v1526 = vunpack.c.h.b16 %v1132
    %v1527 = vunpack.c.l.b16 %v1133
    %v1528 = vunpack.c.h.b16 %v1133
    %v1529 = vunpack.c.l.b16 %v1134
    %v1530 = vunpack.c.h.b16 %v1134
    %v1531 = vunpack.c.l.b16 %v1135
    %v1532 = vunpack.c.h.b16 %v1135
    %v1533 = vunpack.c.l.b16 %v1136
    %v1534 = vunpack.c.h.b16 %v1136
    %v1535 = vunpack.c.l.b16 %v1137
    %v1536 = vunpack.c.h.b16 %v1137
    %v1537 = vunpack.c.l.b16 %v1138
    %v1538 = vunpack.c.h.b16 %v1138
    %v1539 = vunpack.c.l.b16 %v1139
    %v1540 = vunpack.c.h.b16 %v1139
    %v1541 = vunpack.c.l.b16 %v1140
    %v1542 = vunpack.c.h.b16 %v1140
    %v1543 = vunpack.c.l.b16 %v1141
    %v1544 = vunpack.c.h.b16 %v1141
    %v1545 = vunpack.c.l.b16 %v1142
    %v1546 = vunpack.c.h.b16 %v1142
    %v1547 = vunpack.c.l.b16 %v1143
    %v1548 = vunpack.c.h.b16 %v1143
    %v1549 = vunpack.c.l.b16 %v1144
    %v1550 = vunpack.c.h.b16 %v1144
    %v1551 = vunpack.c.l.b16 %v1145
    %v1552 = vunpack.c.h.b16 %v1145
    %v1553 = vunpack.c.l.b16 %v1146
    %v1554 = vunpack.c.h.b16 %v1146
    %v1555 = vunpack.c.l.b16 %v1147
    %v1556 = vunpack.c.h.b16 %v1147
    %v1557 = vunpack.c.l.b16 %v1148
    %v1558 = vunpack.c.h.b16 %v1148
    %v1559 = vunpack.c.l.b16 %v1149
    %v1560 = vunpack.c.h.b16 %v1149
    %v1561 = vunpack.c.l.b16 %v1150
    %v1562 = vunpack.c.h.b16 %v1150
    %v1563 = vunpack.c.l.b16 %v1151
    %v1564 = vunpack.c.h.b16 %v1151
    %v1565 = vunpack.c.l.b16 %v1152
    %v1566 = vunpack.c.h.b16 %v1152
    %v1567 = vpack.c.b16 %v1473, %v1471
    %v1568 = vpack.c.b16 %v1474, %v1472
    %v1569 = vpack.c.b16 %v1477, %v1475
    %v1570 = vpack.c.b16 %v1478, %v1476
    %v1571 = vpack.c.b16 %v1481, %v1479
    %v1572 = vpack.c.b16 %v1482, %v1480
    %v1573 = vpack.c.b16 %v1485, %v1483
    %v1574 = vpack.c.b16 %v1486, %v1484
    %v1575 = vpack.c.b16 %v1489, %v1487
    %v1576 = vpack.c.b16 %v1490, %v1488
    %v1577 = vpack.c.b16 %v1493, %v1491
    %v1578 = vpack.c.b16 %v1494, %v1492
    %v1579 = vpack.c.b16 %v1497, %v1495
    %v1580 = vpack.c.b16 %v1498, %v1496
    %v1581 = vpack.c.b16 %v1501, %v1499
    %v1582 = vpack.c.b16 %v1502, %v1500
    %v1583 = vpack.c.b16 %v1505, %v1503
    %v1584 = vpack.c.b16 %v1506, %v1504
    %v1585 = vpack.c.b16 %v1509, %v1507
    %v1586 = vpack.c.b16 %v1510, %v1508
    %v1587 = vpack.c.b16 %v1513, %v1511
    %v1588 = vpack.c.b16 %v1514, %v1512
    %v1589 = vpack.c.b16 %v1517, %v1515
    %v1590 = vpack.c.b16 %v1518, %v1516
    %v1591 = vpack.c.b16 %v1521, %v1519
    %v1592 = vpack.c.b16 %v1522, %v1520
    %v1593 = vpack.c.b16 %v1525, %v1523
    %v1594 = vpack.c.b16 %v1526, %v1524
    %v1595 = vpack.c.b16 %v1529, %v1527
    %v1596 = vpack.c.b16 %v1530, %v1528
    %v1597 = vpack.c.b16 %v1533, %v1531
    %v1598 = vpack.c.b16 %v1534, %v1532
    %v1599 = vpack.c.b16 %v1537, %v1535
    %v1600 = vpack.c.b16 %v1538, %v1536
    %v1601 = vpack.c.b16 %v1541, %v1539
    %v1602 = vpack.c.b16 %v1542, %v1540
    %v1603 = vpack.c.b16 %v1545, %v1543
    %v1604 = vpack.c.b16 %v1546, %v1544
    %v1605 = vpack.c.b16 %v1549, %v1547
    %v1606 = vpack.c.b16 %v1550, %v1548
    %v1607 = vpack.c.b16 %v1553, %v1551
    %v1608 = vpack.c.b16 %v1554, %v1552
    %v1609 = vpack.c.b16 %v1557, %v1555
    %v1610 = vpack.c.b16 %v1558, %v1556
    %v1611 = vpack.c.b16 %v1561, %v1559
    %v1612 = vpack.c.b16 %v1562, %v1560
    %v1613 = vpack.c.b16 %v1565, %v1563
    %v1614 = vpack.c.b16 %v1566, %v1564
    %1663 = vmatprep.subr.bf16.mxu0 %v1568
    %1664 = vmatpush1.bf16.msra.mxu0 %v1567
    %1665 = vmatprep.subr.bf16.mxu0 %v1570
    %1666 = vmatpush1.bf16.msra.mxu0 %v1569
    %1667 = vmatprep.subr.bf16.mxu0 %v1572
    %1668 = vmatpush1.bf16.msra.mxu0 %v1571
    %1669 = vmatprep.subr.bf16.mxu0 %v1574
    %1670 = vmatpush1.bf16.msra.mxu0 %v1573
    %1671 = vmatprep.subr.bf16.mxu0 %v1576
    %1672 = vmatpush1.bf16.msra.mxu0 %v1575
    %1673 = vmatprep.subr.bf16.mxu0 %v1578
    %1674 = vmatpush1.bf16.msra.mxu0 %v1577
    %1675 = vmatprep.subr.bf16.mxu0 %v1580
    %1676 = vmatpush1.bf16.msra.mxu0 %v1579
    %1677 = vmatprep.subr.bf16.mxu0 %v1582
    %1678 = vmatpush1.bf16.msra.mxu0 %v1581
    %1679 = vmatprep.subr.bf16.mxu0 %v1584
    %1680 = vmatpush1.bf16.msra.mxu0 %v1583
    %1681 = vmatprep.subr.bf16.mxu0 %v1586
    %1682 = vmatpush1.bf16.msra.mxu0 %v1585
    %1683 = vmatprep.subr.bf16.mxu0 %v1588
    %1684 = vmatpush1.bf16.msra.mxu0 %v1587
    %1685 = vmatprep.subr.bf16.mxu0 %v1590
    %1686 = vmatpush1.bf16.msra.mxu0 %v1589
    %1687 = vmatprep.subr.bf16.mxu0 %v1592
    %1688 = vmatpush1.bf16.msra.mxu0 %v1591
    %1689 = vmatprep.subr.bf16.mxu0 %v1594
    %1690 = vmatpush1.bf16.msra.mxu0 %v1593
    %1691 = vmatprep.subr.bf16.mxu0 %v1596
    %1692 = vmatpush1.bf16.msra.mxu0 %v1595
    %1693 = vmatprep.subr.bf16.mxu0 %v1598
    %1694 = vmatpush1.bf16.msra.mxu0 %v1597
    %1695 = vmatprep.mubr.bf16.mxu0 %v1400
    %1696 = vmatmul.mubr.bf16.gmra.mrb[0].mxu0 %v1399
    %v1697 = vpop.f32.mrb[0].mxu0
    %v1698 = vadd.f32 %v1328, %v1697
    %v1699 = vpop.f32.mrb[0].mxu0
    %v1700 = vadd.f32 %v1330, %v1699
    %v1701 = vpop.f32.mrb[0].mxu0
    %v1702 = vadd.f32 %v1332, %v1701
    %v1703 = vpop.f32.mrb[0].mxu0
    %v1704 = vadd.f32 %v1334, %v1703
    %1705 = vmatprep.mubr.bf16.mxu0 %v1403
    %1706 = vmatmul.mubr.bf16.gmra.mrb[0].mxu0 %v1402
    %v1707 = vpop.f32.mrb[0].mxu0
    %v1708 = vadd.f32 %v1338, %v1707
    %v1709 = vpop.f32.mrb[0].mxu0
    %v1710 = vadd.f32 %v1340, %v1709
    %v1711 = vpop.f32.mrb[0].mxu0
    %v1712 = vadd.f32 %v1342, %v1711
    %v1713 = vpop.f32.mrb[0].mxu0
    %v1714 = vadd.f32 %v1344, %v1713
    %1715 = vmatprep.mubr.bf16.mxu0 %v1406
    %1716 = vmatmul.mubr.bf16.gmra.mrb[0].mxu0 %v1405
    %v1717 = vpop.f32.mrb[0].mxu0
    %v1718 = vadd.f32 %v1348, %v1717
    %v1719 = vpop.f32.mrb[0].mxu0
    %v1720 = vadd.f32 %v1350, %v1719
    %v1721 = vpop.f32.mrb[0].mxu0
    %v1722 = vadd.f32 %v1352, %v1721
    %v1723 = vpop.f32.mrb[0].mxu0
    %v1724 = vadd.f32 %v1354, %v1723
    %1725 = vmatprep.mubr.bf16.mxu0 %v1409
    %1726 = vmatmul.mubr.bf16.gmra.mrb[0].mxu0 %v1408
    %v1727 = vpop.f32.mrb[0].mxu0
    %v1728 = vadd.f32 %v1358, %v1727
    %v1729 = vpop.f32.mrb[0].mxu0
    %v1730 = vadd.f32 %v1360, %v1729
    %v1731 = vpop.f32.mrb[0].mxu0
    %v1732 = vpop.f32.mrb[0].mxu0
    %1733 = vdwg.mxu0
    %1734 = vmatprep.subr.bf16.mxu0 %v1600
    %1735 = vmatpush1.bf16.msra.mxu0 %v1599
    %1736 = vmatprep.subr.bf16.mxu0 %v1602
    %1737 = vmatpush1.bf16.msra.mxu0 %v1601
    %1738 = vmatprep.subr.bf16.mxu0 %v1604
    %1739 = vmatpush1.bf16.msra.mxu0 %v1603
    %1740 = vmatprep.subr.bf16.mxu0 %v1606
    %1741 = vmatpush1.bf16.msra.mxu0 %v1605
    %1742 = vmatprep.subr.bf16.mxu0 %v1608
    %1743 = vmatpush1.bf16.msra.mxu0 %v1607
    %1744 = vmatprep.subr.bf16.mxu0 %v1610
    %1745 = vmatpush1.bf16.msra.mxu0 %v1609
    %1746 = vmatprep.subr.bf16.mxu0 %v1612
    %1747 = vmatpush1.bf16.msra.mxu0 %v1611
    %1748 = vmatprep.subr.bf16.mxu0 %v1614
    %1749 = vmatpush1.bf16.msra.mxu0 %v1613
    %1750 = vmatprep.subr.bf16.mxu0 0
    %1751 = vmatpush1.bf16.msra.mxu0 0
    %1752 = vmatprep.subr.bf16.mxu0 0
    %1753 = vmatpush1.bf16.msra.mxu0 0
    %1754 = vmatprep.subr.bf16.mxu0 0
    %1755 = vmatpush1.bf16.msra.mxu0 0
    %1756 = vmatprep.subr.bf16.mxu0 0
    %1757 = vmatpush1.bf16.msra.mxu0 0
    %1758 = vmatprep.subr.bf16.mxu0 0
    %1759 = vmatpush1.bf16.msra.mxu0 0
    %1760 = vmatprep.subr.bf16.mxu0 0
    %1761 = vmatpush1.bf16.msra.mxu0 0
    %1762 = vmatprep.subr.bf16.mxu0 0
    %1763 = vmatpush1.bf16.msra.mxu0 0
    %1764 = vmatprep.subr.bf16.mxu0 0
    %1765 = vmatpush1.bf16.msra.mxu0 0
    %1766 = vmatprep.mubr.bf16.mxu0 0
    %1767 = vmatmul.mubr.bf16.gmra.mrb[0].mxu0 %v1401
    %v1768 = vpop.f32.mrb[0].mxu0
    %v1769 = vadd.f32 %v1698, %v1768
    %v1770 = vpop.f32.mrb[0].mxu0
    %v1771 = vadd.f32 %v1700, %v1770
    %v1772 = vpop.f32.mrb[0].mxu0
    %v1773 = vadd.f32 %v1702, %v1772
    %v1774 = vpop.f32.mrb[0].mxu0
    %v1775 = vadd.f32 %v1704, %v1774
    %1776 = vmatprep.mubr.bf16.mxu0 0
    %1777 = vmatmul.mubr.bf16.gmra.mrb[0].mxu0 %v1404
    %v1778 = vpop.f32.mrb[0].mxu0
    %v1779 = vadd.f32 %v1708, %v1778
    %v1780 = vpop.f32.mrb[0].mxu0
    %v1781 = vadd.f32 %v1710, %v1780
    %v1782 = vpop.f32.mrb[0].mxu0
    %v1783 = vadd.f32 %v1712, %v1782
    %v1784 = vpop.f32.mrb[0].mxu0
    %v1785 = vadd.f32 %v1714, %v1784
    %1786 = vmatprep.mubr.bf16.mxu0 0
    %1787 = vmatmul.mubr.bf16.gmra.mrb[0].mxu0 %v1407
    %v1788 = vpop.f32.mrb[0].mxu0
    %v1789 = vadd.f32 %v1718, %v1788
    %v1790 = vpop.f32.mrb[0].mxu0
    %v1791 = vadd.f32 %v1720, %v1790
    %v1792 = vpop.f32.mrb[0].mxu0
    %v1793 = vadd.f32 %v1722, %v1792
    %v1794 = vpop.f32.mrb[0].mxu0
    %v1795 = vadd.f32 %v1724, %v1794
    %1796 = vmatprep.mubr.bf16.mxu0 0
    %1797 = vmatmul.mubr.bf16.gmra.mrb[0].mxu0 %v1410
    %v1798 = vpop.f32.mrb[0].mxu0
    %v1799 = vadd.f32 %v1728, %v1798
    %v1800 = vpop.f32.mrb[0].mxu0
    %v1801 = vadd.f32 %v1730, %v1800
    %v1802 = vpop.f32.mrb[0].mxu0
    %v1803 = vpop.f32.mrb[0].mxu0
    %1804 = vdwg.mxu0
    %v1805 = vld [vmem:[%s0] sm:$0xff]
    %v1806 = vld [vmem:[%s0 + $0x8] sm:$0xff]
    %v1807 = vld [vmem:[%s0 + $0x10] sm:$0xff]
    %v1808 = vld [vmem:[%s0 + $0x18] sm:$0xff]
    %v1809 = vld [vmem:[%s0 + $0x20] sm:$0xff]
    %v1810 = vld [vmem:[%s0 + $0x28] sm:$0xff]
    %v1811 = vld [vmem:[%s0 + $0x30] sm:$0xff]
    %v1812 = vld [vmem:[%s0 + $0x38] sm:$0xff]
    %v1813 = vld [vmem:[%s0 + $0x40] sm:$0xff]
    %v1814 = vld [vmem:[%s0 + $0x48] sm:$0xff]
    %v1815 = vld [vmem:[%s0 + $0x50] sm:$0xff]
    %v1816 = vld [vmem:[%s0 + $0x58] sm:$0xff]
    %v1817 = vld [vmem:[%s0 + $0x60] sm:$0xff]
    %v1818 = vld [vmem:[%s0 + $0x68] sm:$0xff]
    %v1819 = vld [vmem:[%s0 + $0x70] sm:$0xff]
    %v1820 = vld [vmem:[%s0 + $0x78] sm:$0xff]
    %v1821 = vld [vmem:[%s0 + $0x80] sm:$0xff]
    %v1822 = vld [vmem:[%s0 + $0x88] sm:$0xff]
    %v1823 = vld [vmem:[%s0 + $0x90] sm:$0xff]
    %v1824 = vld [vmem:[%s0 + $0x98] sm:$0xff]
    %v1825 = vld [vmem:[%s0 + $0xa0] sm:$0xff]
    %v1826 = vld [vmem:[%s0 + $0xa8] sm:$0xff]
    %v1827 = vld [vmem:[%s0 + $0xb0] sm:$0xff]
    %v1828 = vld [vmem:[%s0 + $0xb8] sm:$0xff]
    %v1829 = vld [vmem:[%s0 + $0xc0] sm:$0xff]
    %v1830 = vld [vmem:[%s0 + $0xc8] sm:$0xff]
    %v1831 = vld [vmem:[%s0 + $0xd0] sm:$0xff]
    %v1832 = vld [vmem:[%s0 + $0xd8] sm:$0xff]
    %v1833 = vld [vmem:[%s0 + $0xe0] sm:$0xff]
    %v1834 = vld [vmem:[%s0 + $0xe8] sm:$0xff]
    %v1835 = vld [vmem:[%s0 + $0xf0] sm:$0xff]
    %v1836 = vld [vmem:[%s0 + $0xf8] sm:$0xff]
    %v1837 = vld [vmem:[#allocation2 + $0x10] sm:$0xff]
    %v1838 = vld [vmem:[#allocation2 + $0x18] sm:$0xf]
    %v1839 = vld [vmem:[#allocation2 + $0x20] sm:$0xff]
    %v1840 = vld [vmem:[#allocation2 + $0x28] sm:$0xf]
    %v1841 = vld [vmem:[#allocation2 + $0x30] sm:$0xff]
    %v1842 = vld [vmem:[#allocation2 + $0x38] sm:$0xf]
    %v1843 = vld [vmem:[#allocation2 + $0x40] sm:$0xff]
    %v1844 = vld [vmem:[#allocation2 + $0x48] sm:$0xf]
    %v1845 = vld [vmem:[#allocation2 + $0x50] sm:$0xff]
    %v1846 = vld [vmem:[#allocation2 + $0x58] sm:$0xf]
    %v1847 = vld [vmem:[#allocation2 + $0x60] sm:$0xff]
    %v1848 = vld [vmem:[#allocation2 + $0x68] sm:$0xf]
    %v1849 = vld [vmem:[#allocation2 + $0x70] sm:$0xff]
    %v1850 = vld [vmem:[#allocation2 + $0x78] sm:$0xf]
    %v1851 = vld [vmem:[%s0 + $0x100] sm:$0xff]
    %v1852 = vld [vmem:[%s0 + $0x108] sm:$0xff]
    %v1853 = vld [vmem:[%s0 + $0x110] sm:$0xff]
    %v1854 = vld [vmem:[%s0 + $0x118] sm:$0xff]
    %v1855 = vld [vmem:[%s0 + $0x120] sm:$0xff]
    %v1856 = vld [vmem:[%s0 + $0x128] sm:$0xff]
    %v1857 = vld [vmem:[%s0 + $0x130] sm:$0xff]
    %v1858 = vld [vmem:[%s0 + $0x138] sm:$0xff]
    %v1859 = vld [vmem:[%s0 + $0x140] sm:$0xff]
    %v1860 = vld [vmem:[%s0 + $0x148] sm:$0xff]
    %v1861 = vld [vmem:[%s0 + $0x150] sm:$0xff]
    %v1862 = vld [vmem:[%s0 + $0x158] sm:$0xff]
    %v1863 = vld [vmem:[%s0 + $0x160] sm:$0xff]
    %v1864 = vld [vmem:[%s0 + $0x168] sm:$0xff]
    %v1865 = vld [vmem:[%s0 + $0x170] sm:$0xff]
    %v1866 = vld [vmem:[%s0 + $0x178] sm:$0xff]
    %v1881 = vunpack.c.l.b16 %v1837
    %v1882 = vunpack.c.h.b16 %v1837
    %v1883 = vunpack.c.l.b16 %v1838
    %v1884 = vunpack.c.l.b16 %v1839
    %v1885 = vunpack.c.h.b16 %v1839
    %v1886 = vunpack.c.l.b16 %v1840
    %v1887 = vunpack.c.l.b16 %v1841
    %v1888 = vunpack.c.h.b16 %v1841
    %v1889 = vunpack.c.l.b16 %v1842
    %v1890 = vunpack.c.l.b16 %v1843
    %v1891 = vunpack.c.h.b16 %v1843
    %v1892 = vunpack.c.l.b16 %v1844
    %v1893 = vunpack.c.l.b16 %v1845
    %v1894 = vunpack.c.h.b16 %v1845
    %v1895 = vunpack.c.l.b16 %v1846
    %v1896 = vunpack.c.l.b16 %v1847
    %v1897 = vunpack.c.h.b16 %v1847
    %v1898 = vunpack.c.l.b16 %v1848
    %v1899 = vunpack.c.l.b16 %v1849
    %v1900 = vunpack.c.h.b16 %v1849
    %v1901 = vunpack.c.l.b16 %v1850
    %v1902 = vpack.c.b16 %v1884, %v1881
    %v1903 = vpack.c.b16 %v1885, %v1882
    %v1904 = vpack.c.b16 %v1886, %v1883
    %v1905 = vpack.c.b16 %v1890, %v1887
    %v1906 = vpack.c.b16 %v1891, %v1888
    %v1907 = vpack.c.b16 %v1892, %v1889
    %v1908 = vpack.c.b16 %v1896, %v1893
    %v1909 = vpack.c.b16 %v1897, %v1894
    %v1910 = vpack.c.b16 %v1898, %v1895
    %v1911 = vpack.c.b16 %v1899, %v1899
    %v1912 = vpack.c.b16 %v1900, %v1900
    %v1913 = vpack.c.b16 %v1901, %v1901
    %v1942 = vunpack.c.l.b16 %v1851
    %v1943 = vunpack.c.h.b16 %v1851
    %v1944 = vunpack.c.l.b16 %v1852
    %v1945 = vunpack.c.h.b16 %v1852
    %v1946 = vunpack.c.l.b16 %v1853
    %v1947 = vunpack.c.h.b16 %v1853
    %v1948 = vunpack.c.l.b16 %v1854
    %v1949 = vunpack.c.h.b16 %v1854
    %v1950 = vunpack.c.l.b16 %v1855
    %v1951 = vunpack.c.h.b16 %v1855
    %v1952 = vunpack.c.l.b16 %v1856
    %v1953 = vunpack.c.h.b16 %v1856
    %v1954 = vunpack.c.l.b16 %v1857
    %v1955 = vunpack.c.h.b16 %v1857
    %v1956 = vunpack.c.l.b16 %v1858
    %v1957 = vunpack.c.h.b16 %v1858
    %v1958 = vunpack.c.l.b16 %v1859
    %v1959 = vunpack.c.h.b16 %v1859
    %v1960 = vunpack.c.l.b16 %v1860
    %v1961 = vunpack.c.h.b16 %v1860
    %v1962 = vunpack.c.l.b16 %v1861
    %v1963 = vunpack.c.h.b16 %v1861
    %v1964 = vunpack.c.l.b16 %v1862
    %v1965 = vunpack.c.h.b16 %v1862
    %v1966 = vunpack.c.l.b16 %v1863
    %v1967 = vunpack.c.h.b16 %v1863
    %v1968 = vunpack.c.l.b16 %v1864
    %v1969 = vunpack.c.h.b16 %v1864
    %v1970 = vunpack.c.l.b16 %v1865
    %v1971 = vunpack.c.h.b16 %v1865
    %v1972 = vunpack.c.l.b16 %v1866
    %v1973 = vunpack.c.h.b16 %v1866
    %v1974 = vpack.c.b16 %v1944, %v1942
    %v1975 = vpack.c.b16 %v1945, %v1943
    %v1976 = vpack.c.b16 %v1948, %v1946
    %v1977 = vpack.c.b16 %v1949, %v1947
    %v1978 = vpack.c.b16 %v1952, %v1950
    %v1979 = vpack.c.b16 %v1953, %v1951
    %v1980 = vpack.c.b16 %v1956, %v1954
    %v1981 = vpack.c.b16 %v1957, %v1955
    %v1982 = vpack.c.b16 %v1960, %v1958
    %v1983 = vpack.c.b16 %v1961, %v1959
    %v1984 = vpack.c.b16 %v1964, %v1962
    %v1985 = vpack.c.b16 %v1965, %v1963
    %v1986 = vpack.c.b16 %v1968, %v1966
    %v1987 = vpack.c.b16 %v1969, %v1967
    %v1988 = vpack.c.b16 %v1972, %v1970
    %v1989 = vpack.c.b16 %v1973, %v1971
    %2006 = vmatprep.subr.bf16.mxu0 %v1975
    %2007 = vmatpush1.bf16.msra.mxu0 %v1974
    %2008 = vmatprep.subr.bf16.mxu0 %v1977
    %2009 = vmatpush1.bf16.msra.mxu0 %v1976
    %2010 = vmatprep.subr.bf16.mxu0 %v1979
    %2011 = vmatpush1.bf16.msra.mxu0 %v1978
    %2012 = vmatprep.subr.bf16.mxu0 %v1981
    %2013 = vmatpush1.bf16.msra.mxu0 %v1980
    %2014 = vmatprep.subr.bf16.mxu0 %v1983
    %2015 = vmatpush1.bf16.msra.mxu0 %v1982
    %2016 = vmatprep.subr.bf16.mxu0 %v1985
    %2017 = vmatpush1.bf16.msra.mxu0 %v1984
    %2018 = vmatprep.subr.bf16.mxu0 %v1987
    %2019 = vmatpush1.bf16.msra.mxu0 %v1986
    %2020 = vmatprep.subr.bf16.mxu0 %v1989
    %2021 = vmatpush1.bf16.msra.mxu0 %v1988
    %2022 = vmatprep.subr.bf16.mxu0 %v1262
    %2023 = vmatpush1.bf16.msra.mxu0 %v1261
    %2024 = vmatprep.subr.bf16.mxu0 %v1264
    %2025 = vmatpush1.bf16.msra.mxu0 %v1263
    %2026 = vmatprep.subr.bf16.mxu0 %v1266
    %2027 = vmatpush1.bf16.msra.mxu0 %v1265
    %2028 = vmatprep.subr.bf16.mxu0 %v1268
    %2029 = vmatpush1.bf16.msra.mxu0 %v1267
    %2030 = vmatprep.subr.bf16.mxu0 %v1270
    %2031 = vmatpush1.bf16.msra.mxu0 %v1269
    %2032 = vmatprep.subr.bf16.mxu0 %v1272
    %2033 = vmatpush1.bf16.msra.mxu0 %v1271
    %2034 = vmatprep.subr.bf16.mxu0 %v1274
    %2035 = vmatpush1.bf16.msra.mxu0 %v1273
    %2036 = vmatprep.subr.bf16.mxu0 %v1276
    %2037 = vmatpush1.bf16.msra.mxu0 %v1275
    %2038 = vmatprep.mubr.bf16.mxu0 %v1903
    %2039 = vmatmul.mubr.bf16.gmra.mrb[0].mxu0 %v1902
    %v2040 = vpop.f32.mrb[0].mxu0
    %v2041 = vadd.f32 0.0, %v2040
    %v2042 = vpop.f32.mrb[0].mxu0
    %v2043 = vadd.f32 0.0, %v2042
    %v2044 = vpop.f32.mrb[0].mxu0
    %v2045 = vadd.f32 0.0, %v2044
    %v2046 = vpop.f32.mrb[0].mxu0
    %v2047 = vadd.f32 0.0, %v2046
    %2048 = vmatprep.mubr.bf16.mxu0 %v1906
    %2049 = vmatmul.mubr.bf16.gmra.mrb[0].mxu0 %v1905
    %v2050 = vpop.f32.mrb[0].mxu0
    %v2051 = vadd.f32 0.0, %v2050
    %v2052 = vpop.f32.mrb[0].mxu0
    %v2053 = vadd.f32 0.0, %v2052
    %v2054 = vpop.f32.mrb[0].mxu0
    %v2055 = vadd.f32 0.0, %v2054
    %v2056 = vpop.f32.mrb[0].mxu0
    %v2057 = vadd.f32 0.0, %v2056
    %2058 = vmatprep.mubr.bf16.mxu0 %v1909
    %2059 = vmatmul.mubr.bf16.gmra.mrb[0].mxu0 %v1908
    %v2060 = vpop.f32.mrb[0].mxu0
    %v2061 = vadd.f32 0.0, %v2060
    %v2062 = vpop.f32.mrb[0].mxu0
    %v2063 = vadd.f32 0.0, %v2062
    %v2064 = vpop.f32.mrb[0].mxu0
    %v2065 = vadd.f32 0.0, %v2064
    %v2066 = vpop.f32.mrb[0].mxu0
    %v2067 = vadd.f32 0.0, %v2066
    %2068 = vmatprep.mubr.bf16.mxu0 %v1912
    %2069 = vmatmul.mubr.bf16.gmra.mrb[0].mxu0 %v1911
    %v2070 = vpop.f32.mrb[0].mxu0
    %v2071 = vadd.f32 0.0, %v2070
    %v2072 = vpop.f32.mrb[0].mxu0
    %v2073 = vadd.f32 0.0, %v2072
    %v2074 = vpop.f32.mrb[0].mxu0
    %v2075 = vpop.f32.mrb[0].mxu0
    %2076 = vdwg.mxu0
    %2077 = vmatprep.subr.bf16.mxu0 %v453
    %2078 = vmatpush1.bf16.msra.mxu0 %v452
    %2079 = vmatprep.subr.bf16.mxu0 %v455
    %2080 = vmatpush1.bf16.msra.mxu0 %v454
    %2081 = vmatprep.subr.bf16.mxu0 %v457
    %2082 = vmatpush1.bf16.msra.mxu0 %v456
    %2083 = vmatprep.subr.bf16.mxu0 %v459
    %2084 = vmatpush1.bf16.msra.mxu0 %v458
    %2085 = vmatprep.subr.bf16.mxu0 %v461
    %2086 = vmatpush1.bf16.msra.mxu0 %v460
    %2087 = vmatprep.subr.bf16.mxu0 %v463
    %2088 = vmatpush1.bf16.msra.mxu0 %v462
    %2089 = vmatprep.subr.bf16.mxu0 %v465
    %2090 = vmatpush1.bf16.msra.mxu0 %v464
    %2091 = vmatprep.subr.bf16.mxu0 %v467
    %2092 = vmatpush1.bf16.msra.mxu0 %v466
    %2093 = vmatprep.subr.bf16.mxu0 0
    %2094 = vmatpush1.bf16.msra.mxu0 0
    %2095 = vmatprep.subr.bf16.mxu0 0
    %2096 = vmatpush1.bf16.msra.mxu0 0
    %2097 = vmatprep.subr.bf16.mxu0 0
    %2098 = vmatpush1.bf16.msra.mxu0 0
    %2099 = vmatprep.subr.bf16.mxu0 0
    %2100 = vmatpush1.bf16.msra.mxu0 0
    %2101 = vmatprep.subr.bf16.mxu0 0
    %2102 = vmatpush1.bf16.msra.mxu0 0
    %2103 = vmatprep.subr.bf16.mxu0 0
    %2104 = vmatpush1.bf16.msra.mxu0 0
    %2105 = vmatprep.subr.bf16.mxu0 0
    %2106 = vmatpush1.bf16.msra.mxu0 0
    %2107 = vmatprep.subr.bf16.mxu0 0
    %2108 = vmatpush1.bf16.msra.mxu0 0
    %2109 = vmatprep.mubr.bf16.mxu0 0
    %2110 = vmatmul.mubr.bf16.gmra.mrb[0].mxu0 %v1904
    %v2111 = vpop.f32.mrb[0].mxu0
    %v2112 = vadd.f32 %v2041, %v2111
    %v2113 = vpop.f32.mrb[0].mxu0
    %v2114 = vadd.f32 %v2043, %v2113
    %v2115 = vpop.f32.mrb[0].mxu0
    %v2116 = vadd.f32 %v2045, %v2115
    %v2117 = vpop.f32.mrb[0].mxu0
    %v2118 = vadd.f32 %v2047, %v2117
    %2119 = vmatprep.mubr.bf16.mxu0 0
    %2120 = vmatmul.mubr.bf16.gmra.mrb[0].mxu0 %v1907
    %v2121 = vpop.f32.mrb[0].mxu0
    %v2122 = vadd.f32 %v2051, %v2121
    %v2123 = vpop.f32.mrb[0].mxu0
    %v2124 = vadd.f32 %v2053, %v2123
    %v2125 = vpop.f32.mrb[0].mxu0
    %v2126 = vadd.f32 %v2055, %v2125
    %v2127 = vpop.f32.mrb[0].mxu0
    %v2128 = vadd.f32 %v2057, %v2127
    %2129 = vmatprep.mubr.bf16.mxu0 0
    %2130 = vmatmul.mubr.bf16.gmra.mrb[0].mxu0 %v1910
    %v2131 = vpop.f32.mrb[0].mxu0
    %v2132 = vadd.f32 %v2061, %v2131
    %v2133 = vpop.f32.mrb[0].mxu0
    %v2134 = vadd.f32 %v2063, %v2133
    %v2135 = vpop.f32.mrb[0].mxu0
    %v2136 = vadd.f32 %v2065, %v2135
    %v2137 = vpop.f32.mrb[0].mxu0
    %v2138 = vadd.f32 %v2067, %v2137
    %2139 = vmatprep.mubr.bf16.mxu0 0
    %2140 = vmatmul.mubr.bf16.gmra.mrb[0].mxu0 %v1913
    %v2141 = vpop.f32.mrb[0].mxu0
    %v2142 = vadd.f32 %v2071, %v2141
    %v2143 = vpop.f32.mrb[0].mxu0
    %v2144 = vadd.f32 %v2073, %v2143
    %v2145 = vpop.f32.mrb[0].mxu0
    %v2146 = vpop.f32.mrb[0].mxu0
    %2147 = vdwg.mxu0
    %v2180 = vunpack.c.l.b16 %v1805
    %v2181 = vunpack.c.h.b16 %v1805
    %v2182 = vunpack.c.l.b16 %v1806
    %v2183 = vunpack.c.h.b16 %v1806
    %v2184 = vunpack.c.l.b16 %v1807
    %v2185 = vunpack.c.h.b16 %v1807
    %v2186 = vunpack.c.l.b16 %v1808
    %v2187 = vunpack.c.h.b16 %v1808
    %v2188 = vunpack.c.l.b16 %v1809
    %v2189 = vunpack.c.h.b16 %v1809
    %v2190 = vunpack.c.l.b16 %v1810
    %v2191 = vunpack.c.h.b16 %v1810
    %v2192 = vunpack.c.l.b16 %v1811
    %v2193 = vunpack.c.h.b16 %v1811
    %v2194 = vunpack.c.l.b16 %v1812
    %v2195 = vunpack.c.h.b16 %v1812
    %v2196 = vunpack.c.l.b16 %v1813
    %v2197 = vunpack.c.h.b16 %v1813
    %v2198 = vunpack.c.l.b16 %v1814
    %v2199 = vunpack.c.h.b16 %v1814
    %v2200 = vunpack.c.l.b16 %v1815
    %v2201 = vunpack.c.h.b16 %v1815
    %v2202 = vunpack.c.l.b16 %v1816
    %v2203 = vunpack.c.h.b16 %v1816
    %v2204 = vunpack.c.l.b16 %v1817
    %v2205 = vunpack.c.h.b16 %v1817
    %v2206 = vunpack.c.l.b16 %v1818
    %v2207 = vunpack.c.h.b16 %v1818
    %v2208 = vunpack.c.l.b16 %v1819
    %v2209 = vunpack.c.h.b16 %v1819
    %v2210 = vunpack.c.l.b16 %v1820
    %v2211 = vunpack.c.h.b16 %v1820
    %v2212 = vunpack.c.l.b16 %v1821
    %v2213 = vunpack.c.h.b16 %v1821
    %v2214 = vunpack.c.l.b16 %v1822
    %v2215 = vunpack.c.h.b16 %v1822
    %v2216 = vunpack.c.l.b16 %v1823
    %v2217 = vunpack.c.h.b16 %v1823
    %v2218 = vunpack.c.l.b16 %v1824
    %v2219 = vunpack.c.h.b16 %v1824
    %v2220 = vunpack.c.l.b16 %v1825
    %v2221 = vunpack.c.h.b16 %v1825
    %v2222 = vunpack.c.l.b16 %v1826
    %v2223 = vunpack.c.h.b16 %v1826
    %v2224 = vunpack.c.l.b16 %v1827
    %v2225 = vunpack.c.h.b16 %v1827
    %v2226 = vunpack.c.l.b16 %v1828
    %v2227 = vunpack.c.h.b16 %v1828
    %v2228 = vunpack.c.l.b16 %v1829
    %v2229 = vunpack.c.h.b16 %v1829
    %v2230 = vunpack.c.l.b16 %v1830
    %v2231 = vunpack.c.h.b16 %v1830
    %v2232 = vunpack.c.l.b16 %v1831
    %v2233 = vunpack.c.h.b16 %v1831
    %v2234 = vunpack.c.l.b16 %v1832
    %v2235 = vunpack.c.h.b16 %v1832
    %v2236 = vunpack.c.l.b16 %v1833
    %v2237 = vunpack.c.h.b16 %v1833
    %v2238 = vunpack.c.l.b16 %v1834
    %v2239 = vunpack.c.h.b16 %v1834
    %v2240 = vunpack.c.l.b16 %v1835
    %v2241 = vunpack.c.h.b16 %v1835
    %v2242 = vunpack.c.l.b16 %v1836
    %v2243 = vunpack.c.h.b16 %v1836
    %v2244 = vpack.c.b16 %v2182, %v2180
    %v2245 = vpack.c.b16 %v2183, %v2181
    %v2246 = vpack.c.b16 %v2186, %v2184
    %v2247 = vpack.c.b16 %v2187, %v2185
    %v2248 = vpack.c.b16 %v2190, %v2188
    %v2249 = vpack.c.b16 %v2191, %v2189
    %v2250 = vpack.c.b16 %v2194, %v2192
    %v2251 = vpack.c.b16 %v2195, %v2193
    %v2252 = vpack.c.b16 %v2198, %v2196
    %v2253 = vpack.c.b16 %v2199, %v2197
    %v2254 = vpack.c.b16 %v2202, %v2200
    %v2255 = vpack.c.b16 %v2203, %v2201
    %v2256 = vpack.c.b16 %v2206, %v2204
    %v2257 = vpack.c.b16 %v2207, %v2205
    %v2258 = vpack.c.b16 %v2210, %v2208
    %v2259 = vpack.c.b16 %v2211, %v2209
    %v2260 = vpack.c.b16 %v2214, %v2212
    %v2261 = vpack.c.b16 %v2215, %v2213
    %v2262 = vpack.c.b16 %v2218, %v2216
    %v2263 = vpack.c.b16 %v2219, %v2217
    %v2264 = vpack.c.b16 %v2222, %v2220
    %v2265 = vpack.c.b16 %v2223, %v2221
    %v2266 = vpack.c.b16 %v2226, %v2224
    %v2267 = vpack.c.b16 %v2227, %v2225
    %v2268 = vpack.c.b16 %v2230, %v2228
    %v2269 = vpack.c.b16 %v2231, %v2229
    %v2270 = vpack.c.b16 %v2234, %v2232
    %v2271 = vpack.c.b16 %v2235, %v2233
    %v2272 = vpack.c.b16 %v2238, %v2236
    %v2273 = vpack.c.b16 %v2239, %v2237
    %v2274 = vpack.c.b16 %v2242, %v2240
    %v2275 = vpack.c.b16 %v2243, %v2241
    %2308 = vmatprep.subr.bf16.mxu0 %v2245
    %2309 = vmatpush1.bf16.msra.mxu0 %v2244
    %2310 = vmatprep.subr.bf16.mxu0 %v2247
    %2311 = vmatpush1.bf16.msra.mxu0 %v2246
    %2312 = vmatprep.subr.bf16.mxu0 %v2249
    %2313 = vmatpush1.bf16.msra.mxu0 %v2248
    %2314 = vmatprep.subr.bf16.mxu0 %v2251
    %2315 = vmatpush1.bf16.msra.mxu0 %v2250
    %2316 = vmatprep.subr.bf16.mxu0 %v2253
    %2317 = vmatpush1.bf16.msra.mxu0 %v2252
    %2318 = vmatprep.subr.bf16.mxu0 %v2255
    %2319 = vmatpush1.bf16.msra.mxu0 %v2254
    %2320 = vmatprep.subr.bf16.mxu0 %v2257
    %2321 = vmatpush1.bf16.msra.mxu0 %v2256
    %2322 = vmatprep.subr.bf16.mxu0 %v2259
    %2323 = vmatpush1.bf16.msra.mxu0 %v2258
    %2324 = vmatprep.subr.bf16.mxu0 %v2261
    %2325 = vmatpush1.bf16.msra.mxu0 %v2260
    %2326 = vmatprep.subr.bf16.mxu0 %v2263
    %2327 = vmatpush1.bf16.msra.mxu0 %v2262
    %2328 = vmatprep.subr.bf16.mxu0 %v2265
    %2329 = vmatpush1.bf16.msra.mxu0 %v2264
    %2330 = vmatprep.subr.bf16.mxu0 %v2267
    %2331 = vmatpush1.bf16.msra.mxu0 %v2266
    %2332 = vmatprep.subr.bf16.mxu0 %v2269
    %2333 = vmatpush1.bf16.msra.mxu0 %v2268
    %2334 = vmatprep.subr.bf16.mxu0 %v2271
    %2335 = vmatpush1.bf16.msra.mxu0 %v2270
    %2336 = vmatprep.subr.bf16.mxu0 %v2273
    %2337 = vmatpush1.bf16.msra.mxu0 %v2272
    %2338 = vmatprep.subr.bf16.mxu0 %v2275
    %2339 = vmatpush1.bf16.msra.mxu0 %v2274
    %2340 = vmatprep.mubr.bf16.mxu0 %v600
    %2341 = vmatmul.mubr.bf16.gmra.mrb[0].mxu0 %v599
    %v2342 = vpop.f32.mrb[0].mxu0
    %v2343 = vadd.f32 %v2112, %v2342
    %v2344 = vpop.f32.mrb[0].mxu0
    %v2345 = vadd.f32 %v2114, %v2344
    %v2346 = vpop.f32.mrb[0].mxu0
    %v2347 = vadd.f32 %v2116, %v2346
    %v2348 = vpop.f32.mrb[0].mxu0
    %v2349 = vadd.f32 %v2118, %v2348
    %2350 = vmatprep.mubr.bf16.mxu0 %v604
    %2351 = vmatmul.mubr.bf16.gmra.mrb[0].mxu0 %v603
    %v2352 = vpop.f32.mrb[0].mxu0
    %v2353 = vadd.f32 %v2122, %v2352
    %v2354 = vpop.f32.mrb[0].mxu0
    %v2355 = vadd.f32 %v2124, %v2354
    %v2356 = vpop.f32.mrb[0].mxu0
    %v2357 = vadd.f32 %v2126, %v2356
    %v2358 = vpop.f32.mrb[0].mxu0
    %v2359 = vadd.f32 %v2128, %v2358
    %2360 = vmatprep.mubr.bf16.mxu0 %v608
    %2361 = vmatmul.mubr.bf16.gmra.mrb[0].mxu0 %v607
    %v2362 = vpop.f32.mrb[0].mxu0
    %v2363 = vadd.f32 %v2132, %v2362
    %v2364 = vpop.f32.mrb[0].mxu0
    %v2365 = vadd.f32 %v2134, %v2364
    %v2366 = vpop.f32.mrb[0].mxu0
    %v2367 = vadd.f32 %v2136, %v2366
    %v2368 = vpop.f32.mrb[0].mxu0
    %v2369 = vadd.f32 %v2138, %v2368
    %2370 = vmatprep.mubr.bf16.mxu0 %v612
    %2371 = vmatmul.mubr.bf16.gmra.mrb[0].mxu0 %v611
    %v2372 = vpop.f32.mrb[0].mxu0
    %v2373 = vadd.f32 %v2142, %v2372
    %v2374 = vpop.f32.mrb[0].mxu0
    %v2375 = vadd.f32 %v2144, %v2374
    %v2376 = vpop.f32.mrb[0].mxu0
    %v2377 = vpop.f32.mrb[0].mxu0
    %2378 = vdwg.mxu0
    %v2379 = vld [vmem:[%s0] sm:$0xff]
    %v2380 = vld [vmem:[%s0 + $0x8] sm:$0xff]
    %v2381 = vld [vmem:[%s0 + $0x10] sm:$0xff]
    %v2382 = vld [vmem:[%s0 + $0x18] sm:$0xff]
    %v2383 = vld [vmem:[%s0 + $0x20] sm:$0xff]
    %v2384 = vld [vmem:[%s0 + $0x28] sm:$0xff]
    %v2385 = vld [vmem:[%s0 + $0x30] sm:$0xff]
    %v2386 = vld [vmem:[%s0 + $0x38] sm:$0xff]
    %v2387 = vld [vmem:[%s0 + $0x40] sm:$0xff]
    %v2388 = vld [vmem:[%s0 + $0x48] sm:$0xff]
    %v2389 = vld [vmem:[%s0 + $0x50] sm:$0xff]
    %v2390 = vld [vmem:[%s0 + $0x58] sm:$0xff]
    %v2391 = vld [vmem:[%s0 + $0x60] sm:$0xff]
    %v2392 = vld [vmem:[%s0 + $0x68] sm:$0xff]
    %v2393 = vld [vmem:[%s0 + $0x70] sm:$0xff]
    %v2394 = vld [vmem:[%s0 + $0x78] sm:$0xff]
    %v2395 = vld [vmem:[#allocation2 + $0x10] sm:$0xff]
    %v2396 = vld [vmem:[#allocation2 + $0x18] sm:$0xff]
    %v2397 = vld [vmem:[#allocation2 + $0x20] sm:$0xff]
    %v2398 = vld [vmem:[#allocation2 + $0x28] sm:$0xff]
    %v2399 = vld [vmem:[#allocation2 + $0x30] sm:$0xff]
    %v2400 = vld [vmem:[#allocation2 + $0x38] sm:$0xff]
    %v2401 = vld [vmem:[#allocation2 + $0x40] sm:$0xff]
    %v2402 = vld [vmem:[#allocation2 + $0x48] sm:$0xff]
    %v2403 = vld [vmem:[#allocation2 + $0x50] sm:$0xff]
    %v2404 = vld [vmem:[#allocation2 + $0x58] sm:$0xff]
    %v2405 = vld [vmem:[#allocation2 + $0x60] sm:$0xff]
    %v2406 = vld [vmem:[#allocation2 + $0x68] sm:$0xff]
    %v2407 = vld [vmem:[#allocation2 + $0x70] sm:$0xff]
    %v2408 = vld [vmem:[#allocation2 + $0x78] sm:$0xff]
    %v2409 = vld [vmem:[%s0 + $0x80] sm:$0xff]
    %v2410 = vld [vmem:[%s0 + $0x88] sm:$0xff]
    %v2411 = vld [vmem:[%s0 + $0x90] sm:$0xff]
    %v2412 = vld [vmem:[%s0 + $0x98] sm:$0xff]
    %v2413 = vld [vmem:[%s0 + $0xa0] sm:$0xff]
    %v2414 = vld [vmem:[%s0 + $0xa8] sm:$0xff]
    %v2415 = vld [vmem:[%s0 + $0xb0] sm:$0xff]
    %v2416 = vld [vmem:[%s0 + $0xb8] sm:$0xff]
    %v2417 = vld [vmem:[%s0 + $0xc0] sm:$0xff]
    %v2418 = vld [vmem:[%s0 + $0xc8] sm:$0xff]
    %v2419 = vld [vmem:[%s0 + $0xd0] sm:$0xff]
    %v2420 = vld [vmem:[%s0 + $0xd8] sm:$0xff]
    %v2421 = vld [vmem:[%s0 + $0xe0] sm:$0xff]
    %v2422 = vld [vmem:[%s0 + $0xe8] sm:$0xff]
    %v2423 = vld [vmem:[%s0 + $0xf0] sm:$0xff]
    %v2424 = vld [vmem:[%s0 + $0xf8] sm:$0xff]
    %v2439 = vunpack.c.l.b16 %v2395
    %v2440 = vunpack.c.h.b16 %v2395
    %v2441 = vunpack.c.l.b16 %v2396
    %v2442 = vunpack.c.h.b16 %v2396
    %v2443 = vunpack.c.l.b16 %v2397
    %v2444 = vunpack.c.h.b16 %v2397
    %v2445 = vunpack.c.l.b16 %v2398
    %v2446 = vunpack.c.h.b16 %v2398
    %v2447 = vunpack.c.l.b16 %v2399
    %v2448 = vunpack.c.h.b16 %v2399
    %v2449 = vunpack.c.l.b16 %v2400
    %v2450 = vunpack.c.h.b16 %v2400
    %v2451 = vunpack.c.l.b16 %v2401
    %v2452 = vunpack.c.h.b16 %v2401
    %v2453 = vunpack.c.l.b16 %v2402
    %v2454 = vunpack.c.h.b16 %v2402
    %v2455 = vunpack.c.l.b16 %v2403
    %v2456 = vunpack.c.h.b16 %v2403
    %v2457 = vunpack.c.l.b16 %v2404
    %v2458 = vunpack.c.h.b16 %v2404
    %v2459 = vunpack.c.l.b16 %v2405
    %v2460 = vunpack.c.h.b16 %v2405
    %v2461 = vunpack.c.l.b16 %v2406
    %v2462 = vunpack.c.h.b16 %v2406
    %v2463 = vunpack.c.l.b16 %v2407
    %v2464 = vunpack.c.h.b16 %v2407
    %v2465 = vunpack.c.l.b16 %v2408
    %v2466 = vunpack.c.h.b16 %v2408
    %v2467 = vpack.c.b16 %v2443, %v2439
    %v2468 = vpack.c.b16 %v2444, %v2440
    %v2469 = vpack.c.b16 %v2445, %v2441
    %v2470 = vpack.c.b16 %v2446, %v2442
    %v2471 = vpack.c.b16 %v2451, %v2447
    %v2472 = vpack.c.b16 %v2452, %v2448
    %v2473 = vpack.c.b16 %v2453, %v2449
    %v2474 = vpack.c.b16 %v2454, %v2450
    %v2475 = vpack.c.b16 %v2459, %v2455
    %v2476 = vpack.c.b16 %v2460, %v2456
    %v2477 = vpack.c.b16 %v2461, %v2457
    %v2478 = vpack.c.b16 %v2462, %v2458
    %v2479 = vpack.c.b16 %v2463, %v2463
    %v2480 = vpack.c.b16 %v2464, %v2464
    %v2481 = vpack.c.b16 %v2465, %v2465
    %v2482 = vpack.c.b16 %v2466, %v2466
    %v2515 = vunpack.c.l.b16 %v2409
    %v2516 = vunpack.c.h.b16 %v2409
    %v2517 = vunpack.c.l.b16 %v2410
    %v2518 = vunpack.c.h.b16 %v2410
    %v2519 = vunpack.c.l.b16 %v2411
    %v2520 = vunpack.c.h.b16 %v2411
    %v2521 = vunpack.c.l.b16 %v2412
    %v2522 = vunpack.c.h.b16 %v2412
    %v2523 = vunpack.c.l.b16 %v2413
    %v2524 = vunpack.c.h.b16 %v2413
    %v2525 = vunpack.c.l.b16 %v2414
    %v2526 = vunpack.c.h.b16 %v2414
    %v2527 = vunpack.c.l.b16 %v2415
    %v2528 = vunpack.c.h.b16 %v2415
    %v2529 = vunpack.c.l.b16 %v2416
    %v2530 = vunpack.c.h.b16 %v2416
    %v2531 = vunpack.c.l.b16 %v2417
    %v2532 = vunpack.c.h.b16 %v2417
    %v2533 = vunpack.c.l.b16 %v2418
    %v2534 = vunpack.c.h.b16 %v2418
    %v2535 = vunpack.c.l.b16 %v2419
    %v2536 = vunpack.c.h.b16 %v2419
    %v2537 = vunpack.c.l.b16 %v2420
    %v2538 = vunpack.c.h.b16 %v2420
    %v2539 = vunpack.c.l.b16 %v2421
    %v2540 = vunpack.c.h.b16 %v2421
    %v2541 = vunpack.c.l.b16 %v2422
    %v2542 = vunpack.c.h.b16 %v2422
    %v2543 = vunpack.c.l.b16 %v2423
    %v2544 = vunpack.c.h.b16 %v2423
    %v2545 = vunpack.c.l.b16 %v2424
    %v2546 = vunpack.c.h.b16 %v2424
    %v2547 = vpack.c.b16 %v2517, %v2515
    %v2548 = vpack.c.b16 %v2518, %v2516
    %v2549 = vpack.c.b16 %v2521, %v2519
    %v2550 = vpack.c.b16 %v2522, %v2520
    %v2551 = vpack.c.b16 %v2525, %v2523
    %v2552 = vpack.c.b16 %v2526, %v2524
    %v2553 = vpack.c.b16 %v2529, %v2527
    %v2554 = vpack.c.b16 %v2530, %v2528
    %v2555 = vpack.c.b16 %v2533, %v2531
    %v2556 = vpack.c.b16 %v2534, %v2532
    %v2557 = vpack.c.b16 %v2537, %v2535
    %v2558 = vpack.c.b16 %v2538, %v2536
    %v2559 = vpack.c.b16 %v2541, %v2539
    %v2560 = vpack.c.b16 %v2542, %v2540
    %v2561 = vpack.c.b16 %v2545, %v2543
    %v2562 = vpack.c.b16 %v2546, %v2544
    %2579 = vmatprep.subr.bf16.mxu0 %v2548
    %2580 = vmatpush1.bf16.msra.mxu0 %v2547
    %2581 = vmatprep.subr.bf16.mxu0 %v2550
    %2582 = vmatpush1.bf16.msra.mxu0 %v2549
    %2583 = vmatprep.subr.bf16.mxu0 %v2552
    %2584 = vmatpush1.bf16.msra.mxu0 %v2551
    %2585 = vmatprep.subr.bf16.mxu0 %v2554
    %2586 = vmatpush1.bf16.msra.mxu0 %v2553
    %2587 = vmatprep.subr.bf16.mxu0 %v2556
    %2588 = vmatpush1.bf16.msra.mxu0 %v2555
    %2589 = vmatprep.subr.bf16.mxu0 %v2558
    %2590 = vmatpush1.bf16.msra.mxu0 %v2557
    %2591 = vmatprep.subr.bf16.mxu0 %v2560
    %2592 = vmatpush1.bf16.msra.mxu0 %v2559
    %2593 = vmatprep.subr.bf16.mxu0 %v2562
    %2594 = vmatpush1.bf16.msra.mxu0 %v2561
    %2595 = vmatprep.subr.bf16.mxu0 %v1975
    %2596 = vmatpush1.bf16.msra.mxu0 %v1974
    %2597 = vmatprep.subr.bf16.mxu0 %v1977
    %2598 = vmatpush1.bf16.msra.mxu0 %v1976
    %2599 = vmatprep.subr.bf16.mxu0 %v1979
    %2600 = vmatpush1.bf16.msra.mxu0 %v1978
    %2601 = vmatprep.subr.bf16.mxu0 %v1981
    %2602 = vmatpush1.bf16.msra.mxu0 %v1980
    %2603 = vmatprep.subr.bf16.mxu0 %v1983
    %2604 = vmatpush1.bf16.msra.mxu0 %v1982
    %2605 = vmatprep.subr.bf16.mxu0 %v1985
    %2606 = vmatpush1.bf16.msra.mxu0 %v1984
    %2607 = vmatprep.subr.bf16.mxu0 %v1987
    %2608 = vmatpush1.bf16.msra.mxu0 %v1986
    %2609 = vmatprep.subr.bf16.mxu0 %v1989
    %2610 = vmatpush1.bf16.msra.mxu0 %v1988
    %2611 = vmatprep.mubr.bf16.mxu0 %v2468
    %2612 = vmatmul.mubr.bf16.gmra.mrb[0].mxu0 %v2467
    %v2613 = vpop.f32.mrb[0].mxu0
    %v2614 = vadd.f32 0.0, %v2613
    %v2615 = vpop.f32.mrb[0].mxu0
    %v2616 = vadd.f32 0.0, %v2615
    %v2617 = vpop.f32.mrb[0].mxu0
    %v2618 = vadd.f32 0.0, %v2617
    %v2619 = vpop.f32.mrb[0].mxu0
    %v2620 = vadd.f32 0.0, %v2619
    %2621 = vmatprep.mubr.bf16.mxu0 %v2472
    %2622 = vmatmul.mubr.bf16.gmra.mrb[0].mxu0 %v2471
    %v2623 = vpop.f32.mrb[0].mxu0
    %v2624 = vadd.f32 0.0, %v2623
    %v2625 = vpop.f32.mrb[0].mxu0
    %v2626 = vadd.f32 0.0, %v2625
    %v2627 = vpop.f32.mrb[0].mxu0
    %v2628 = vadd.f32 0.0, %v2627
    %v2629 = vpop.f32.mrb[0].mxu0
    %v2630 = vadd.f32 0.0, %v2629
    %2631 = vmatprep.mubr.bf16.mxu0 %v2476
    %2632 = vmatmul.mubr.bf16.gmra.mrb[0].mxu0 %v2475
    %v2633 = vpop.f32.mrb[0].mxu0
    %v2634 = vadd.f32 0.0, %v2633
    %v2635 = vpop.f32.mrb[0].mxu0
    %v2636 = vadd.f32 0.0, %v2635
    %v2637 = vpop.f32.mrb[0].mxu0
    %v2638 = vadd.f32 0.0, %v2637
    %v2639 = vpop.f32.mrb[0].mxu0
    %v2640 = vadd.f32 0.0, %v2639
    %2641 = vmatprep.mubr.bf16.mxu0 %v2480
    %2642 = vmatmul.mubr.bf16.gmra.mrb[0].mxu0 %v2479
    %v2643 = vpop.f32.mrb[0].mxu0
    %v2644 = vadd.f32 0.0, %v2643
    %v2645 = vpop.f32.mrb[0].mxu0
    %v2646 = vadd.f32 0.0, %v2645
    %v2647 = vpop.f32.mrb[0].mxu0
    %v2648 = vpop.f32.mrb[0].mxu0
    %2649 = vdwg.mxu0
    %2650 = vmatprep.subr.bf16.mxu0 %v1262
    %2651 = vmatpush1.bf16.msra.mxu0 %v1261
    %2652 = vmatprep.subr.bf16.mxu0 %v1264
    %2653 = vmatpush1.bf16.msra.mxu0 %v1263
    %2654 = vmatprep.subr.bf16.mxu0 %v1266
    %2655 = vmatpush1.bf16.msra.mxu0 %v1265
    %2656 = vmatprep.subr.bf16.mxu0 %v1268
    %2657 = vmatpush1.bf16.msra.mxu0 %v1267
    %2658 = vmatprep.subr.bf16.mxu0 %v1270
    %2659 = vmatpush1.bf16.msra.mxu0 %v1269
    %2660 = vmatprep.subr.bf16.mxu0 %v1272
    %2661 = vmatpush1.bf16.msra.mxu0 %v1271
    %2662 = vmatprep.subr.bf16.mxu0 %v1274
    %2663 = vmatpush1.bf16.msra.mxu0 %v1273
    %2664 = vmatprep.subr.bf16.mxu0 %v1276
    %2665 = vmatpush1.bf16.msra.mxu0 %v1275
    %2666 = vmatprep.subr.bf16.mxu0 %v453
    %2667 = vmatpush1.bf16.msra.mxu0 %v452
    %2668 = vmatprep.subr.bf16.mxu0 %v455
    %2669 = vmatpush1.bf16.msra.mxu0 %v454
    %2670 = vmatprep.subr.bf16.mxu0 %v457
    %2671 = vmatpush1.bf16.msra.mxu0 %v456
    %2672 = vmatprep.subr.bf16.mxu0 %v459
    %2673 = vmatpush1.bf16.msra.mxu0 %v458
    %2674 = vmatprep.subr.bf16.mxu0 %v461
    %2675 = vmatpush1.bf16.msra.mxu0 %v460
    %2676 = vmatprep.subr.bf16.mxu0 %v463
    %2677 = vmatpush1.bf16.msra.mxu0 %v462
    %2678 = vmatprep.subr.bf16.mxu0 %v465
    %2679 = vmatpush1.bf16.msra.mxu0 %v464
    %2680 = vmatprep.subr.bf16.mxu0 %v467
    %2681 = vmatpush1.bf16.msra.mxu0 %v466
    %2682 = vmatprep.mubr.bf16.mxu0 %v2470
    %2683 = vmatmul.mubr.bf16.gmra.mrb[0].mxu0 %v2469
    %v2684 = vpop.f32.mrb[0].mxu0
    %v2685 = vadd.f32 %v2614, %v2684
    %v2686 = vpop.f32.mrb[0].mxu0
    %v2687 = vadd.f32 %v2616, %v2686
    %v2688 = vpop.f32.mrb[0].mxu0
    %v2689 = vadd.f32 %v2618, %v2688
    %v2690 = vpop.f32.mrb[0].mxu0
    %v2691 = vadd.f32 %v2620, %v2690
    %2692 = vmatprep.mubr.bf16.mxu0 %v2474
    %2693 = vmatmul.mubr.bf16.gmra.mrb[0].mxu0 %v2473
    %v2694 = vpop.f32.mrb[0].mxu0
    %v2695 = vadd.f32 %v2624, %v2694
    %v2696 = vpop.f32.mrb[0].mxu0
    %v2697 = vadd.f32 %v2626, %v2696
    %v2698 = vpop.f32.mrb[0].mxu0
    %v2699 = vadd.f32 %v2628, %v2698
    %v2700 = vpop.f32.mrb[0].mxu0
    %v2701 = vadd.f32 %v2630, %v2700
    %2702 = vmatprep.mubr.bf16.mxu0 %v2478
    %2703 = vmatmul.mubr.bf16.gmra.mrb[0].mxu0 %v2477
    %v2704 = vpop.f32.mrb[0].mxu0
    %v2705 = vadd.f32 %v2634, %v2704
    %v2706 = vpop.f32.mrb[0].mxu0
    %v2707 = vadd.f32 %v2636, %v2706
    %v2708 = vpop.f32.mrb[0].mxu0
    %v2709 = vadd.f32 %v2638, %v2708
    %v2710 = vpop.f32.mrb[0].mxu0
    %v2711 = vadd.f32 %v2640, %v2710
    %2712 = vmatprep.mubr.bf16.mxu0 %v2482
    %2713 = vmatmul.mubr.bf16.gmra.mrb[0].mxu0 %v2481
    %v2714 = vpop.f32.mrb[0].mxu0
    %v2715 = vadd.f32 %v2644, %v2714
    %v2716 = vpop.f32.mrb[0].mxu0
    %v2717 = vadd.f32 %v2646, %v2716
    %v2718 = vpop.f32.mrb[0].mxu0
    %v2719 = vpop.f32.mrb[0].mxu0
    %2720 = vdwg.mxu0
    %v2737 = vunpack.c.l.b16 %v2379
    %v2738 = vunpack.c.h.b16 %v2379
    %v2739 = vunpack.c.l.b16 %v2380
    %v2740 = vunpack.c.h.b16 %v2380
    %v2741 = vunpack.c.l.b16 %v2381
    %v2742 = vunpack.c.h.b16 %v2381
    %v2743 = vunpack.c.l.b16 %v2382
    %v2744 = vunpack.c.h.b16 %v2382
    %v2745 = vunpack.c.l.b16 %v2383
    %v2746 = vunpack.c.h.b16 %v2383
    %v2747 = vunpack.c.l.b16 %v2384
    %v2748 = vunpack.c.h.b16 %v2384
    %v2749 = vunpack.c.l.b16 %v2385
    %v2750 = vunpack.c.h.b16 %v2385
    %v2751 = vunpack.c.l.b16 %v2386
    %v2752 = vunpack.c.h.b16 %v2386
    %v2753 = vunpack.c.l.b16 %v2387
    %v2754 = vunpack.c.h.b16 %v2387
    %v2755 = vunpack.c.l.b16 %v2388
    %v2756 = vunpack.c.h.b16 %v2388
    %v2757 = vunpack.c.l.b16 %v2389
    %v2758 = vunpack.c.h.b16 %v2389
    %v2759 = vunpack.c.l.b16 %v2390
    %v2760 = vunpack.c.h.b16 %v2390
    %v2761 = vunpack.c.l.b16 %v2391
    %v2762 = vunpack.c.h.b16 %v2391
    %v2763 = vunpack.c.l.b16 %v2392
    %v2764 = vunpack.c.h.b16 %v2392
    %v2765 = vunpack.c.l.b16 %v2393
    %v2766 = vunpack.c.h.b16 %v2393
    %v2767 = vunpack.c.l.b16 %v2394
    %v2768 = vunpack.c.h.b16 %v2394
    %v2769 = vpack.c.b16 %v2739, %v2737
    %v2770 = vpack.c.b16 %v2740, %v2738
    %v2771 = vpack.c.b16 %v2743, %v2741
    %v2772 = vpack.c.b16 %v2744, %v2742
    %v2773 = vpack.c.b16 %v2747, %v2745
    %v2774 = vpack.c.b16 %v2748, %v2746
    %v2775 = vpack.c.b16 %v2751, %v2749
    %v2776 = vpack.c.b16 %v2752, %v2750
    %v2777 = vpack.c.b16 %v2755, %v2753
    %v2778 = vpack.c.b16 %v2756, %v2754
    %v2779 = vpack.c.b16 %v2759, %v2757
    %v2780 = vpack.c.b16 %v2760, %v2758
    %v2781 = vpack.c.b16 %v2763, %v2761
    %v2782 = vpack.c.b16 %v2764, %v2762
    %v2783 = vpack.c.b16 %v2767, %v2765
    %v2784 = vpack.c.b16 %v2768, %v2766
    %2801 = vmatprep.subr.bf16.mxu0 %v2770
    %2802 = vmatpush1.bf16.msra.mxu0 %v2769
    %2803 = vmatprep.subr.bf16.mxu0 %v2772
    %2804 = vmatpush1.bf16.msra.mxu0 %v2771
    %2805 = vmatprep.subr.bf16.mxu0 %v2774
    %2806 = vmatpush1.bf16.msra.mxu0 %v2773
    %2807 = vmatprep.subr.bf16.mxu0 %v2776
    %2808 = vmatpush1.bf16.msra.mxu0 %v2775
    %2809 = vmatprep.subr.bf16.mxu0 %v2778
    %2810 = vmatpush1.bf16.msra.mxu0 %v2777
    %2811 = vmatprep.subr.bf16.mxu0 %v2780
    %2812 = vmatpush1.bf16.msra.mxu0 %v2779
    %2813 = vmatprep.subr.bf16.mxu0 %v2782
    %2814 = vmatpush1.bf16.msra.mxu0 %v2781
    %2815 = vmatprep.subr.bf16.mxu0 %v2784
    %2816 = vmatpush1.bf16.msra.mxu0 %v2783
    %2817 = vmatprep.subr.bf16.mxu0 0
    %2818 = vmatpush1.bf16.msra.mxu0 0
    %2819 = vmatprep.subr.bf16.mxu0 0
    %2820 = vmatpush1.bf16.msra.mxu0 0
    %2821 = vmatprep.subr.bf16.mxu0 0
    %2822 = vmatpush1.bf16.msra.mxu0 0
    %2823 = vmatprep.subr.bf16.mxu0 0
    %2824 = vmatpush1.bf16.msra.mxu0 0
    %2825 = vmatprep.subr.bf16.mxu0 0
    %2826 = vmatpush1.bf16.msra.mxu0 0
    %2827 = vmatprep.subr.bf16.mxu0 0
    %2828 = vmatpush1.bf16.msra.mxu0 0
    %2829 = vmatprep.subr.bf16.mxu0 0
    %2830 = vmatpush1.bf16.msra.mxu0 0
    %2831 = vmatprep.subr.bf16.mxu0 0
    %2832 = vmatpush1.bf16.msra.mxu0 0
    %2833 = vmatprep.mubr.bf16.mxu0 0
    %2834 = vmatmul.mubr.bf16.gmra.mrb[0].mxu0 %v1401
    %v2835 = vpop.f32.mrb[0].mxu0
    %v2836 = vadd.f32 %v2685, %v2835
    %v2837 = vpop.f32.mrb[0].mxu0
    %v2838 = vadd.f32 %v2687, %v2837
    %v2839 = vpop.f32.mrb[0].mxu0
    %v2840 = vadd.f32 %v2689, %v2839
    %v2841 = vpop.f32.mrb[0].mxu0
    %v2842 = vadd.f32 %v2691, %v2841
    %2843 = vmatprep.mubr.bf16.mxu0 0
    %2844 = vmatmul.mubr.bf16.gmra.mrb[0].mxu0 %v1404
    %v2845 = vpop.f32.mrb[0].mxu0
    %v2846 = vadd.f32 %v2695, %v2845
    %v2847 = vpop.f32.mrb[0].mxu0
    %v2848 = vadd.f32 %v2697, %v2847
    %v2849 = vpop.f32.mrb[0].mxu0
    %v2850 = vadd.f32 %v2699, %v2849
    %v2851 = vpop.f32.mrb[0].mxu0
    %v2852 = vadd.f32 %v2701, %v2851
    %2853 = vmatprep.mubr.bf16.mxu0 0
    %2854 = vmatmul.mubr.bf16.gmra.mrb[0].mxu0 %v1407
    %v2855 = vpop.f32.mrb[0].mxu0
    %v2856 = vadd.f32 %v2705, %v2855
    %v2857 = vpop.f32.mrb[0].mxu0
    %v2858 = vadd.f32 %v2707, %v2857
    %v2859 = vpop.f32.mrb[0].mxu0
    %v2860 = vadd.f32 %v2709, %v2859
    %v2861 = vpop.f32.mrb[0].mxu0
    %v2862 = vadd.f32 %v2711, %v2861
    %2863 = vmatprep.mubr.bf16.mxu0 0
    %2864 = vmatmul.mubr.bf16.gmra.mrb[0].mxu0 %v1410
    %v2865 = vpop.f32.mrb[0].mxu0
    %v2866 = vadd.f32 %v2715, %v2865
    %v2867 = vpop.f32.mrb[0].mxu0
    %v2868 = vadd.f32 %v2717, %v2867
    %v2869 = vpop.f32.mrb[0].mxu0
    %v2870 = vpop.f32.mrb[0].mxu0
    %2871 = vdwg.mxu0
    %v2872 = vld [vmem:[%s5] sm:$0x1]
    %v2873 = vmax.f32 %v1055, %v1769
    %v2874 = vmax.f32 %v1057, %v1771
    %v2875 = vmax.f32 %v1059, %v1773
    %v2876 = vmax.f32 %v1061, %v1775
    %v2877 = vmax.f32 %v1065, %v1779
    %v2878 = vmax.f32 %v1067, %v1781
    %v2879 = vmax.f32 %v1069, %v1783
    %v2880 = vmax.f32 %v1071, %v1785
    %v2881 = vmax.f32 %v1075, %v1789
    %v2882 = vmax.f32 %v1077, %v1791
    %v2883 = vmax.f32 %v1079, %v1793
    %v2884 = vmax.f32 %v1081, %v1795
    %v2885 = vmax.f32 %v1085, %v1799
    %v2886 = vmax.f32 %v1087, %v1801
    %v2887 = vmax.f32 %v2343, %v2836
    %v2888 = vmax.f32 %v2345, %v2838
    %v2889 = vmax.f32 %v2347, %v2840
    %v2890 = vmax.f32 %v2349, %v2842
    %v2891 = vmax.f32 %v2353, %v2846
    %v2892 = vmax.f32 %v2355, %v2848
    %v2893 = vmax.f32 %v2357, %v2850
    %v2894 = vmax.f32 %v2359, %v2852
    %v2895 = vmax.f32 %v2363, %v2856
    %v2896 = vmax.f32 %v2365, %v2858
    %v2897 = vmax.f32 %v2367, %v2860
    %v2898 = vmax.f32 %v2369, %v2862
    %v2899 = vmax.f32 %v2373, %v2866
    %v2900 = vmax.f32 %v2375, %v2868
    %v2901 = vmax.f32 %v2873, %v2874
    %v2902 = vmax.f32 %v2875, %v2876
    %v2903 = vmax.f32 %v2877, %v2878
    %v2904 = vmax.f32 %v2879, %v2880
    %v2905 = vmax.f32 %v2881, %v2882
    %v2906 = vmax.f32 %v2883, %v2884
    %v2907 = vmax.f32 %v2885, %v2886
    %v2908 = vlaneseq
    %v2909 = vshrl.u32 %v2908, 7
    %v2910 = vsub.s32 0, %v2909
    %v2911 = vrot.slane %v2872, %v2910
    %v2912 = vadd.f32 %v2901, %v2911
    %v2913 = vadd.f32 %v2902, %v2911
    %v2914 = vadd.f32 %v2903, %v2911
    %v2915 = vadd.f32 %v2904, %v2911
    %v2916 = vadd.f32 %v2905, %v2911
    %v2917 = vadd.f32 %v2906, %v2911
    %v2918 = vadd.f32 %v2907, %v2911
    %v2919 = vmax.f32 %v2912, 0.0
    %v2920 = vmax.f32 %v2913, 0.0
    %v2921 = vmax.f32 %v2914, 0.0
    %v2922 = vmax.f32 %v2915, 0.0
    %v2923 = vmax.f32 %v2916, 0.0
    %v2924 = vmax.f32 %v2917, 0.0
    %v2925 = vmax.f32 %v2918, 0.0
    %v2926 = vmax.f32 %v2887, %v2888
    %v2927 = vmax.f32 %v2889, %v2890
    %v2928 = vmax.f32 %v2891, %v2892
    %v2929 = vmax.f32 %v2893, %v2894
    %v2930 = vmax.f32 %v2895, %v2896
    %v2931 = vmax.f32 %v2897, %v2898
    %v2932 = vmax.f32 %v2899, %v2900
    %v2933 = vadd.f32 %v2926, %v2911
    %v2934 = vadd.f32 %v2927, %v2911
    %v2935 = vadd.f32 %v2928, %v2911
    %v2936 = vadd.f32 %v2929, %v2911
    %v2937 = vadd.f32 %v2930, %v2911
    %v2938 = vadd.f32 %v2931, %v2911
    %v2939 = vadd.f32 %v2932, %v2911
    %v2940 = vmax.f32 %v2933, 0.0
    %v2941 = vmax.f32 %v2934, 0.0
    %v2942 = vmax.f32 %v2935, 0.0
    %v2943 = vmax.f32 %v2936, 0.0
    %v2944 = vmax.f32 %v2937, 0.0
    %v2945 = vmax.f32 %v2938, 0.0
    %v2946 = vmax.f32 %v2939, 0.0
    %v2947 = vpack.c.bf16 %v2920, %v2919
    %v2948 = vpack.c.bf16 %v2941, %v2940
    %v2949 = vpack.c.bf16 %v2922, %v2921
    %v2950 = vpack.c.bf16 %v2943, %v2942
    %v2951 = vpack.c.bf16 %v2924, %v2923
    %v2952 = vpack.c.bf16 %v2945, %v2944
    %v2953 = vpack.c.bf16 %v2925, %v2925
    %v2954 = vpack.c.bf16 %v2946, %v2946
    %v2955 = vld [vmem:[%s1] sm:$0xff]
    %v2956 = vld [vmem:[%s1 + $0x8] sm:$0xff]
    %v2957 = vld [vmem:[%s1 + $0x10] sm:$0xff]
    %v2958 = vld [vmem:[%s1 + $0x18] sm:$0xff]
    %v2959 = vld [vmem:[%s1 + $0x20] sm:$0xff]
    %v2960 = vld [vmem:[%s1 + $0x28] sm:$0xff]
    %v2961 = vld [vmem:[%s1 + $0x30] sm:$0xff]
    %v2962 = vld [vmem:[%s1 + $0x38] sm:$0xff]
    %v2963 = vld [vmem:[%s1 + $0x40] sm:$0xff]
    %v2964 = vld [vmem:[%s1 + $0x48] sm:$0xff]
    %v2965 = vld [vmem:[%s1 + $0x50] sm:$0xff]
    %v2966 = vld [vmem:[%s1 + $0x58] sm:$0xff]
    %v2967 = vld [vmem:[%s1 + $0x60] sm:$0xff]
    %v2968 = vld [vmem:[%s1 + $0x68] sm:$0xff]
    %v2969 = vld [vmem:[%s1 + $0x70] sm:$0xff]
    %v2970 = vld [vmem:[%s1 + $0x78] sm:$0xff]
    %v2971 = vld [vmem:[%s1 + $0x80] sm:$0xff]
    %v2972 = vld [vmem:[%s1 + $0x88] sm:$0xff]
    %v2973 = vld [vmem:[%s1 + $0x90] sm:$0xff]
    %v2974 = vld [vmem:[%s1 + $0x98] sm:$0xff]
    %v2975 = vld [vmem:[%s1 + $0xa0] sm:$0xff]
    %v2976 = vld [vmem:[%s1 + $0xa8] sm:$0xff]
    %v2977 = vld [vmem:[%s1 + $0xb0] sm:$0xff]
    %v2978 = vld [vmem:[%s1 + $0xb8] sm:$0xff]
    %v2979 = vld [vmem:[%s1 + $0xc0] sm:$0xff]
    %v2980 = vld [vmem:[%s1 + $0xc8] sm:$0xff]
    %v2981 = vld [vmem:[%s1 + $0xd0] sm:$0xff]
    %v2982 = vld [vmem:[%s1 + $0xd8] sm:$0xff]
    %v2983 = vld [vmem:[%s1 + $0xe0] sm:$0xff]
    %v2984 = vld [vmem:[%s1 + $0xe8] sm:$0xff]
    %v2985 = vld [vmem:[%s1 + $0xf0] sm:$0xff]
    %v2986 = vld [vmem:[%s1 + $0xf8] sm:$0xff]
    %v2987 = vld [vmem:[%s1 + $0x100] sm:$0xff]
    %v2988 = vld [vmem:[%s1 + $0x108] sm:$0xff]
    %v2989 = vld [vmem:[%s1 + $0x110] sm:$0xff]
    %v2990 = vld [vmem:[%s1 + $0x118] sm:$0xff]
    %v2991 = vld [vmem:[%s1 + $0x120] sm:$0xff]
    %v2992 = vld [vmem:[%s1 + $0x128] sm:$0xff]
    %v2993 = vld [vmem:[%s1 + $0x130] sm:$0xff]
    %v2994 = vld [vmem:[%s1 + $0x138] sm:$0xff]
    %v2995 = vld [vmem:[%s1 + $0x140] sm:$0xff]
    %v2996 = vld [vmem:[%s1 + $0x148] sm:$0xff]
    %v2997 = vld [vmem:[%s1 + $0x150] sm:$0xff]
    %v2998 = vld [vmem:[%s1 + $0x158] sm:$0xff]
    %v2999 = vld [vmem:[%s1 + $0x160] sm:$0xff]
    %v3000 = vld [vmem:[%s1 + $0x168] sm:$0xff]
    %v3001 = vld [vmem:[%s1 + $0x170] sm:$0xff]
    %v3002 = vld [vmem:[%s1 + $0x178] sm:$0xff]
    %v3003 = vld [vmem:[%s1 + $0x180] sm:$0xff]
    %v3004 = vld [vmem:[%s1 + $0x188] sm:$0xff]
    %v3005 = vld [vmem:[%s1 + $0x190] sm:$0xff]
    %v3006 = vld [vmem:[%s1 + $0x198] sm:$0xff]
    %v3007 = vld [vmem:[%s1 + $0x1a0] sm:$0xff]
    %v3008 = vld [vmem:[%s1 + $0x1a8] sm:$0xff]
    %v3009 = vld [vmem:[%s1 + $0x1b0] sm:$0xff]
    %v3010 = vld [vmem:[%s1 + $0x1b8] sm:$0xff]
    %v3011 = vld [vmem:[%s1 + $0x1c0] sm:$0xff]
    %v3012 = vld [vmem:[%s1 + $0x1c8] sm:$0xff]
    %v3013 = vld [vmem:[%s1 + $0x1d0] sm:$0xff]
    %v3014 = vld [vmem:[%s1 + $0x1d8] sm:$0xff]
    %v3015 = vld [vmem:[%s1 + $0x1e0] sm:$0xff]
    %v3016 = vld [vmem:[%s1 + $0x1e8] sm:$0xff]
    %v3017 = vld [vmem:[%s1 + $0x1f0] sm:$0xff]
    %v3018 = vld [vmem:[%s1 + $0x1f8] sm:$0xff]
    %vm3025 = vcmask 1043456
    %v3026 = vrot.slane %v2947, 4
    %v3027 = vrot.slane %v2949, 4
    %v3028 = vsel %vm3025, %v3026, %v3027
    %v3029 = vrot.slane %v2948, 4
    %v3030 = vrot.slane %v2950, 4
    %v3031 = vsel %vm3025, %v3029, %v3030
    %v3032 = vrot.slane %v2951, 4
    %v3033 = vsel %vm3025, %v3027, %v3032
    %v3034 = vrot.slane %v2952, 4
    %v3035 = vsel %vm3025, %v3030, %v3034
    %v3074 = vunpack.c.l.b16 %v2987
    %v3075 = vunpack.c.h.b16 %v2987
    %v3076 = vunpack.c.l.b16 %v2988
    %v3077 = vunpack.c.h.b16 %v2988
    %v3078 = vunpack.c.l.b16 %v2989
    %v3079 = vunpack.c.h.b16 %v2989
    %v3080 = vunpack.c.l.b16 %v2990
    %v3081 = vunpack.c.h.b16 %v2990
    %v3082 = vunpack.c.l.b16 %v2991
    %v3083 = vunpack.c.h.b16 %v2991
    %v3084 = vunpack.c.l.b16 %v2992
    %v3085 = vunpack.c.h.b16 %v2992
    %v3086 = vunpack.c.l.b16 %v2993
    %v3087 = vunpack.c.h.b16 %v2993
    %v3088 = vunpack.c.l.b16 %v2994
    %v3089 = vunpack.c.h.b16 %v2994
    %v3090 = vunpack.c.l.b16 %v2995
    %v3091 = vunpack.c.h.b16 %v2995
    %v3092 = vunpack.c.l.b16 %v2996
    %v3093 = vunpack.c.h.b16 %v2996
    %v3094 = vunpack.c.l.b16 %v2997
    %v3095 = vunpack.c.h.b16 %v2997
    %v3096 = vunpack.c.l.b16 %v2998
    %v3097 = vunpack.c.h.b16 %v2998
    %v3098 = vunpack.c.l.b16 %v2999
    %v3099 = vunpack.c.h.b16 %v2999
    %v3100 = vunpack.c.l.b16 %v3000
    %v3101 = vunpack.c.h.b16 %v3000
    %v3102 = vunpack.c.l.b16 %v3001
    %v3103 = vunpack.c.h.b16 %v3001
    %v3104 = vunpack.c.l.b16 %v3002
    %v3105 = vunpack.c.h.b16 %v3002
    %v3106 = vunpack.c.l.b16 %v3003
    %v3107 = vunpack.c.h.b16 %v3003
    %v3108 = vunpack.c.l.b16 %v3004
    %v3109 = vunpack.c.h.b16 %v3004
    %v3110 = vunpack.c.l.b16 %v3005
    %v3111 = vunpack.c.h.b16 %v3005
    %v3112 = vunpack.c.l.b16 %v3006
    %v3113 = vunpack.c.h.b16 %v3006
    %v3114 = vunpack.c.l.b16 %v3007
    %v3115 = vunpack.c.h.b16 %v3007
    %v3116 = vunpack.c.l.b16 %v3008
    %v3117 = vunpack.c.h.b16 %v3008
    %v3118 = vunpack.c.l.b16 %v3009
    %v3119 = vunpack.c.h.b16 %v3009
    %v3120 = vunpack.c.l.b16 %v3010
    %v3121 = vunpack.c.h.b16 %v3010
    %v3122 = vunpack.c.l.b16 %v3011
    %v3123 = vunpack.c.h.b16 %v3011
    %v3124 = vunpack.c.l.b16 %v3012
    %v3125 = vunpack.c.h.b16 %v3012
    %v3126 = vunpack.c.l.b16 %v3013
    %v3127 = vunpack.c.h.b16 %v3013
    %v3128 = vunpack.c.l.b16 %v3014
    %v3129 = vunpack.c.h.b16 %v3014
    %v3130 = vunpack.c.l.b16 %v3015
    %v3131 = vunpack.c.h.b16 %v3015
    %v3132 = vunpack.c.l.b16 %v3016
    %v3133 = vunpack.c.h.b16 %v3016
    %v3134 = vunpack.c.l.b16 %v3017
    %v3135 = vunpack.c.h.b16 %v3017
    %v3136 = vunpack.c.l.b16 %v3018
    %v3137 = vunpack.c.h.b16 %v3018
    %v3138 = vpack.c.b16 %v3076, %v3074
    %v3139 = vpack.c.b16 %v3077, %v3075
    %v3140 = vpack.c.b16 %v3080, %v3078
    %v3141 = vpack.c.b16 %v3081, %v3079
    %v3142 = vpack.c.b16 %v3084, %v3082
    %v3143 = vpack.c.b16 %v3085, %v3083
    %v3144 = vpack.c.b16 %v3088, %v3086
    %v3145 = vpack.c.b16 %v3089, %v3087
    %v3146 = vpack.c.b16 %v3092, %v3090
    %v3147 = vpack.c.b16 %v3093, %v3091
    %v3148 = vpack.c.b16 %v3096, %v3094
    %v3149 = vpack.c.b16 %v3097, %v3095
    %v3150 = vpack.c.b16 %v3100, %v3098
    %v3151 = vpack.c.b16 %v3101, %v3099
    %v3152 = vpack.c.b16 %v3104, %v3102
    %v3153 = vpack.c.b16 %v3105, %v3103
    %v3154 = vpack.c.b16 %v3108, %v3106
    %v3155 = vpack.c.b16 %v3109, %v3107
    %v3156 = vpack.c.b16 %v3112, %v3110
    %v3157 = vpack.c.b16 %v3113, %v3111
    %v3158 = vpack.c.b16 %v3116, %v3114
    %v3159 = vpack.c.b16 %v3117, %v3115
    %v3160 = vpack.c.b16 %v3120, %v3118
    %v3161 = vpack.c.b16 %v3121, %v3119
    %v3162 = vpack.c.b16 %v3124, %v3122
    %v3163 = vpack.c.b16 %v3125, %v3123
    %v3164 = vpack.c.b16 %v3128, %v3126
    %v3165 = vpack.c.b16 %v3129, %v3127
    %v3166 = vpack.c.b16 %v3132, %v3130
    %v3167 = vpack.c.b16 %v3133, %v3131
    %v3168 = vpack.c.b16 %v3136, %v3134
    %v3169 = vpack.c.b16 %v3137, %v3135
    %3202 = vmatprep.subr.bf16.mxu0 %v3139
    %3203 = vmatpush1.bf16.msra.mxu0 %v3138
    %3204 = vmatprep.subr.bf16.mxu0 %v3141
    %3205 = vmatpush1.bf16.msra.mxu0 %v3140
    %3206 = vmatprep.subr.bf16.mxu0 %v3143
    %3207 = vmatpush1.bf16.msra.mxu0 %v3142
    %3208 = vmatprep.subr.bf16.mxu0 %v3145
    %3209 = vmatpush1.bf16.msra.mxu0 %v3144
    %3210 = vmatprep.subr.bf16.mxu0 %v3147
    %3211 = vmatpush1.bf16.msra.mxu0 %v3146
    %3212 = vmatprep.subr.bf16.mxu0 %v3149
    %3213 = vmatpush1.bf16.msra.mxu0 %v3148
    %3214 = vmatprep.subr.bf16.mxu0 %v3151
    %3215 = vmatpush1.bf16.msra.mxu0 %v3150
    %3216 = vmatprep.subr.bf16.mxu0 %v3153
    %3217 = vmatpush1.bf16.msra.mxu0 %v3152
    %3218 = vmatprep.subr.bf16.mxu0 %v3155
    %3219 = vmatpush1.bf16.msra.mxu0 %v3154
    %3220 = vmatprep.subr.bf16.mxu0 %v3157
    %3221 = vmatpush1.bf16.msra.mxu0 %v3156
    %3222 = vmatprep.subr.bf16.mxu0 %v3159
    %3223 = vmatpush1.bf16.msra.mxu0 %v3158
    %3224 = vmatprep.subr.bf16.mxu0 %v3161
    %3225 = vmatpush1.bf16.msra.mxu0 %v3160
    %3226 = vmatprep.subr.bf16.mxu0 %v3163
    %3227 = vmatpush1.bf16.msra.mxu0 %v3162
    %3228 = vmatprep.subr.bf16.mxu0 %v3165
    %3229 = vmatpush1.bf16.msra.mxu0 %v3164
    %3230 = vmatprep.subr.bf16.mxu0 %v3167
    %3231 = vmatpush1.bf16.msra.mxu0 %v3166
    %3232 = vmatprep.subr.bf16.mxu0 %v3169
    %3233 = vmatpush1.bf16.msra.mxu0 %v3168
    %3234 = vmatprep.mubr.bf16.mxu0 %v3031
    %3235 = vmatmul.mubr.bf16.gmra.mrb[0].mxu0 %v3028
    %v3236 = vpop.f32.mrb[0].mxu0
    %v3237 = vadd.f32 0.0, %v3236
    %v3238 = vpop.f32.mrb[0].mxu0
    %v3239 = vadd.f32 0.0, %v3238
    %v3240 = vpop.f32.mrb[0].mxu0
    %v3241 = vadd.f32 0.0, %v3240
    %v3242 = vpop.f32.mrb[0].mxu0
    %v3243 = vadd.f32 0.0, %v3242
    %3244 = vmatprep.mubr.bf16.mxu0 %v3035
    %3245 = vmatmul.mubr.bf16.gmra.mrb[0].mxu0 %v3033
    %v3246 = vpop.f32.mrb[0].mxu0
    %v3247 = vadd.f32 0.0, %v3246
    %v3248 = vpop.f32.mrb[0].mxu0
    %v3249 = vadd.f32 0.0, %v3248
    %v3250 = vpop.f32.mrb[0].mxu0
    %v3251 = vadd.f32 0.0, %v3250
    %v3252 = vpop.f32.mrb[0].mxu0
    %v3253 = vadd.f32 0.0, %v3252
    %3254 = vmatprep.mubr.bf16.mxu0 %v3034
    %3255 = vmatmul.mubr.bf16.gmra.mrb[0].mxu0 %v3032
    %v3256 = vpop.f32.mrb[0].mxu0
    %v3257 = vadd.f32 0.0, %v3256
    %v3258 = vpop.f32.mrb[0].mxu0
    %v3259 = vadd.f32 0.0, %v3258
    %v3260 = vpop.f32.mrb[0].mxu0
    %v3261 = vpop.f32.mrb[0].mxu0
    %3262 = vdwg.mxu0
    %v3295 = vunpack.c.l.b16 %v2955
    %v3296 = vunpack.c.h.b16 %v2955
    %v3297 = vunpack.c.l.b16 %v2956
    %v3298 = vunpack.c.h.b16 %v2956
    %v3299 = vunpack.c.l.b16 %v2957
    %v3300 = vunpack.c.h.b16 %v2957
    %v3301 = vunpack.c.l.b16 %v2958
    %v3302 = vunpack.c.h.b16 %v2958
    %v3303 = vunpack.c.l.b16 %v2959
    %v3304 = vunpack.c.h.b16 %v2959
    %v3305 = vunpack.c.l.b16 %v2960
    %v3306 = vunpack.c.h.b16 %v2960
    %v3307 = vunpack.c.l.b16 %v2961
    %v3308 = vunpack.c.h.b16 %v2961
    %v3309 = vunpack.c.l.b16 %v2962
    %v3310 = vunpack.c.h.b16 %v2962
    %v3311 = vunpack.c.l.b16 %v2963
    %v3312 = vunpack.c.h.b16 %v2963
    %v3313 = vunpack.c.l.b16 %v2964
    %v3314 = vunpack.c.h.b16 %v2964
    %v3315 = vunpack.c.l.b16 %v2965
    %v3316 = vunpack.c.h.b16 %v2965
    %v3317 = vunpack.c.l.b16 %v2966
    %v3318 = vunpack.c.h.b16 %v2966
    %v3319 = vunpack.c.l.b16 %v2967
    %v3320 = vunpack.c.h.b16 %v2967
    %v3321 = vunpack.c.l.b16 %v2968
    %v3322 = vunpack.c.h.b16 %v2968
    %v3323 = vunpack.c.l.b16 %v2969
    %v3324 = vunpack.c.h.b16 %v2969
    %v3325 = vunpack.c.l.b16 %v2970
    %v3326 = vunpack.c.h.b16 %v2970
    %v3327 = vunpack.c.l.b16 %v2971
    %v3328 = vunpack.c.h.b16 %v2971
    %v3329 = vunpack.c.l.b16 %v2972
    %v3330 = vunpack.c.h.b16 %v2972
    %v3331 = vunpack.c.l.b16 %v2973
    %v3332 = vunpack.c.h.b16 %v2973
    %v3333 = vunpack.c.l.b16 %v2974
    %v3334 = vunpack.c.h.b16 %v2974
    %v3335 = vunpack.c.l.b16 %v2975
    %v3336 = vunpack.c.h.b16 %v2975
    %v3337 = vunpack.c.l.b16 %v2976
    %v3338 = vunpack.c.h.b16 %v2976
    %v3339 = vunpack.c.l.b16 %v2977
    %v3340 = vunpack.c.h.b16 %v2977
    %v3341 = vunpack.c.l.b16 %v2978
    %v3342 = vunpack.c.h.b16 %v2978
    %v3343 = vunpack.c.l.b16 %v2979
    %v3344 = vunpack.c.h.b16 %v2979
    %v3345 = vunpack.c.l.b16 %v2980
    %v3346 = vunpack.c.h.b16 %v2980
    %v3347 = vunpack.c.l.b16 %v2981
    %v3348 = vunpack.c.h.b16 %v2981
    %v3349 = vunpack.c.l.b16 %v2982
    %v3350 = vunpack.c.h.b16 %v2982
    %v3351 = vunpack.c.l.b16 %v2983
    %v3352 = vunpack.c.h.b16 %v2983
    %v3353 = vunpack.c.l.b16 %v2984
    %v3354 = vunpack.c.h.b16 %v2984
    %v3355 = vunpack.c.l.b16 %v2985
    %v3356 = vunpack.c.h.b16 %v2985
    %v3357 = vunpack.c.l.b16 %v2986
    %v3358 = vunpack.c.h.b16 %v2986
    %v3359 = vpack.c.b16 %v3297, %v3295
    %v3360 = vpack.c.b16 %v3298, %v3296
    %v3361 = vpack.c.b16 %v3301, %v3299
    %v3362 = vpack.c.b16 %v3302, %v3300
    %v3363 = vpack.c.b16 %v3305, %v3303
    %v3364 = vpack.c.b16 %v3306, %v3304
    %v3365 = vpack.c.b16 %v3309, %v3307
    %v3366 = vpack.c.b16 %v3310, %v3308
    %v3367 = vpack.c.b16 %v3313, %v3311
    %v3368 = vpack.c.b16 %v3314, %v3312
    %v3369 = vpack.c.b16 %v3317, %v3315
    %v3370 = vpack.c.b16 %v3318, %v3316
    %v3371 = vpack.c.b16 %v3321, %v3319
    %v3372 = vpack.c.b16 %v3322, %v3320
    %v3373 = vpack.c.b16 %v3325, %v3323
    %v3374 = vpack.c.b16 %v3326, %v3324
    %v3375 = vpack.c.b16 %v3329, %v3327
    %v3376 = vpack.c.b16 %v3330, %v3328
    %v3377 = vpack.c.b16 %v3333, %v3331
    %v3378 = vpack.c.b16 %v3334, %v3332
    %v3379 = vpack.c.b16 %v3337, %v3335
    %v3380 = vpack.c.b16 %v3338, %v3336
    %v3381 = vpack.c.b16 %v3341, %v3339
    %v3382 = vpack.c.b16 %v3342, %v3340
    %v3383 = vpack.c.b16 %v3345, %v3343
    %v3384 = vpack.c.b16 %v3346, %v3344
    %v3385 = vpack.c.b16 %v3349, %v3347
    %v3386 = vpack.c.b16 %v3350, %v3348
    %v3387 = vpack.c.b16 %v3353, %v3351
    %v3388 = vpack.c.b16 %v3354, %v3352
    %v3389 = vpack.c.b16 %v3357, %v3355
    %v3390 = vpack.c.b16 %v3358, %v3356
    %3423 = vmatprep.subr.bf16.mxu0 %v3360
    %3424 = vmatpush1.bf16.msra.mxu0 %v3359
    %3425 = vmatprep.subr.bf16.mxu0 %v3362
    %3426 = vmatpush1.bf16.msra.mxu0 %v3361
    %3427 = vmatprep.subr.bf16.mxu0 %v3364
    %3428 = vmatpush1.bf16.msra.mxu0 %v3363
    %3429 = vmatprep.subr.bf16.mxu0 %v3366
    %3430 = vmatpush1.bf16.msra.mxu0 %v3365
    %3431 = vmatprep.subr.bf16.mxu0 %v3368
    %3432 = vmatpush1.bf16.msra.mxu0 %v3367
    %3433 = vmatprep.subr.bf16.mxu0 %v3370
    %3434 = vmatpush1.bf16.msra.mxu0 %v3369
    %3435 = vmatprep.subr.bf16.mxu0 %v3372
    %3436 = vmatpush1.bf16.msra.mxu0 %v3371
    %3437 = vmatprep.subr.bf16.mxu0 %v3374
    %3438 = vmatpush1.bf16.msra.mxu0 %v3373
    %3439 = vmatprep.subr.bf16.mxu0 %v3376
    %3440 = vmatpush1.bf16.msra.mxu0 %v3375
    %3441 = vmatprep.subr.bf16.mxu0 %v3378
    %3442 = vmatpush1.bf16.msra.mxu0 %v3377
    %3443 = vmatprep.subr.bf16.mxu0 %v3380
    %3444 = vmatpush1.bf16.msra.mxu0 %v3379
    %3445 = vmatprep.subr.bf16.mxu0 %v3382
    %3446 = vmatpush1.bf16.msra.mxu0 %v3381
    %3447 = vmatprep.subr.bf16.mxu0 %v3384
    %3448 = vmatpush1.bf16.msra.mxu0 %v3383
    %3449 = vmatprep.subr.bf16.mxu0 %v3386
    %3450 = vmatpush1.bf16.msra.mxu0 %v3385
    %3451 = vmatprep.subr.bf16.mxu0 %v3388
    %3452 = vmatpush1.bf16.msra.mxu0 %v3387
    %3453 = vmatprep.subr.bf16.mxu0 %v3390
    %3454 = vmatpush1.bf16.msra.mxu0 %v3389
    %3455 = vmatprep.mubr.bf16.mxu0 %v2948
    %3456 = vmatmul.mubr.bf16.gmra.mrb[0].mxu0 %v2947
    %v3457 = vpop.f32.mrb[0].mxu0
    %v3458 = vadd.f32 %v3237, %v3457
    %v3459 = vpop.f32.mrb[0].mxu0
    %v3460 = vadd.f32 %v3239, %v3459
    %v3461 = vpop.f32.mrb[0].mxu0
    %v3462 = vadd.f32 %v3241, %v3461
    %v3463 = vpop.f32.mrb[0].mxu0
    %v3464 = vadd.f32 %v3243, %v3463
    %3465 = vmatprep.mubr.bf16.mxu0 %v2950
    %3466 = vmatmul.mubr.bf16.gmra.mrb[0].mxu0 %v2949
    %v3467 = vpop.f32.mrb[0].mxu0
    %v3468 = vadd.f32 %v3247, %v3467
    %v3469 = vpop.f32.mrb[0].mxu0
    %v3470 = vadd.f32 %v3249, %v3469
    %v3471 = vpop.f32.mrb[0].mxu0
    %v3472 = vadd.f32 %v3251, %v3471
    %v3473 = vpop.f32.mrb[0].mxu0
    %v3474 = vadd.f32 %v3253, %v3473
    %3475 = vmatprep.mubr.bf16.mxu0 %v2952
    %3476 = vmatmul.mubr.bf16.gmra.mrb[0].mxu0 %v2951
    %v3477 = vpop.f32.mrb[0].mxu0
    %v3478 = vadd.f32 %v3257, %v3477
    %v3479 = vpop.f32.mrb[0].mxu0
    %v3480 = vadd.f32 %v3259, %v3479
    %v3481 = vpop.f32.mrb[0].mxu0
    %v3482 = vpop.f32.mrb[0].mxu0
    %3483 = vdwg.mxu0
    %v3484 = vld [vmem:[%s1 + $0x200] sm:$0xff]
    %v3485 = vld [vmem:[%s1 + $0x208] sm:$0xff]
    %v3486 = vld [vmem:[%s1 + $0x210] sm:$0xff]
    %v3487 = vld [vmem:[%s1 + $0x218] sm:$0xff]
    %v3488 = vld [vmem:[%s1 + $0x220] sm:$0xff]
    %v3489 = vld [vmem:[%s1 + $0x228] sm:$0xff]
    %v3490 = vld [vmem:[%s1 + $0x230] sm:$0xff]
    %v3491 = vld [vmem:[%s1 + $0x238] sm:$0xff]
    %v3492 = vld [vmem:[%s1 + $0x240] sm:$0xff]
    %v3493 = vld [vmem:[%s1 + $0x248] sm:$0xff]
    %v3494 = vld [vmem:[%s1 + $0x250] sm:$0xff]
    %v3495 = vld [vmem:[%s1 + $0x258] sm:$0xff]
    %v3496 = vld [vmem:[%s1 + $0x260] sm:$0xff]
    %v3497 = vld [vmem:[%s1 + $0x268] sm:$0xff]
    %v3498 = vld [vmem:[%s1 + $0x270] sm:$0xff]
    %v3499 = vld [vmem:[%s1 + $0x278] sm:$0xff]
    %v3516 = vunpack.c.l.b16 %v3484
    %v3517 = vunpack.c.h.b16 %v3484
    %v3518 = vunpack.c.l.b16 %v3485
    %v3519 = vunpack.c.h.b16 %v3485
    %v3520 = vunpack.c.l.b16 %v3486
    %v3521 = vunpack.c.h.b16 %v3486
    %v3522 = vunpack.c.l.b16 %v3487
    %v3523 = vunpack.c.h.b16 %v3487
    %v3524 = vunpack.c.l.b16 %v3488
    %v3525 = vunpack.c.h.b16 %v3488
    %v3526 = vunpack.c.l.b16 %v3489
    %v3527 = vunpack.c.h.b16 %v3489
    %v3528 = vunpack.c.l.b16 %v3490
    %v3529 = vunpack.c.h.b16 %v3490
    %v3530 = vunpack.c.l.b16 %v3491
    %v3531 = vunpack.c.h.b16 %v3491
    %v3532 = vunpack.c.l.b16 %v3492
    %v3533 = vunpack.c.h.b16 %v3492
    %v3534 = vunpack.c.l.b16 %v3493
    %v3535 = vunpack.c.h.b16 %v3493
    %v3536 = vunpack.c.l.b16 %v3494
    %v3537 = vunpack.c.h.b16 %v3494
    %v3538 = vunpack.c.l.b16 %v3495
    %v3539 = vunpack.c.h.b16 %v3495
    %v3540 = vunpack.c.l.b16 %v3496
    %v3541 = vunpack.c.h.b16 %v3496
    %v3542 = vunpack.c.l.b16 %v3497
    %v3543 = vunpack.c.h.b16 %v3497
    %v3544 = vunpack.c.l.b16 %v3498
    %v3545 = vunpack.c.h.b16 %v3498
    %v3546 = vunpack.c.l.b16 %v3499
    %v3547 = vunpack.c.h.b16 %v3499
    %v3548 = vpack.c.b16 %v3518, %v3516
    %v3549 = vpack.c.b16 %v3519, %v3517
    %v3550 = vpack.c.b16 %v3522, %v3520
    %v3551 = vpack.c.b16 %v3523, %v3521
    %v3552 = vpack.c.b16 %v3526, %v3524
    %v3553 = vpack.c.b16 %v3527, %v3525
    %v3554 = vpack.c.b16 %v3530, %v3528
    %v3555 = vpack.c.b16 %v3531, %v3529
    %v3556 = vpack.c.b16 %v3534, %v3532
    %v3557 = vpack.c.b16 %v3535, %v3533
    %v3558 = vpack.c.b16 %v3538, %v3536
    %v3559 = vpack.c.b16 %v3539, %v3537
    %v3560 = vpack.c.b16 %v3542, %v3540
    %v3561 = vpack.c.b16 %v3543, %v3541
    %v3562 = vpack.c.b16 %v3546, %v3544
    %v3563 = vpack.c.b16 %v3547, %v3545
    %3580 = vmatprep.subr.bf16.mxu0 %v3549
    %3581 = vmatpush1.bf16.msra.mxu0 %v3548
    %3582 = vmatprep.subr.bf16.mxu0 %v3551
    %3583 = vmatpush1.bf16.msra.mxu0 %v3550
    %3584 = vmatprep.subr.bf16.mxu0 %v3553
    %3585 = vmatpush1.bf16.msra.mxu0 %v3552
    %3586 = vmatprep.subr.bf16.mxu0 %v3555
    %3587 = vmatpush1.bf16.msra.mxu0 %v3554
    %3588 = vmatprep.subr.bf16.mxu0 %v3557
    %3589 = vmatpush1.bf16.msra.mxu0 %v3556
    %3590 = vmatprep.subr.bf16.mxu0 %v3559
    %3591 = vmatpush1.bf16.msra.mxu0 %v3558
    %3592 = vmatprep.subr.bf16.mxu0 %v3561
    %3593 = vmatpush1.bf16.msra.mxu0 %v3560
    %3594 = vmatprep.subr.bf16.mxu0 %v3563
    %3595 = vmatpush1.bf16.msra.mxu0 %v3562
    %3596 = vmatprep.subr.bf16.mxu0 0
    %3597 = vmatpush1.bf16.msra.mxu0 0
    %3598 = vmatprep.subr.bf16.mxu0 0
    %3599 = vmatpush1.bf16.msra.mxu0 0
    %3600 = vmatprep.subr.bf16.mxu0 0
    %3601 = vmatpush1.bf16.msra.mxu0 0
    %3602 = vmatprep.subr.bf16.mxu0 0
    %3603 = vmatpush1.bf16.msra.mxu0 0
    %3604 = vmatprep.subr.bf16.mxu0 0
    %3605 = vmatpush1.bf16.msra.mxu0 0
    %3606 = vmatprep.subr.bf16.mxu0 0
    %3607 = vmatpush1.bf16.msra.mxu0 0
    %3608 = vmatprep.subr.bf16.mxu0 0
    %3609 = vmatpush1.bf16.msra.mxu0 0
    %3610 = vmatprep.subr.bf16.mxu0 0
    %3611 = vmatpush1.bf16.msra.mxu0 0
    %3612 = vmatprep.mubr.bf16.mxu0 0
    %3613 = vmatmul.mubr.bf16.gmra.mrb[0].mxu0 %v2949
    %v3614 = vpop.f32.mrb[0].mxu0
    %v3615 = vadd.f32 0.0, %v3614
    %v3616 = vpop.f32.mrb[0].mxu0
    %v3617 = vadd.f32 0.0, %v3616
    %v3618 = vpop.f32.mrb[0].mxu0
    %v3619 = vadd.f32 0.0, %v3618
    %v3620 = vpop.f32.mrb[0].mxu0
    %v3621 = vadd.f32 0.0, %v3620
    %3622 = vmatprep.mubr.bf16.mxu0 0
    %3623 = vmatmul.mubr.bf16.gmra.mrb[0].mxu0 %v2951
    %v3624 = vpop.f32.mrb[0].mxu0
    %v3625 = vadd.f32 0.0, %v3624
    %v3626 = vpop.f32.mrb[0].mxu0
    %v3627 = vadd.f32 0.0, %v3626
    %v3628 = vpop.f32.mrb[0].mxu0
    %v3629 = vadd.f32 0.0, %v3628
    %v3630 = vpop.f32.mrb[0].mxu0
    %v3631 = vadd.f32 0.0, %v3630
    %3632 = vmatprep.mubr.bf16.mxu0 0
    %3633 = vmatmul.mubr.bf16.gmra.mrb[0].mxu0 %v2953
    %v3634 = vpop.f32.mrb[0].mxu0
    %v3635 = vadd.f32 0.0, %v3634
    %v3636 = vpop.f32.mrb[0].mxu0
    %v3637 = vadd.f32 0.0, %v3636
    %v3638 = vpop.f32.mrb[0].mxu0
    %v3639 = vpop.f32.mrb[0].mxu0
    %3640 = vdwg.mxu0
    %v3641 = vadd.f32 %v3458, %v3615
    %v3642 = vadd.f32 %v3460, %v3617
    %v3643 = vadd.f32 %v3462, %v3619
    %v3644 = vadd.f32 %v3464, %v3621
    %v3645 = vadd.f32 %v3468, %v3625
    %v3646 = vadd.f32 %v3470, %v3627
    %v3647 = vadd.f32 %v3472, %v3629
    %v3648 = vadd.f32 %v3474, %v3631
    %v3649 = vadd.f32 %v3478, %v3635
    %v3650 = vadd.f32 %v3480, %v3637
    %v3651 = vld [vmem:[%s1] sm:$0xff]
    %v3652 = vld [vmem:[%s1 + $0x8] sm:$0xff]
    %v3653 = vld [vmem:[%s1 + $0x10] sm:$0xff]
    %v3654 = vld [vmem:[%s1 + $0x18] sm:$0xff]
    %v3655 = vld [vmem:[%s1 + $0x20] sm:$0xff]
    %v3656 = vld [vmem:[%s1 + $0x28] sm:$0xff]
    %v3657 = vld [vmem:[%s1 + $0x30] sm:$0xff]
    %v3658 = vld [vmem:[%s1 + $0x38] sm:$0xff]
    %v3659 = vld [vmem:[%s1 + $0x40] sm:$0xff]
    %v3660 = vld [vmem:[%s1 + $0x48] sm:$0xff]
    %v3661 = vld [vmem:[%s1 + $0x50] sm:$0xff]
    %v3662 = vld [vmem:[%s1 + $0x58] sm:$0xff]
    %v3663 = vld [vmem:[%s1 + $0x60] sm:$0xff]
    %v3664 = vld [vmem:[%s1 + $0x68] sm:$0xff]
    %v3665 = vld [vmem:[%s1 + $0x70] sm:$0xff]
    %v3666 = vld [vmem:[%s1 + $0x78] sm:$0xff]
    %v3667 = vld [vmem:[%s1 + $0x80] sm:$0xff]
    %v3668 = vld [vmem:[%s1 + $0x88] sm:$0xff]
    %v3669 = vld [vmem:[%s1 + $0x90] sm:$0xff]
    %v3670 = vld [vmem:[%s1 + $0x98] sm:$0xff]
    %v3671 = vld [vmem:[%s1 + $0xa0] sm:$0xff]
    %v3672 = vld [vmem:[%s1 + $0xa8] sm:$0xff]
    %v3673 = vld [vmem:[%s1 + $0xb0] sm:$0xff]
    %v3674 = vld [vmem:[%s1 + $0xb8] sm:$0xff]
    %v3675 = vld [vmem:[%s1 + $0xc0] sm:$0xff]
    %v3676 = vld [vmem:[%s1 + $0xc8] sm:$0xff]
    %v3677 = vld [vmem:[%s1 + $0xd0] sm:$0xff]
    %v3678 = vld [vmem:[%s1 + $0xd8] sm:$0xff]
    %v3679 = vld [vmem:[%s1 + $0xe0] sm:$0xff]
    %v3680 = vld [vmem:[%s1 + $0xe8] sm:$0xff]
    %v3681 = vld [vmem:[%s1 + $0xf0] sm:$0xff]
    %v3682 = vld [vmem:[%s1 + $0xf8] sm:$0xff]
    %v3683 = vld [vmem:[%s1 + $0x100] sm:$0xff]
    %v3684 = vld [vmem:[%s1 + $0x108] sm:$0xff]
    %v3685 = vld [vmem:[%s1 + $0x110] sm:$0xff]
    %v3686 = vld [vmem:[%s1 + $0x118] sm:$0xff]
    %v3687 = vld [vmem:[%s1 + $0x120] sm:$0xff]
    %v3688 = vld [vmem:[%s1 + $0x128] sm:$0xff]
    %v3689 = vld [vmem:[%s1 + $0x130] sm:$0xff]
    %v3690 = vld [vmem:[%s1 + $0x138] sm:$0xff]
    %v3691 = vld [vmem:[%s1 + $0x140] sm:$0xff]
    %v3692 = vld [vmem:[%s1 + $0x148] sm:$0xff]
    %v3693 = vld [vmem:[%s1 + $0x150] sm:$0xff]
    %v3694 = vld [vmem:[%s1 + $0x158] sm:$0xff]
    %v3695 = vld [vmem:[%s1 + $0x160] sm:$0xff]
    %v3696 = vld [vmem:[%s1 + $0x168] sm:$0xff]
    %v3697 = vld [vmem:[%s1 + $0x170] sm:$0xff]
    %v3698 = vld [vmem:[%s1 + $0x178] sm:$0xff]
    %v3731 = vunpack.c.l.b16 %v3667
    %v3732 = vunpack.c.h.b16 %v3667
    %v3733 = vunpack.c.l.b16 %v3668
    %v3734 = vunpack.c.h.b16 %v3668
    %v3735 = vunpack.c.l.b16 %v3669
    %v3736 = vunpack.c.h.b16 %v3669
    %v3737 = vunpack.c.l.b16 %v3670
    %v3738 = vunpack.c.h.b16 %v3670
    %v3739 = vunpack.c.l.b16 %v3671
    %v3740 = vunpack.c.h.b16 %v3671
    %v3741 = vunpack.c.l.b16 %v3672
    %v3742 = vunpack.c.h.b16 %v3672
    %v3743 = vunpack.c.l.b16 %v3673
    %v3744 = vunpack.c.h.b16 %v3673
    %v3745 = vunpack.c.l.b16 %v3674
    %v3746 = vunpack.c.h.b16 %v3674
    %v3747 = vunpack.c.l.b16 %v3675
    %v3748 = vunpack.c.h.b16 %v3675
    %v3749 = vunpack.c.l.b16 %v3676
    %v3750 = vunpack.c.h.b16 %v3676
    %v3751 = vunpack.c.l.b16 %v3677
    %v3752 = vunpack.c.h.b16 %v3677
    %v3753 = vunpack.c.l.b16 %v3678
    %v3754 = vunpack.c.h.b16 %v3678
    %v3755 = vunpack.c.l.b16 %v3679
    %v3756 = vunpack.c.h.b16 %v3679
    %v3757 = vunpack.c.l.b16 %v3680
    %v3758 = vunpack.c.h.b16 %v3680
    %v3759 = vunpack.c.l.b16 %v3681
    %v3760 = vunpack.c.h.b16 %v3681
    %v3761 = vunpack.c.l.b16 %v3682
    %v3762 = vunpack.c.h.b16 %v3682
    %v3763 = vunpack.c.l.b16 %v3683
    %v3764 = vunpack.c.h.b16 %v3683
    %v3765 = vunpack.c.l.b16 %v3684
    %v3766 = vunpack.c.h.b16 %v3684
    %v3767 = vunpack.c.l.b16 %v3685
    %v3768 = vunpack.c.h.b16 %v3685
    %v3769 = vunpack.c.l.b16 %v3686
    %v3770 = vunpack.c.h.b16 %v3686
    %v3771 = vunpack.c.l.b16 %v3687
    %v3772 = vunpack.c.h.b16 %v3687
    %v3773 = vunpack.c.l.b16 %v3688
    %v3774 = vunpack.c.h.b16 %v3688
    %v3775 = vunpack.c.l.b16 %v3689
    %v3776 = vunpack.c.h.b16 %v3689
    %v3777 = vunpack.c.l.b16 %v3690
    %v3778 = vunpack.c.h.b16 %v3690
    %v3779 = vunpack.c.l.b16 %v3691
    %v3780 = vunpack.c.h.b16 %v3691
    %v3781 = vunpack.c.l.b16 %v3692
    %v3782 = vunpack.c.h.b16 %v3692
    %v3783 = vunpack.c.l.b16 %v3693
    %v3784 = vunpack.c.h.b16 %v3693
    %v3785 = vunpack.c.l.b16 %v3694
    %v3786 = vunpack.c.h.b16 %v3694
    %v3787 = vunpack.c.l.b16 %v3695
    %v3788 = vunpack.c.h.b16 %v3695
    %v3789 = vunpack.c.l.b16 %v3696
    %v3790 = vunpack.c.h.b16 %v3696
    %v3791 = vunpack.c.l.b16 %v3697
    %v3792 = vunpack.c.h.b16 %v3697
    %v3793 = vunpack.c.l.b16 %v3698
    %v3794 = vunpack.c.h.b16 %v3698
    %v3795 = vpack.c.b16 %v3733, %v3731
    %v3796 = vpack.c.b16 %v3734, %v3732
    %v3797 = vpack.c.b16 %v3737, %v3735
    %v3798 = vpack.c.b16 %v3738, %v3736
    %v3799 = vpack.c.b16 %v3741, %v3739
    %v3800 = vpack.c.b16 %v3742, %v3740
    %v3801 = vpack.c.b16 %v3745, %v3743
    %v3802 = vpack.c.b16 %v3746, %v3744
    %v3803 = vpack.c.b16 %v3749, %v3747
    %v3804 = vpack.c.b16 %v3750, %v3748
    %v3805 = vpack.c.b16 %v3753, %v3751
    %v3806 = vpack.c.b16 %v3754, %v3752
    %v3807 = vpack.c.b16 %v3757, %v3755
    %v3808 = vpack.c.b16 %v3758, %v3756
    %v3809 = vpack.c.b16 %v3761, %v3759
    %v3810 = vpack.c.b16 %v3762, %v3760
    %v3811 = vpack.c.b16 %v3765, %v3763
    %v3812 = vpack.c.b16 %v3766, %v3764
    %v3813 = vpack.c.b16 %v3769, %v3767
    %v3814 = vpack.c.b16 %v3770, %v3768
    %v3815 = vpack.c.b16 %v3773, %v3771
    %v3816 = vpack.c.b16 %v3774, %v3772
    %v3817 = vpack.c.b16 %v3777, %v3775
    %v3818 = vpack.c.b16 %v3778, %v3776
    %v3819 = vpack.c.b16 %v3781, %v3779
    %v3820 = vpack.c.b16 %v3782, %v3780
    %v3821 = vpack.c.b16 %v3785, %v3783
    %v3822 = vpack.c.b16 %v3786, %v3784
    %v3823 = vpack.c.b16 %v3789, %v3787
    %v3824 = vpack.c.b16 %v3790, %v3788
    %v3825 = vpack.c.b16 %v3793, %v3791
    %v3826 = vpack.c.b16 %v3794, %v3792
    %3859 = vmatprep.subr.bf16.mxu0 %v3796
    %3860 = vmatpush1.bf16.msra.mxu0 %v3795
    %3861 = vmatprep.subr.bf16.mxu0 %v3798
    %3862 = vmatpush1.bf16.msra.mxu0 %v3797
    %3863 = vmatprep.subr.bf16.mxu0 %v3800
    %3864 = vmatpush1.bf16.msra.mxu0 %v3799
    %3865 = vmatprep.subr.bf16.mxu0 %v3802
    %3866 = vmatpush1.bf16.msra.mxu0 %v3801
    %3867 = vmatprep.subr.bf16.mxu0 %v3804
    %3868 = vmatpush1.bf16.msra.mxu0 %v3803
    %3869 = vmatprep.subr.bf16.mxu0 %v3806
    %3870 = vmatpush1.bf16.msra.mxu0 %v3805
    %3871 = vmatprep.subr.bf16.mxu0 %v3808
    %3872 = vmatpush1.bf16.msra.mxu0 %v3807
    %3873 = vmatprep.subr.bf16.mxu0 %v3810
    %3874 = vmatpush1.bf16.msra.mxu0 %v3809
    %3875 = vmatprep.subr.bf16.mxu0 %v3812
    %3876 = vmatpush1.bf16.msra.mxu0 %v3811
    %3877 = vmatprep.subr.bf16.mxu0 %v3814
    %3878 = vmatpush1.bf16.msra.mxu0 %v3813
    %3879 = vmatprep.subr.bf16.mxu0 %v3816
    %3880 = vmatpush1.bf16.msra.mxu0 %v3815
    %3881 = vmatprep.subr.bf16.mxu0 %v3818
    %3882 = vmatpush1.bf16.msra.mxu0 %v3817
    %3883 = vmatprep.subr.bf16.mxu0 %v3820
    %3884 = vmatpush1.bf16.msra.mxu0 %v3819
    %3885 = vmatprep.subr.bf16.mxu0 %v3822
    %3886 = vmatpush1.bf16.msra.mxu0 %v3821
    %3887 = vmatprep.subr.bf16.mxu0 %v3824
    %3888 = vmatpush1.bf16.msra.mxu0 %v3823
    %3889 = vmatprep.subr.bf16.mxu0 %v3826
    %3890 = vmatpush1.bf16.msra.mxu0 %v3825
    %3891 = vmatprep.mubr.bf16.mxu0 %v3031
    %3892 = vmatmul.mubr.bf16.gmra.mrb[0].mxu0 %v3028
    %v3893 = vpop.f32.mrb[0].mxu0
    %v3894 = vadd.f32 0.0, %v3893
    %v3895 = vpop.f32.mrb[0].mxu0
    %v3896 = vadd.f32 0.0, %v3895
    %v3897 = vpop.f32.mrb[0].mxu0
    %v3898 = vadd.f32 0.0, %v3897
    %v3899 = vpop.f32.mrb[0].mxu0
    %v3900 = vadd.f32 0.0, %v3899
    %3901 = vmatprep.mubr.bf16.mxu0 %v3035
    %3902 = vmatmul.mubr.bf16.gmra.mrb[0].mxu0 %v3033
    %v3903 = vpop.f32.mrb[0].mxu0
    %v3904 = vadd.f32 0.0, %v3903
    %v3905 = vpop.f32.mrb[0].mxu0
    %v3906 = vadd.f32 0.0, %v3905
    %v3907 = vpop.f32.mrb[0].mxu0
    %v3908 = vadd.f32 0.0, %v3907
    %v3909 = vpop.f32.mrb[0].mxu0
    %v3910 = vadd.f32 0.0, %v3909
    %3911 = vmatprep.mubr.bf16.mxu0 %v3034
    %3912 = vmatmul.mubr.bf16.gmra.mrb[0].mxu0 %v3032
    %v3913 = vpop.f32.mrb[0].mxu0
    %v3914 = vadd.f32 0.0, %v3913
    %v3915 = vpop.f32.mrb[0].mxu0
    %v3916 = vadd.f32 0.0, %v3915
    %v3917 = vpop.f32.mrb[0].mxu0
    %v3918 = vpop.f32.mrb[0].mxu0
    %3919 = vdwg.mxu0
    %v3936 = vunpack.c.l.b16 %v3651
    %v3937 = vunpack.c.h.b16 %v3651
    %v3938 = vunpack.c.l.b16 %v3652
    %v3939 = vunpack.c.h.b16 %v3652
    %v3940 = vunpack.c.l.b16 %v3653
    %v3941 = vunpack.c.h.b16 %v3653
    %v3942 = vunpack.c.l.b16 %v3654
    %v3943 = vunpack.c.h.b16 %v3654
    %v3944 = vunpack.c.l.b16 %v3655
    %v3945 = vunpack.c.h.b16 %v3655
    %v3946 = vunpack.c.l.b16 %v3656
    %v3947 = vunpack.c.h.b16 %v3656
    %v3948 = vunpack.c.l.b16 %v3657
    %v3949 = vunpack.c.h.b16 %v3657
    %v3950 = vunpack.c.l.b16 %v3658
    %v3951 = vunpack.c.h.b16 %v3658
    %v3952 = vunpack.c.l.b16 %v3659
    %v3953 = vunpack.c.h.b16 %v3659
    %v3954 = vunpack.c.l.b16 %v3660
    %v3955 = vunpack.c.h.b16 %v3660
    %v3956 = vunpack.c.l.b16 %v3661
    %v3957 = vunpack.c.h.b16 %v3661
    %v3958 = vunpack.c.l.b16 %v3662
    %v3959 = vunpack.c.h.b16 %v3662
    %v3960 = vunpack.c.l.b16 %v3663
    %v3961 = vunpack.c.h.b16 %v3663
    %v3962 = vunpack.c.l.b16 %v3664
    %v3963 = vunpack.c.h.b16 %v3664
    %v3964 = vunpack.c.l.b16 %v3665
    %v3965 = vunpack.c.h.b16 %v3665
    %v3966 = vunpack.c.l.b16 %v3666
    %v3967 = vunpack.c.h.b16 %v3666
    %v3968 = vpack.c.b16 %v3938, %v3936
    %v3969 = vpack.c.b16 %v3939, %v3937
    %v3970 = vpack.c.b16 %v3942, %v3940
    %v3971 = vpack.c.b16 %v3943, %v3941
    %v3972 = vpack.c.b16 %v3946, %v3944
    %v3973 = vpack.c.b16 %v3947, %v3945
    %v3974 = vpack.c.b16 %v3950, %v3948
    %v3975 = vpack.c.b16 %v3951, %v3949
    %v3976 = vpack.c.b16 %v3954, %v3952
    %v3977 = vpack.c.b16 %v3955, %v3953
    %v3978 = vpack.c.b16 %v3958, %v3956
    %v3979 = vpack.c.b16 %v3959, %v3957
    %v3980 = vpack.c.b16 %v3962, %v3960
    %v3981 = vpack.c.b16 %v3963, %v3961
    %v3982 = vpack.c.b16 %v3966, %v3964
    %v3983 = vpack.c.b16 %v3967, %v3965
    %4000 = vmatprep.subr.bf16.mxu0 %v3969
    %4001 = vmatpush1.bf16.msra.mxu0 %v3968
    %4002 = vmatprep.subr.bf16.mxu0 %v3971
    %4003 = vmatpush1.bf16.msra.mxu0 %v3970
    %4004 = vmatprep.subr.bf16.mxu0 %v3973
    %4005 = vmatpush1.bf16.msra.mxu0 %v3972
    %4006 = vmatprep.subr.bf16.mxu0 %v3975
    %4007 = vmatpush1.bf16.msra.mxu0 %v3974
    %4008 = vmatprep.subr.bf16.mxu0 %v3977
    %4009 = vmatpush1.bf16.msra.mxu0 %v3976
    %4010 = vmatprep.subr.bf16.mxu0 %v3979
    %4011 = vmatpush1.bf16.msra.mxu0 %v3978
    %4012 = vmatprep.subr.bf16.mxu0 %v3981
    %4013 = vmatpush1.bf16.msra.mxu0 %v3980
    %4014 = vmatprep.subr.bf16.mxu0 %v3983
    %4015 = vmatpush1.bf16.msra.mxu0 %v3982
    %4016 = vmatprep.subr.bf16.mxu0 0
    %4017 = vmatpush1.bf16.msra.mxu0 0
    %4018 = vmatprep.subr.bf16.mxu0 0
    %4019 = vmatpush1.bf16.msra.mxu0 0
    %4020 = vmatprep.subr.bf16.mxu0 0
    %4021 = vmatpush1.bf16.msra.mxu0 0
    %4022 = vmatprep.subr.bf16.mxu0 0
    %4023 = vmatpush1.bf16.msra.mxu0 0
    %4024 = vmatprep.subr.bf16.mxu0 0
    %4025 = vmatpush1.bf16.msra.mxu0 0
    %4026 = vmatprep.subr.bf16.mxu0 0
    %4027 = vmatpush1.bf16.msra.mxu0 0
    %4028 = vmatprep.subr.bf16.mxu0 0
    %4029 = vmatpush1.bf16.msra.mxu0 0
    %4030 = vmatprep.subr.bf16.mxu0 0
    %4031 = vmatpush1.bf16.msra.mxu0 0
    %4032 = vmatprep.mubr.bf16.mxu0 0
    %4033 = vmatmul.mubr.bf16.gmra.mrb[0].mxu0 %v2948
    %v4034 = vpop.f32.mrb[0].mxu0
    %v4035 = vadd.f32 %v3894, %v4034
    %v4036 = vpop.f32.mrb[0].mxu0
    %v4037 = vadd.f32 %v3896, %v4036
    %v4038 = vpop.f32.mrb[0].mxu0
    %v4039 = vadd.f32 %v3898, %v4038
    %v4040 = vpop.f32.mrb[0].mxu0
    %v4041 = vadd.f32 %v3900, %v4040
    %4042 = vmatprep.mubr.bf16.mxu0 0
    %4043 = vmatmul.mubr.bf16.gmra.mrb[0].mxu0 %v2950
    %v4044 = vpop.f32.mrb[0].mxu0
    %v4045 = vadd.f32 %v3904, %v4044
    %v4046 = vpop.f32.mrb[0].mxu0
    %v4047 = vadd.f32 %v3906, %v4046
    %v4048 = vpop.f32.mrb[0].mxu0
    %v4049 = vadd.f32 %v3908, %v4048
    %v4050 = vpop.f32.mrb[0].mxu0
    %v4051 = vadd.f32 %v3910, %v4050
    %4052 = vmatprep.mubr.bf16.mxu0 0
    %4053 = vmatmul.mubr.bf16.gmra.mrb[0].mxu0 %v2952
    %v4054 = vpop.f32.mrb[0].mxu0
    %v4055 = vadd.f32 %v3914, %v4054
    %v4056 = vpop.f32.mrb[0].mxu0
    %v4057 = vadd.f32 %v3916, %v4056
    %v4058 = vpop.f32.mrb[0].mxu0
    %v4059 = vpop.f32.mrb[0].mxu0
    %4060 = vdwg.mxu0
    %v4061 = vld [vmem:[%s1 + $0x180] sm:$0xff]
    %v4062 = vld [vmem:[%s1 + $0x188] sm:$0xff]
    %v4063 = vld [vmem:[%s1 + $0x190] sm:$0xff]
    %v4064 = vld [vmem:[%s1 + $0x198] sm:$0xff]
    %v4065 = vld [vmem:[%s1 + $0x1a0] sm:$0xff]
    %v4066 = vld [vmem:[%s1 + $0x1a8] sm:$0xff]
    %v4067 = vld [vmem:[%s1 + $0x1b0] sm:$0xff]
    %v4068 = vld [vmem:[%s1 + $0x1b8] sm:$0xff]
    %v4069 = vld [vmem:[%s1 + $0x1c0] sm:$0xff]
    %v4070 = vld [vmem:[%s1 + $0x1c8] sm:$0xff]
    %v4071 = vld [vmem:[%s1 + $0x1d0] sm:$0xff]
    %v4072 = vld [vmem:[%s1 + $0x1d8] sm:$0xff]
    %v4073 = vld [vmem:[%s1 + $0x1e0] sm:$0xff]
    %v4074 = vld [vmem:[%s1 + $0x1e8] sm:$0xff]
    %v4075 = vld [vmem:[%s1 + $0x1f0] sm:$0xff]
    %v4076 = vld [vmem:[%s1 + $0x1f8] sm:$0xff]
    %v4093 = vunpack.c.l.b16 %v4061
    %v4094 = vunpack.c.h.b16 %v4061
    %v4095 = vunpack.c.l.b16 %v4062
    %v4096 = vunpack.c.h.b16 %v4062
    %v4097 = vunpack.c.l.b16 %v4063
    %v4098 = vunpack.c.h.b16 %v4063
    %v4099 = vunpack.c.l.b16 %v4064
    %v4100 = vunpack.c.h.b16 %v4064
    %v4101 = vunpack.c.l.b16 %v4065
    %v4102 = vunpack.c.h.b16 %v4065
    %v4103 = vunpack.c.l.b16 %v4066
    %v4104 = vunpack.c.h.b16 %v4066
    %v4105 = vunpack.c.l.b16 %v4067
    %v4106 = vunpack.c.h.b16 %v4067
    %v4107 = vunpack.c.l.b16 %v4068
    %v4108 = vunpack.c.h.b16 %v4068
    %v4109 = vunpack.c.l.b16 %v4069
    %v4110 = vunpack.c.h.b16 %v4069
    %v4111 = vunpack.c.l.b16 %v4070
    %v4112 = vunpack.c.h.b16 %v4070
    %v4113 = vunpack.c.l.b16 %v4071
    %v4114 = vunpack.c.h.b16 %v4071
    %v4115 = vunpack.c.l.b16 %v4072
    %v4116 = vunpack.c.h.b16 %v4072
    %v4117 = vunpack.c.l.b16 %v4073
    %v4118 = vunpack.c.h.b16 %v4073
    %v4119 = vunpack.c.l.b16 %v4074
    %v4120 = vunpack.c.h.b16 %v4074
    %v4121 = vunpack.c.l.b16 %v4075
    %v4122 = vunpack.c.h.b16 %v4075
    %v4123 = vunpack.c.l.b16 %v4076
    %v4124 = vunpack.c.h.b16 %v4076
    %v4125 = vpack.c.b16 %v4095, %v4093
    %v4126 = vpack.c.b16 %v4096, %v4094
    %v4127 = vpack.c.b16 %v4099, %v4097
    %v4128 = vpack.c.b16 %v4100, %v4098
    %v4129 = vpack.c.b16 %v4103, %v4101
    %v4130 = vpack.c.b16 %v4104, %v4102
    %v4131 = vpack.c.b16 %v4107, %v4105
    %v4132 = vpack.c.b16 %v4108, %v4106
    %v4133 = vpack.c.b16 %v4111, %v4109
    %v4134 = vpack.c.b16 %v4112, %v4110
    %v4135 = vpack.c.b16 %v4115, %v4113
    %v4136 = vpack.c.b16 %v4116, %v4114
    %v4137 = vpack.c.b16 %v4119, %v4117
    %v4138 = vpack.c.b16 %v4120, %v4118
    %v4139 = vpack.c.b16 %v4123, %v4121
    %v4140 = vpack.c.b16 %v4124, %v4122
    %4157 = vmatprep.subr.bf16.mxu0 %v4126
    %4158 = vmatpush1.bf16.msra.mxu0 %v4125
    %4159 = vmatprep.subr.bf16.mxu0 %v4128
    %4160 = vmatpush1.bf16.msra.mxu0 %v4127
    %4161 = vmatprep.subr.bf16.mxu0 %v4130
    %4162 = vmatpush1.bf16.msra.mxu0 %v4129
    %4163 = vmatprep.subr.bf16.mxu0 %v4132
    %4164 = vmatpush1.bf16.msra.mxu0 %v4131
    %4165 = vmatprep.subr.bf16.mxu0 %v4134
    %4166 = vmatpush1.bf16.msra.mxu0 %v4133
    %4167 = vmatprep.subr.bf16.mxu0 %v4136
    %4168 = vmatpush1.bf16.msra.mxu0 %v4135
    %4169 = vmatprep.subr.bf16.mxu0 %v4138
    %4170 = vmatpush1.bf16.msra.mxu0 %v4137
    %4171 = vmatprep.subr.bf16.mxu0 %v4140
    %4172 = vmatpush1.bf16.msra.mxu0 %v4139
    %4173 = vmatprep.subr.bf16.mxu0 %v3549
    %4174 = vmatpush1.bf16.msra.mxu0 %v3548
    %4175 = vmatprep.subr.bf16.mxu0 %v3551
    %4176 = vmatpush1.bf16.msra.mxu0 %v3550
    %4177 = vmatprep.subr.bf16.mxu0 %v3553
    %4178 = vmatpush1.bf16.msra.mxu0 %v3552
    %4179 = vmatprep.subr.bf16.mxu0 %v3555
    %4180 = vmatpush1.bf16.msra.mxu0 %v3554
    %4181 = vmatprep.subr.bf16.mxu0 %v3557
    %4182 = vmatpush1.bf16.msra.mxu0 %v3556
    %4183 = vmatprep.subr.bf16.mxu0 %v3559
    %4184 = vmatpush1.bf16.msra.mxu0 %v3558
    %4185 = vmatprep.subr.bf16.mxu0 %v3561
    %4186 = vmatpush1.bf16.msra.mxu0 %v3560
    %4187 = vmatprep.subr.bf16.mxu0 %v3563
    %4188 = vmatpush1.bf16.msra.mxu0 %v3562
    %4189 = vmatprep.mubr.bf16.mxu0 %v2950
    %4190 = vmatmul.mubr.bf16.gmra.mrb[0].mxu0 %v2949
    %v4191 = vpop.f32.mrb[0].mxu0
    %v4192 = vadd.f32 0.0, %v4191
    %v4193 = vpop.f32.mrb[0].mxu0
    %v4194 = vadd.f32 0.0, %v4193
    %v4195 = vpop.f32.mrb[0].mxu0
    %v4196 = vadd.f32 0.0, %v4195
    %v4197 = vpop.f32.mrb[0].mxu0
    %v4198 = vadd.f32 0.0, %v4197
    %4199 = vmatprep.mubr.bf16.mxu0 %v2952
    %4200 = vmatmul.mubr.bf16.gmra.mrb[0].mxu0 %v2951
    %v4201 = vpop.f32.mrb[0].mxu0
    %v4202 = vadd.f32 0.0, %v4201
    %v4203 = vpop.f32.mrb[0].mxu0
    %v4204 = vadd.f32 0.0, %v4203
    %v4205 = vpop.f32.mrb[0].mxu0
    %v4206 = vadd.f32 0.0, %v4205
    %v4207 = vpop.f32.mrb[0].mxu0
    %v4208 = vadd.f32 0.0, %v4207
    %4209 = vmatprep.mubr.bf16.mxu0 %v2954
    %4210 = vmatmul.mubr.bf16.gmra.mrb[0].mxu0 %v2953
    %v4211 = vpop.f32.mrb[0].mxu0
    %v4212 = vadd.f32 0.0, %v4211
    %v4213 = vpop.f32.mrb[0].mxu0
    %v4214 = vadd.f32 0.0, %v4213
    %v4215 = vpop.f32.mrb[0].mxu0
    %v4216 = vpop.f32.mrb[0].mxu0
    %4217 = vdwg.mxu0
    %v4218 = vadd.f32 %v4035, %v4192
    %v4219 = vadd.f32 %v4037, %v4194
    %v4220 = vadd.f32 %v4039, %v4196
    %v4221 = vadd.f32 %v4041, %v4198
    %v4222 = vadd.f32 %v4045, %v4202
    %v4223 = vadd.f32 %v4047, %v4204
    %v4224 = vadd.f32 %v4049, %v4206
    %v4225 = vadd.f32 %v4051, %v4208
    %v4226 = vadd.f32 %v4055, %v4212
    %v4227 = vadd.f32 %v4057, %v4214
    %v4228 = vld [vmem:[%s5 + $0x1] sm:$0x1]
    %v4229 = vmax.f32 %v3641, %v4218
    %v4230 = vmax.f32 %v3642, %v4219
    %v4231 = vmax.f32 %v3643, %v4220
    %v4232 = vmax.f32 %v3644, %v4221
    %v4233 = vmax.f32 %v3645, %v4222
    %v4234 = vmax.f32 %v3646, %v4223
    %v4235 = vmax.f32 %v3647, %v4224
    %v4236 = vmax.f32 %v3648, %v4225
    %v4237 = vmax.f32 %v3649, %v4226
    %v4238 = vmax.f32 %v3650, %v4227
    %v4239 = vmax.f32 %v4229, %v4230
    %v4240 = vmax.f32 %v4231, %v4232
    %v4241 = vmax.f32 %v4233, %v4234
    %v4242 = vmax.f32 %v4235, %v4236
    %v4243 = vmax.f32 %v4237, %v4238
    %v4244 = vlaneseq
    %v4245 = vshrl.u32 %v4244, 7
    %v4246 = vsub.s32 0, %v4245
    %v4247 = vrot.slane %v4228, %v4246
    %v4248 = vadd.f32 %v4239, %v4247
    %v4249 = vadd.f32 %v4240, %v4247
    %v4250 = vadd.f32 %v4241, %v4247
    %v4251 = vadd.f32 %v4242, %v4247
    %v4252 = vadd.f32 %v4243, %v4247
    %v4253 = vmax.f32 %v4248, 0.0
    %v4254 = vmax.f32 %v4249, 0.0
    %v4255 = vmax.f32 %v4250, 0.0
    %v4256 = vmax.f32 %v4251, 0.0
    %v4257 = vmax.f32 %v4252, 0.0
    %v4258 = vpack.c.bf16 %v4254, %v4253
    %v4259 = vpack.c.bf16 %v4256, %v4255
    %v4260 = vpack.c.bf16 %v4257, %v4257
    %v4262 = vrot.slane %v4258, 4
    %v4265 = vrot.slane %v4259, 4
    %v4267 = vld [vmem:[%s2] sm:$0xf]
    %v4268 = vld [vmem:[%s2 + $0x4] sm:$0xf]
    %v4269 = vld [vmem:[%s2 + $0x8] sm:$0xf]
    %v4270 = vld [vmem:[%s2 + $0xc] sm:$0xf]
    %v4271 = vld [vmem:[%s2 + $0x10] sm:$0xf]
    %v4272 = vld [vmem:[%s2 + $0x14] sm:$0xf]
    %v4273 = vld [vmem:[%s2 + $0x18] sm:$0xf]
    %v4274 = vld [vmem:[%s2 + $0x1c] sm:$0xf]
    %v4275 = vld [vmem:[%s2 + $0x20] sm:$0xf]
    %v4276 = vld [vmem:[%s2 + $0x24] sm:$0xf]
    %v4277 = vld [vmem:[%s2 + $0x28] sm:$0xf]
    %v4278 = vld [vmem:[%s2 + $0x2c] sm:$0xf]
    %v4279 = vld [vmem:[%s2 + $0x30] sm:$0xf]
    %v4280 = vld [vmem:[%s2 + $0x34] sm:$0xf]
    %v4281 = vld [vmem:[%s2 + $0x38] sm:$0xf]
    %v4282 = vld [vmem:[%s2 + $0x3c] sm:$0xf]
    %v4283 = vld [vmem:[%s2 + $0x40] sm:$0xf]
    %v4284 = vld [vmem:[%s2 + $0x44] sm:$0xf]
    %v4285 = vld [vmem:[%s2 + $0x48] sm:$0xf]
    %v4286 = vld [vmem:[%s2 + $0x4c] sm:$0xf]
    %v4287 = vld [vmem:[%s2 + $0x50] sm:$0xf]
    %v4288 = vld [vmem:[%s2 + $0x54] sm:$0xf]
    %v4289 = vld [vmem:[%s2 + $0x58] sm:$0xf]
    %v4290 = vld [vmem:[%s2 + $0x5c] sm:$0xf]
    %v4291 = vld [vmem:[%s2 + $0x60] sm:$0xf]
    %v4292 = vld [vmem:[%s2 + $0x64] sm:$0xf]
    %v4293 = vld [vmem:[%s2 + $0x68] sm:$0xf]
    %v4294 = vld [vmem:[%s2 + $0x6c] sm:$0xf]
    %v4295 = vld [vmem:[%s2 + $0x70] sm:$0xf]
    %v4296 = vld [vmem:[%s2 + $0x74] sm:$0xf]
    %v4297 = vld [vmem:[%s2 + $0x78] sm:$0xf]
    %v4298 = vld [vmem:[%s2 + $0x7c] sm:$0xf]
    %v4299 = vld [vmem:[%s2 + $0x80] sm:$0xf]
    %v4300 = vld [vmem:[%s2 + $0x84] sm:$0xf]
    %v4301 = vld [vmem:[%s2 + $0x88] sm:$0xf]
    %v4302 = vld [vmem:[%s2 + $0x8c] sm:$0xf]
    %v4303 = vld [vmem:[%s2 + $0x90] sm:$0xf]
    %v4304 = vld [vmem:[%s2 + $0x94] sm:$0xf]
    %v4305 = vld [vmem:[%s2 + $0x98] sm:$0xf]
    %v4306 = vld [vmem:[%s2 + $0x9c] sm:$0xf]
    %v4307 = vld [vmem:[%s2 + $0xa0] sm:$0xf]
    %v4308 = vld [vmem:[%s2 + $0xa4] sm:$0xf]
    %v4309 = vld [vmem:[%s2 + $0xa8] sm:$0xf]
    %v4310 = vld [vmem:[%s2 + $0xac] sm:$0xf]
    %v4311 = vld [vmem:[%s2 + $0xb0] sm:$0xf]
    %v4312 = vld [vmem:[%s2 + $0xb4] sm:$0xf]
    %v4313 = vld [vmem:[%s2 + $0xb8] sm:$0xf]
    %v4314 = vld [vmem:[%s2 + $0xbc] sm:$0xf]
    %v4315 = vld [vmem:[%s2 + $0xc0] sm:$0xf]
    %v4316 = vld [vmem:[%s2 + $0xc4] sm:$0xf]
    %v4317 = vld [vmem:[%s2 + $0xc8] sm:$0xf]
    %v4318 = vld [vmem:[%s2 + $0xcc] sm:$0xf]
    %v4319 = vld [vmem:[%s2 + $0xd0] sm:$0xf]
    %v4320 = vld [vmem:[%s2 + $0xd4] sm:$0xf]
    %v4321 = vld [vmem:[%s2 + $0xd8] sm:$0xf]
    %v4322 = vld [vmem:[%s2 + $0xdc] sm:$0xf]
    %v4323 = vld [vmem:[%s2 + $0xe0] sm:$0xf]
    %v4324 = vld [vmem:[%s2 + $0xe4] sm:$0xf]
    %v4325 = vld [vmem:[%s2 + $0xe8] sm:$0xf]
    %v4326 = vld [vmem:[%s2 + $0xec] sm:$0xf]
    %v4327 = vld [vmem:[%s2 + $0xf0] sm:$0xf]
    %v4328 = vld [vmem:[%s2 + $0xf4] sm:$0xf]
    %v4329 = vld [vmem:[%s2 + $0xf8] sm:$0xf]
    %v4330 = vld [vmem:[%s2 + $0xfc] sm:$0xf]
    %v4331 = vld [vmem:[%s2 + $0x100] sm:$0xf]
    %v4332 = vld [vmem:[%s2 + $0x104] sm:$0xf]
    %v4333 = vld [vmem:[%s2 + $0x108] sm:$0xf]
    %v4334 = vld [vmem:[%s2 + $0x10c] sm:$0xf]
    %v4335 = vld [vmem:[%s2 + $0x110] sm:$0xf]
    %v4336 = vld [vmem:[%s2 + $0x114] sm:$0xf]
    %v4337 = vld [vmem:[%s2 + $0x118] sm:$0xf]
    %v4338 = vld [vmem:[%s2 + $0x11c] sm:$0xf]
    %v4339 = vld [vmem:[%s2 + $0x120] sm:$0xf]
    %v4340 = vld [vmem:[%s2 + $0x124] sm:$0xf]
    %v4341 = vld [vmem:[%s2 + $0x128] sm:$0xf]
    %v4342 = vld [vmem:[%s2 + $0x12c] sm:$0xf]
    %v4343 = vld [vmem:[%s2 + $0x130] sm:$0xf]
    %v4344 = vld [vmem:[%s2 + $0x134] sm:$0xf]
    %v4345 = vld [vmem:[%s2 + $0x138] sm:$0xf]
    %v4346 = vld [vmem:[%s2 + $0x13c] sm:$0xf]
    %v4347 = vld [vmem:[%s5 + $0x2] sm:$0x1]
    %v4348 = vlaneseq
    %v4349 = vshrl.u32 %v4348, 7
    %v4350 = vsub.s32 0, %v4349
    %v4351 = vrot.slane %v4347, %v4350
    %v4432 = vunpack.c.l.b16 %v4267
    %v4433 = vunpack.c.l.b16 %v4268
    %v4434 = vunpack.c.l.b16 %v4269
    %v4435 = vunpack.c.l.b16 %v4270
    %v4436 = vunpack.c.l.b16 %v4271
    %v4437 = vunpack.c.l.b16 %v4272
    %v4438 = vunpack.c.l.b16 %v4273
    %v4439 = vunpack.c.l.b16 %v4274
    %v4440 = vunpack.c.l.b16 %v4275
    %v4441 = vunpack.c.l.b16 %v4276
    %v4442 = vunpack.c.l.b16 %v4277
    %v4443 = vunpack.c.l.b16 %v4278
    %v4444 = vunpack.c.l.b16 %v4279
    %v4445 = vunpack.c.l.b16 %v4280
    %v4446 = vunpack.c.l.b16 %v4281
    %v4447 = vunpack.c.l.b16 %v4282
    %v4448 = vunpack.c.l.b16 %v4283
    %v4449 = vunpack.c.l.b16 %v4284
    %v4450 = vunpack.c.l.b16 %v4285
    %v4451 = vunpack.c.l.b16 %v4286
    %v4452 = vunpack.c.l.b16 %v4287
    %v4453 = vunpack.c.l.b16 %v4288
    %v4454 = vunpack.c.l.b16 %v4289
    %v4455 = vunpack.c.l.b16 %v4290
    %v4456 = vunpack.c.l.b16 %v4291
    %v4457 = vunpack.c.l.b16 %v4292
    %v4458 = vunpack.c.l.b16 %v4293
    %v4459 = vunpack.c.l.b16 %v4294
    %v4460 = vunpack.c.l.b16 %v4295
    %v4461 = vunpack.c.l.b16 %v4296
    %v4462 = vunpack.c.l.b16 %v4297
    %v4463 = vunpack.c.l.b16 %v4298
    %v4464 = vunpack.c.l.b16 %v4299
    %v4465 = vunpack.c.l.b16 %v4300
    %v4466 = vunpack.c.l.b16 %v4301
    %v4467 = vunpack.c.l.b16 %v4302
    %v4468 = vunpack.c.l.b16 %v4303
    %v4469 = vunpack.c.l.b16 %v4304
    %v4470 = vunpack.c.l.b16 %v4305
    %v4471 = vunpack.c.l.b16 %v4306
    %v4472 = vunpack.c.l.b16 %v4307
    %v4473 = vunpack.c.l.b16 %v4308
    %v4474 = vunpack.c.l.b16 %v4309
    %v4475 = vunpack.c.l.b16 %v4310
    %v4476 = vunpack.c.l.b16 %v4311
    %v4477 = vunpack.c.l.b16 %v4312
    %v4478 = vunpack.c.l.b16 %v4313
    %v4479 = vunpack.c.l.b16 %v4314
    %v4480 = vunpack.c.l.b16 %v4315
    %v4481 = vunpack.c.l.b16 %v4316
    %v4482 = vunpack.c.l.b16 %v4317
    %v4483 = vunpack.c.l.b16 %v4318
    %v4484 = vunpack.c.l.b16 %v4319
    %v4485 = vunpack.c.l.b16 %v4320
    %v4486 = vunpack.c.l.b16 %v4321
    %v4487 = vunpack.c.l.b16 %v4322
    %v4488 = vunpack.c.l.b16 %v4323
    %v4489 = vunpack.c.l.b16 %v4324
    %v4490 = vunpack.c.l.b16 %v4325
    %v4491 = vunpack.c.l.b16 %v4326
    %v4492 = vunpack.c.l.b16 %v4327
    %v4493 = vunpack.c.l.b16 %v4328
    %v4494 = vunpack.c.l.b16 %v4329
    %v4495 = vunpack.c.l.b16 %v4330
    %v4496 = vunpack.c.l.b16 %v4331
    %v4497 = vunpack.c.l.b16 %v4332
    %v4498 = vunpack.c.l.b16 %v4333
    %v4499 = vunpack.c.l.b16 %v4334
    %v4500 = vunpack.c.l.b16 %v4335
    %v4501 = vunpack.c.l.b16 %v4336
    %v4502 = vunpack.c.l.b16 %v4337
    %v4503 = vunpack.c.l.b16 %v4338
    %v4504 = vunpack.c.l.b16 %v4339
    %v4505 = vunpack.c.l.b16 %v4340
    %v4506 = vunpack.c.l.b16 %v4341
    %v4507 = vunpack.c.l.b16 %v4342
    %v4508 = vunpack.c.l.b16 %v4343
    %v4509 = vunpack.c.l.b16 %v4344
    %v4510 = vunpack.c.l.b16 %v4345
    %v4511 = vunpack.c.l.b16 %v4346
    %v4512 = vpack.c.b16 %v4433, %v4432
    %v4513 = vpack.c.b16 %v4435, %v4434
    %v4514 = vpack.c.b16 %v4437, %v4436
    %v4515 = vpack.c.b16 %v4439, %v4438
    %v4516 = vpack.c.b16 %v4441, %v4440
    %v4517 = vpack.c.b16 %v4443, %v4442
    %v4518 = vpack.c.b16 %v4445, %v4444
    %v4519 = vpack.c.b16 %v4447, %v4446
    %v4520 = vpack.c.b16 %v4449, %v4448
    %v4521 = vpack.c.b16 %v4451, %v4450
    %v4522 = vpack.c.b16 %v4453, %v4452
    %v4523 = vpack.c.b16 %v4455, %v4454
    %v4524 = vpack.c.b16 %v4457, %v4456
    %v4525 = vpack.c.b16 %v4459, %v4458
    %v4526 = vpack.c.b16 %v4461, %v4460
    %v4527 = vpack.c.b16 %v4463, %v4462
    %v4528 = vpack.c.b16 %v4465, %v4464
    %v4529 = vpack.c.b16 %v4467, %v4466
    %v4530 = vpack.c.b16 %v4469, %v4468
    %v4531 = vpack.c.b16 %v4471, %v4470
    %v4532 = vpack.c.b16 %v4473, %v4472
    %v4533 = vpack.c.b16 %v4475, %v4474
    %v4534 = vpack.c.b16 %v4477, %v4476
    %v4535 = vpack.c.b16 %v4479, %v4478
    %v4536 = vpack.c.b16 %v4481, %v4480
    %v4537 = vpack.c.b16 %v4483, %v4482
    %v4538 = vpack.c.b16 %v4485, %v4484
    %v4539 = vpack.c.b16 %v4487, %v4486
    %v4540 = vpack.c.b16 %v4489, %v4488
    %v4541 = vpack.c.b16 %v4491, %v4490
    %v4542 = vpack.c.b16 %v4493, %v4492
    %v4543 = vpack.c.b16 %v4495, %v4494
    %v4544 = vpack.c.b16 %v4497, %v4496
    %v4545 = vpack.c.b16 %v4499, %v4498
    %v4546 = vpack.c.b16 %v4501, %v4500
    %v4547 = vpack.c.b16 %v4503, %v4502
    %v4548 = vpack.c.b16 %v4505, %v4504
    %v4549 = vpack.c.b16 %v4507, %v4506
    %v4550 = vpack.c.b16 %v4509, %v4508
    %v4551 = vpack.c.b16 %v4511, %v4510
    %4592 = vmatprep.subr.bf16.mxu0 0
    %4593 = vmatpush1.bf16.msra.mxu0 %v4512
    %4594 = vmatprep.subr.bf16.mxu0 0
    %4595 = vmatpush1.bf16.msra.mxu0 %v4513
    %4596 = vmatprep.subr.bf16.mxu0 0
    %4597 = vmatpush1.bf16.msra.mxu0 %v4514
    %4598 = vmatprep.subr.bf16.mxu0 0
    %4599 = vmatpush1.bf16.msra.mxu0 %v4515
    %4600 = vmatprep.subr.bf16.mxu0 0
    %4601 = vmatpush1.bf16.msra.mxu0 %v4516
    %4602 = vmatprep.subr.bf16.mxu0 0
    %4603 = vmatpush1.bf16.msra.mxu0 %v4517
    %4604 = vmatprep.subr.bf16.mxu0 0
    %4605 = vmatpush1.bf16.msra.mxu0 %v4518
    %4606 = vmatprep.subr.bf16.mxu0 0
    %4607 = vmatpush1.bf16.msra.mxu0 %v4519
    %4608 = vmatprep.subr.bf16.mxu0 0
    %4609 = vmatpush1.bf16.msra.mxu0 %v4520
    %4610 = vmatprep.subr.bf16.mxu0 0
    %4611 = vmatpush1.bf16.msra.mxu0 %v4521
    %4612 = vmatprep.subr.bf16.mxu0 0
    %4613 = vmatpush1.bf16.msra.mxu0 %v4522
    %4614 = vmatprep.subr.bf16.mxu0 0
    %4615 = vmatpush1.bf16.msra.mxu0 %v4523
    %4616 = vmatprep.subr.bf16.mxu0 0
    %4617 = vmatpush1.bf16.msra.mxu0 %v4524
    %4618 = vmatprep.subr.bf16.mxu0 0
    %4619 = vmatpush1.bf16.msra.mxu0 %v4525
    %4620 = vmatprep.subr.bf16.mxu0 0
    %4621 = vmatpush1.bf16.msra.mxu0 %v4526
    %4622 = vmatprep.subr.bf16.mxu0 0
    %4623 = vmatpush1.bf16.msra.mxu0 %v4527
    %4624 = vmatprep.mubr.bf16.mxu0 %v4262
    %4625 = vmatmul.mubr.bf16.gmra.mrb[0].mxu0 %v4258
    %v4626 = vpop.f32.mrb[0].mxu0
    %v4627 = vadd.f32 %v4351, %v4626
    %v4628 = vpop.f32.mrb[0].mxu0
    %v4629 = vpop.f32.mrb[0].mxu0
    %v4630 = vpop.f32.mrb[0].mxu0
    %4631 = vdwg.mxu0
    %4632 = vmatprep.subr.bf16.mxu0 0
    %4633 = vmatpush1.bf16.msra.mxu0 %v4528
    %4634 = vmatprep.subr.bf16.mxu0 0
    %4635 = vmatpush1.bf16.msra.mxu0 %v4529
    %4636 = vmatprep.subr.bf16.mxu0 0
    %4637 = vmatpush1.bf16.msra.mxu0 %v4530
    %4638 = vmatprep.subr.bf16.mxu0 0
    %4639 = vmatpush1.bf16.msra.mxu0 %v4531
    %4640 = vmatprep.subr.bf16.mxu0 0
    %4641 = vmatpush1.bf16.msra.mxu0 %v4532
    %4642 = vmatprep.subr.bf16.mxu0 0
    %4643 = vmatpush1.bf16.msra.mxu0 %v4533
    %4644 = vmatprep.subr.bf16.mxu0 0
    %4645 = vmatpush1.bf16.msra.mxu0 %v4534
    %4646 = vmatprep.subr.bf16.mxu0 0
    %4647 = vmatpush1.bf16.msra.mxu0 %v4535
    %4648 = vmatprep.subr.bf16.mxu0 0
    %4649 = vmatpush1.bf16.msra.mxu0 %v4536
    %4650 = vmatprep.subr.bf16.mxu0 0
    %4651 = vmatpush1.bf16.msra.mxu0 %v4537
    %4652 = vmatprep.subr.bf16.mxu0 0
    %4653 = vmatpush1.bf16.msra.mxu0 %v4538
    %4654 = vmatprep.subr.bf16.mxu0 0
    %4655 = vmatpush1.bf16.msra.mxu0 %v4539
    %4656 = vmatprep.subr.bf16.mxu0 0
    %4657 = vmatpush1.bf16.msra.mxu0 %v4540
    %4658 = vmatprep.subr.bf16.mxu0 0
    %4659 = vmatpush1.bf16.msra.mxu0 %v4541
    %4660 = vmatprep.subr.bf16.mxu0 0
    %4661 = vmatpush1.bf16.msra.mxu0 %v4542
    %4662 = vmatprep.subr.bf16.mxu0 0
    %4663 = vmatpush1.bf16.msra.mxu0 %v4543
    %4664 = vmatprep.mubr.bf16.mxu0 %v4265
    %4665 = vmatmul.mubr.bf16.gmra.mrb[0].mxu0 %v4259
    %v4666 = vpop.f32.mrb[0].mxu0
    %v4667 = vadd.f32 %v4627, %v4666
    %v4668 = vpop.f32.mrb[0].mxu0
    %v4669 = vpop.f32.mrb[0].mxu0
    %v4670 = vpop.f32.mrb[0].mxu0
    %4671 = vdwg.mxu0
    %4672 = vmatprep.subr.bf16.mxu0 0
    %4673 = vmatpush1.bf16.msra.mxu0 %v4544
    %4674 = vmatprep.subr.bf16.mxu0 0
    %4675 = vmatpush1.bf16.msra.mxu0 %v4545
    %4676 = vmatprep.subr.bf16.mxu0 0
    %4677 = vmatpush1.bf16.msra.mxu0 %v4546
    %4678 = vmatprep.subr.bf16.mxu0 0
    %4679 = vmatpush1.bf16.msra.mxu0 %v4547
    %4680 = vmatprep.subr.bf16.mxu0 0
    %4681 = vmatpush1.bf16.msra.mxu0 %v4548
    %4682 = vmatprep.subr.bf16.mxu0 0
    %4683 = vmatpush1.bf16.msra.mxu0 %v4549
    %4684 = vmatprep.subr.bf16.mxu0 0
    %4685 = vmatpush1.bf16.msra.mxu0 %v4550
    %4686 = vmatprep.subr.bf16.mxu0 0
    %4687 = vmatpush1.bf16.msra.mxu0 %v4551
    %4688 = vmatprep.subr.bf16.mxu0 0
    %4689 = vmatpush1.bf16.msra.mxu0 0
    %4690 = vmatprep.subr.bf16.mxu0 0
    %4691 = vmatpush1.bf16.msra.mxu0 0
    %4692 = vmatprep.subr.bf16.mxu0 0
    %4693 = vmatpush1.bf16.msra.mxu0 0
    %4694 = vmatprep.subr.bf16.mxu0 0
    %4695 = vmatpush1.bf16.msra.mxu0 0
    %4696 = vmatprep.subr.bf16.mxu0 0
    %4697 = vmatpush1.bf16.msra.mxu0 0
    %4698 = vmatprep.subr.bf16.mxu0 0
    %4699 = vmatpush1.bf16.msra.mxu0 0
    %4700 = vmatprep.subr.bf16.mxu0 0
    %4701 = vmatpush1.bf16.msra.mxu0 0
    %4702 = vmatprep.subr.bf16.mxu0 0
    %4703 = vmatpush1.bf16.msra.mxu0 0
    %4704 = vmatprep.mubr.bf16.mxu0 0
    %4705 = vmatmul.mubr.bf16.gmra.mrb[0].mxu0 %v4260
    %v4706 = vpop.f32.mrb[0].mxu0
    %v4707 = vadd.f32 %v4667, %v4706
    %v4708 = vpop.f32.mrb[0].mxu0
    %v4709 = vpop.f32.mrb[0].mxu0
    %v4710 = vpop.f32.mrb[0].mxu0
    %4711 = vdwg.mxu0
    %v4712 = vmax.f32 %v4707, 0.0
    %v4713 = vpack.c.bf16 %v4712, %v4712
    %v4714 = vld [vmem:[%s3] sm:$0xf]
    %v4715 = vld [vmem:[%s3 + $0x4] sm:$0xf]
    %v4716 = vld [vmem:[%s3 + $0x8] sm:$0xf]
    %v4717 = vld [vmem:[%s3 + $0xc] sm:$0xf]
    %v4718 = vld [vmem:[%s3 + $0x10] sm:$0xf]
    %v4719 = vld [vmem:[%s3 + $0x14] sm:$0xf]
    %v4720 = vld [vmem:[%s3 + $0x18] sm:$0xf]
    %v4721 = vld [vmem:[%s3 + $0x1c] sm:$0xf]
    %v4722 = vld [vmem:[%s3 + $0x20] sm:$0xf]
    %v4723 = vld [vmem:[%s3 + $0x24] sm:$0xf]
    %v4724 = vld [vmem:[%s3 + $0x28] sm:$0xf]
    %v4725 = vld [vmem:[%s3 + $0x2c] sm:$0xf]
    %v4726 = vld [vmem:[%s3 + $0x30] sm:$0xf]
    %v4727 = vld [vmem:[%s3 + $0x34] sm:$0xf]
    %v4728 = vld [vmem:[%s3 + $0x38] sm:$0xf]
    %v4729 = vld [vmem:[%s3 + $0x3c] sm:$0xf]
    %v4730 = vld [vmem:[%s5 + $0x3] sm:$0x1]
    %v4731 = vlaneseq
    %v4732 = vshrl.u32 %v4731, 7
    %v4733 = vsub.s32 0, %v4732
    %v4734 = vrot.slane %v4730, %v4733
    %v4751 = vunpack.c.l.b16 %v4714
    %v4752 = vunpack.c.l.b16 %v4715
    %v4753 = vunpack.c.l.b16 %v4716
    %v4754 = vunpack.c.l.b16 %v4717
    %v4755 = vunpack.c.l.b16 %v4718
    %v4756 = vunpack.c.l.b16 %v4719
    %v4757 = vunpack.c.l.b16 %v4720
    %v4758 = vunpack.c.l.b16 %v4721
    %v4759 = vunpack.c.l.b16 %v4722
    %v4760 = vunpack.c.l.b16 %v4723
    %v4761 = vunpack.c.l.b16 %v4724
    %v4762 = vunpack.c.l.b16 %v4725
    %v4763 = vunpack.c.l.b16 %v4726
    %v4764 = vunpack.c.l.b16 %v4727
    %v4765 = vunpack.c.l.b16 %v4728
    %v4766 = vunpack.c.l.b16 %v4729
    %v4767 = vpack.c.b16 %v4752, %v4751
    %v4768 = vpack.c.b16 %v4754, %v4753
    %v4769 = vpack.c.b16 %v4756, %v4755
    %v4770 = vpack.c.b16 %v4758, %v4757
    %v4771 = vpack.c.b16 %v4760, %v4759
    %v4772 = vpack.c.b16 %v4762, %v4761
    %v4773 = vpack.c.b16 %v4764, %v4763
    %v4774 = vpack.c.b16 %v4766, %v4765
    %4783 = vmatprep.subr.bf16.mxu0 0
    %4784 = vmatpush1.bf16.msra.mxu0 %v4767
    %4785 = vmatprep.subr.bf16.mxu0 0
    %4786 = vmatpush1.bf16.msra.mxu0 %v4768
    %4787 = vmatprep.subr.bf16.mxu0 0
    %4788 = vmatpush1.bf16.msra.mxu0 %v4769
    %4789 = vmatprep.subr.bf16.mxu0 0
    %4790 = vmatpush1.bf16.msra.mxu0 %v4770
    %4791 = vmatprep.subr.bf16.mxu0 0
    %4792 = vmatpush1.bf16.msra.mxu0 %v4771
    %4793 = vmatprep.subr.bf16.mxu0 0
    %4794 = vmatpush1.bf16.msra.mxu0 %v4772
    %4795 = vmatprep.subr.bf16.mxu0 0
    %4796 = vmatpush1.bf16.msra.mxu0 %v4773
    %4797 = vmatprep.subr.bf16.mxu0 0
    %4798 = vmatpush1.bf16.msra.mxu0 %v4774
    %4799 = vmatprep.subr.bf16.mxu0 0
    %4800 = vmatpush1.bf16.msra.mxu0 0
    %4801 = vmatprep.subr.bf16.mxu0 0
    %4802 = vmatpush1.bf16.msra.mxu0 0
    %4803 = vmatprep.subr.bf16.mxu0 0
    %4804 = vmatpush1.bf16.msra.mxu0 0
    %4805 = vmatprep.subr.bf16.mxu0 0
    %4806 = vmatpush1.bf16.msra.mxu0 0
    %4807 = vmatprep.subr.bf16.mxu0 0
    %4808 = vmatpush1.bf16.msra.mxu0 0
    %4809 = vmatprep.subr.bf16.mxu0 0
    %4810 = vmatpush1.bf16.msra.mxu0 0
    %4811 = vmatprep.subr.bf16.mxu0 0
    %4812 = vmatpush1.bf16.msra.mxu0 0
    %4813 = vmatprep.subr.bf16.mxu0 0
    %4814 = vmatpush1.bf16.msra.mxu0 0
    %4815 = vmatprep.mubr.bf16.mxu0 0
    %4816 = vmatmul.mubr.bf16.gmra.mrb[0].mxu0 %v4713
    %v4817 = vpop.f32.mrb[0].mxu0
    %v4818 = vadd.f32 %v4734, %v4817
    %v4819 = vpop.f32.mrb[0].mxu0
    %v4820 = vpop.f32.mrb[0].mxu0
    %v4821 = vpop.f32.mrb[0].mxu0
    %4822 = vdwg.mxu0
    %v4823 = vmax.f32 %v4818, 0.0
    %v4824 = vpack.c.bf16 %v4823, %v4823
    %v4825 = vld [vmem:[%s4] sm:$0xf]
    %v4826 = vld [vmem:[%s4 + $0x4] sm:$0xf]
    %v4827 = vld [vmem:[%s4 + $0x8] sm:$0xf]
    %v4828 = vld [vmem:[%s4 + $0xc] sm:$0xf]
    %v4829 = vld [vmem:[%s4 + $0x10] sm:$0xf]
    %v4830 = vld [vmem:[%s4 + $0x14] sm:$0xf]
    %v4831 = vld [vmem:[%s4 + $0x18] sm:$0xf]
    %v4832 = vld [vmem:[%s4 + $0x1c] sm:$0xf]
    %v4833 = vld [vmem:[%s4 + $0x20] sm:$0xf]
    %v4834 = vld [vmem:[%s4 + $0x24] sm:$0xf]
    %v4835 = vld [vmem:[%s4 + $0x28] sm:$0xf]
    %v4836 = vld [vmem:[%s4 + $0x2c] sm:$0xf]
    %v4837 = vld [vmem:[%s4 + $0x30] sm:$0xf]
    %v4838 = vld [vmem:[%s4 + $0x34] sm:$0xf]
    %v4839 = vld [vmem:[%s4 + $0x38] sm:$0xf]
    %v4840 = vld [vmem:[%s4 + $0x3c] sm:$0xf]
    %v4841 = vld [vmem:[%s5 + $0x4] sm:$0x1]
    %v4842 = vlaneseq
    %v4843 = vshrl.u32 %v4842, 7
    %v4844 = vsub.s32 0, %v4843
    %v4845 = vrot.slane %v4841, %v4844
    %v4862 = vunpack.c.l.b16 %v4825
    %v4863 = vunpack.c.l.b16 %v4826
    %v4864 = vunpack.c.l.b16 %v4827
    %v4865 = vunpack.c.l.b16 %v4828
    %v4866 = vunpack.c.l.b16 %v4829
    %v4867 = vunpack.c.l.b16 %v4830
    %v4868 = vunpack.c.l.b16 %v4831
    %v4869 = vunpack.c.l.b16 %v4832
    %v4870 = vunpack.c.l.b16 %v4833
    %v4871 = vunpack.c.l.b16 %v4834
    %v4872 = vunpack.c.l.b16 %v4835
    %v4873 = vunpack.c.l.b16 %v4836
    %v4874 = vunpack.c.l.b16 %v4837
    %v4875 = vunpack.c.l.b16 %v4838
    %v4876 = vunpack.c.l.b16 %v4839
    %v4877 = vunpack.c.l.b16 %v4840
    %v4878 = vpack.c.b16 %v4863, %v4862
    %v4879 = vpack.c.b16 %v4865, %v4864
    %v4880 = vpack.c.b16 %v4867, %v4866
    %v4881 = vpack.c.b16 %v4869, %v4868
    %v4882 = vpack.c.b16 %v4871, %v4870
    %v4883 = vpack.c.b16 %v4873, %v4872
    %v4884 = vpack.c.b16 %v4875, %v4874
    %v4885 = vpack.c.b16 %v4877, %v4876
    %4894 = vmatprep.subr.bf16.mxu0 0
    %4895 = vmatpush1.bf16.msra.mxu0 %v4878
    %4896 = vmatprep.subr.bf16.mxu0 0
    %4897 = vmatpush1.bf16.msra.mxu0 %v4879
    %4898 = vmatprep.subr.bf16.mxu0 0
    %4899 = vmatpush1.bf16.msra.mxu0 %v4880
    %4900 = vmatprep.subr.bf16.mxu0 0
    %4901 = vmatpush1.bf16.msra.mxu0 %v4881
    %4902 = vmatprep.subr.bf16.mxu0 0
    %4903 = vmatpush1.bf16.msra.mxu0 %v4882
    %4904 = vmatprep.subr.bf16.mxu0 0
    %4905 = vmatpush1.bf16.msra.mxu0 %v4883
    %4906 = vmatprep.subr.bf16.mxu0 0
    %4907 = vmatpush1.bf16.msra.mxu0 %v4884
    %4908 = vmatprep.subr.bf16.mxu0 0
    %4909 = vmatpush1.bf16.msra.mxu0 %v4885
    %4910 = vmatprep.subr.bf16.mxu0 0
    %4911 = vmatpush1.bf16.msra.mxu0 0
    %4912 = vmatprep.subr.bf16.mxu0 0
    %4913 = vmatpush1.bf16.msra.mxu0 0
    %4914 = vmatprep.subr.bf16.mxu0 0
    %4915 = vmatpush1.bf16.msra.mxu0 0
    %4916 = vmatprep.subr.bf16.mxu0 0
    %4917 = vmatpush1.bf16.msra.mxu0 0
    %4918 = vmatprep.subr.bf16.mxu0 0
    %4919 = vmatpush1.bf16.msra.mxu0 0
    %4920 = vmatprep.subr.bf16.mxu0 0
    %4921 = vmatpush1.bf16.msra.mxu0 0
    %4922 = vmatprep.subr.bf16.mxu0 0
    %4923 = vmatpush1.bf16.msra.mxu0 0
    %4924 = vmatprep.subr.bf16.mxu0 0
    %4925 = vmatpush1.bf16.msra.mxu0 0
    %4926 = vmatprep.mubr.bf16.mxu0 0
    %4927 = vmatmul.mubr.bf16.gmra.mrb[0].mxu0 %v4824
    %v4928 = vpop.f32.mrb[0].mxu0
    %v4929 = vadd.f32 %v4845, %v4928
    %v4930 = vpop.f32.mrb[0].mxu0
    %v4931 = vpop.f32.mrb[0].mxu0
    %v4932 = vpop.f32.mrb[0].mxu0
    %4933 = vdwg.mxu0
    %4934 = vst [vmem:[%s7] sm:$0xff] %v4929
    // Predicated region
    $region30: #{lenet5_forward.2} parent=1 // pred_check
      _
    $region31: #{lenet5_forward.2} parent=1 // pred_check_branch
      %4936 = sbr.rel (0) target = $region33
    $region32: #{lenet5_forward.2} parent=1 // pred_region
      _
    $region33: #{lenet5_forward.2} parent=1 // pred_fallthru
      _
    // Predicated region
    $region34: #{lenet5_forward.2} parent=1 // pred_check
      _
    $region35: #{lenet5_forward.2} parent=1 // pred_check_branch
      %4938 = sbr.rel (0) target = $region37
    $region36: #{lenet5_forward.2} parent=1 // pred_region
      _
    $region37: #{lenet5_forward.2} parent=1 // pred_fallthru
      _

</llo_original>
